<compile_context>
chip_gen: v6e
topology: v6e:2x2x1
jax: 0.10.0
libtpu: 0.0.40
codegen_flags: <defaults>
</compile_context>

<pallas_src>
import numpy as np
import jax
import jax.numpy as jnp
from jax.experimental import pallas as pl
from jax.experimental.pallas import tpu as pltpu


MAX_TILE_F = 32768                  # head F-reduction tile cap (v7x-safe)
B_PAD = 8                           # pad batch to fill vreg sublanes / MXU rows
VMEM_LIMIT = 48 * 1024 * 1024       # scoped-VMEM budget, safe on v5e/v6e/v7x


def _round_up(x, m):
    return ((x + m - 1) // m) * m


def _derive_shapes(H, W, Cin, Cout, max_tile_f=MAX_TILE_F):
    """Static shape plumbing shared by weight prep and the forward pass."""
    Ho, Wo = H - 2, W - 2
    assert Ho % 2 == 0 and Wo % 2 == 0, "2x2/2 valid pool needs even conv output"
    Hp, Wp = Ho // 2, Wo // 2
    F_real = Cout * Hp * Wp
    unit = 128 * Cout                       # keeps P_pad a multiple of 128 lanes
    n_units = max(1, min(max_tile_f // unit, -(-F_real // unit)))
    tile_f = n_units * unit                 # F-reduction tile (multiple of 128)
    F_pad = _round_up(F_real, tile_f)
    P_pad = F_pad // Cout                   # pooled spatial positions, lane-dense
    K_pad = _round_up(9 * Cin + 1, 8)       # 27 conv taps + folded bias tap -> 32
    return Hp, Wp, F_real, tile_f, F_pad, P_pad, K_pad


# ----------------------------- Pallas kernels ------------------------------ #

def _conv_pool_relu_kernel(p_ref, w_ref, o_ref):
    # p_ref: (1, 4, K, P_pad) bf16 transposed im2col patches for one image,
    #        grouped by the 4 2x2 pooling phases; one tap row is constant 1.0
    #        (folded conv bias).
    # w_ref: (Cout, K) bf16 conv weight (+ bias column + zero pad columns).
    # o_ref: (1, Cout, P_pad) bf16 pooled + ReLU'd activation, channel-major
    #        (lane dim = P_pad, multiple of 128 -> unmasked stores).
    w = w_ref[...]
    m = jnp.dot(w, p_ref[0, 0], preferred_element_type=jnp.float32)
    for ph in range(1, 4):                      # max over the 4 pooling phases
        m = jnp.maximum(m, jnp.dot(w, p_ref[0, ph],
                                   preferred_element_type=jnp.float32))
    o_ref[0] = jnp.maximum(m, 0.0).astype(o_ref.dtype)


def _head_kernel(act_ref, w1_ref, b1_ref, w2_ref, b2_ref, w3_ref, b3_ref,
                 o_ref, h1_acc):
    # Streams w1 over the F axis (grid axis 0), accumulating the first Linear
    # in a f32 VMEM scratch; bias / ReLU / predictor run only on the last step.
    f = pl.program_id(0)

    @pl.when(f == 0)
    def _():
        h1_acc[...] = jnp.zeros_like(h1_acc)

    h1_acc[...] += jnp.dot(act_ref[...], w1_ref[...],
                           preferred_element_type=jnp.float32)

    @pl.when(f == pl.num_programs(0) - 1)
    def _():
        h1 = jnp.maximum(h1_acc[...] + b1_ref[...], 0.0)
        # TODO(synk): Dropout(0.2) is identity in eval mode; training-mode RNG
        #             dropout (pltpu.prng_seed + prng_random_bits) not added.
        h2 = jnp.maximum(
            jnp.dot(h1, w2_ref[...], preferred_element_type=jnp.float32)
            + b2_ref[...], 0.0)
        o_ref[...] = (jnp.dot(h2, w3_ref[...],
                              preferred_element_type=jnp.float32) + b3_ref[...])


# ------------------------------ Pallas wrappers ----------------------------- #

def conv_pool_relu(patches, wmat, cout, p_pad):
    B, _, K, _ = patches.shape
    return pl.pallas_call(
        _conv_pool_relu_kernel,
        out_shape=jax.ShapeDtypeStruct((B, cout, p_pad), jnp.bfloat16),
        grid=(B,),
        in_specs=[
            pl.BlockSpec((1, 4, K, p_pad), lambda b: (b, 0, 0, 0)),
            pl.BlockSpec((cout, K), lambda b: (0, 0)),
        ],
        out_specs=pl.BlockSpec((1, cout, p_pad), lambda b: (b, 0, 0)),
        compiler_params=pltpu.CompilerParams(
            dimension_semantics=("parallel",),      # batch across TCs on v7x
            vmem_limit_bytes=VMEM_LIMIT),
    )(patches, wmat)


def head(act, w1, b1, w2, b2, w3, b3, tile_f):
    bp, f_pad = act.shape
    h1 = w1.shape[1]          # 200 (unpadded; block == full dim is legal)
    h2 = w2.shape[1]          # 50
    o = w3.shape[1]           # 7
    assert f_pad % tile_f == 0
    return pl.pallas_call(
        _head_kernel,
        out_shape=jax.ShapeDtypeStruct((bp, o), jnp.float32),
        grid=(f_pad // tile_f,),                    # reduction axis, last
        in_specs=[
            pl.BlockSpec((bp, tile_f), lambda f: (0, f)),    # activations (bf16)
            pl.BlockSpec((tile_f, h1), lambda f: (f, 0)),    # streamed w1 (bf16)
            pl.BlockSpec((1, h1), lambda f: (0, 0)),         # b1 (resident)
            pl.BlockSpec((h1, h2), lambda f: (0, 0)),        # w2 (resident)
            pl.BlockSpec((1, h2), lambda f: (0, 0)),         # b2
            pl.BlockSpec((h2, o), lambda f: (0, 0)),         # w3
            pl.BlockSpec((1, o), lambda f: (0, 0)),          # b3
        ],
        out_specs=pl.BlockSpec((bp, o), lambda f: (0, 0)),   # resident accum out
        scratch_shapes=[pltpu.VMEM((bp, h1), jnp.float32)],
        compiler_params=pltpu.CompilerParams(
            dimension_semantics=("arbitrary",),
            vmem_limit_bytes=VMEM_LIMIT),
    )(act, w1, b1, w2, b2, w3, b3)


# ------------------------ One-time weight preparation ----------------------- #

def prepare_params(params, image_hw, max_tile_f=MAX_TILE_F):
    """Hoisted out of the per-call forward: layout permute / pad / bf16 cast."""
    H, W = image_hw
    conv_w, conv_b = params["conv_w"], params["conv_b"]
    Cout, Cin, KH, KW = conv_w.shape
    assert (KH, KW) == (3, 3)
    Hp, Wp, F_real, _, F_pad, P_pad, K_pad = _derive_shapes(
        H, W, Cin, Cout, max_tile_f)
    assert params["mlp_w"].shape[1] == F_real

    # Conv weight -> (Cout, K_pad): tap columns in (kh, kw, cin) order matching
    # the patch build, + bias column (pairs with the constant-1 tap row).
    wc = jnp.transpose(conv_w, (0, 2, 3, 1)).reshape(Cout, 9 * Cin)
    wc = jnp.concatenate(
        [wc, conv_b.reshape(Cout, 1),
         jnp.zeros((Cout, K_pad - 9 * Cin - 1), jnp.float32)], axis=1)
    wc = wc.astype(jnp.bfloat16)

    # w1: PyTorch flatten order is (c, h, w); channel-major activations give
    # flat index c*P_pad + (h*Wp + w), so only a per-channel zero pad of the
    # spatial axis is needed (no permutation). Stored bf16, unpadded 200 cols.
    H1 = params["mlp_w"].shape[0]
    w1 = params["mlp_w"].reshape(H1, Cout, Hp * Wp)
    w1 = jnp.pad(w1, ((0, 0), (0, 0), (0, P_pad - Hp * Wp)))
    w1 = w1.reshape(H1, F_pad).T.astype(jnp.bfloat16)          # (F_pad, 200)

    return {
        "wc": wc,
        "w1": w1,
        "b1": params["mlp_b"].reshape(1, H1).astype(jnp.float32),
        "w2": params["pred_w1"].T.astype(jnp.float32),
        "b2": params["pred_b1"].reshape(1, -1).astype(jnp.float32),
        "w3": params["pred_w2"].T.astype(jnp.float32),
        "b3": params["pred_b2"].reshape(1, -1).astype(jnp.float32),
    }


# --------------------------------- Forward ---------------------------------- #

def _build_phase_patches(x_nchw, Hp, Wp, P_pad, K_pad):
    # NCHW -> NHWC bf16, 3x3 valid im2col in (kh, kw, cin) order + a constant-1
    # bias tap, zero-padded to K_pad, grouped by the 4 pooling phases and laid
    # out TRANSPOSED as (B, 4, K, P_pad) so the conv kernel's output is
    # channel-major / lane-dense.
    # TODO(synk): at real 3x240x320 sizes move this inside the conv kernel
    #             (shifted VMEM loads) to avoid the ~10x HBM read blowup.
    B = x_nchw.shape[0]
    Ho, Wo = 2 * Hp, 2 * Wp
    x = jnp.transpose(x_nchw, (0, 2, 3, 1)).astype(jnp.bfloat16)     # NHWC bf16
    cols = [x[:, i:i + Ho, j:j + Wo, :] for i in range(3) for j in range(3)]
    pat = jnp.concatenate(cols, axis=-1)                             # (B,Ho,Wo,27)
    ones = jnp.ones(pat.shape[:-1] + (1,), jnp.bfloat16)             # bias tap
    pat = jnp.concatenate([pat, ones], axis=-1)
    pat = jnp.pad(pat, ((0, 0), (0, 0), (0, 0), (0, K_pad - pat.shape[-1])))
    phases = []
    for dh in range(2):
        for dw in range(2):
            p = pat[:, dh:Ho:2, dw:Wo:2, :].reshape(B, Hp * Wp, K_pad)
            p = jnp.transpose(p, (0, 2, 1))                          # (B,K,Hp*Wp)
            phases.append(jnp.pad(p, ((0, 0), (0, 0), (0, P_pad - Hp * Wp))))
    return jnp.stack(phases, axis=1)                                 # (B,4,K,P_pad)


def network_coarse_simple_forward(x_nchw, prepped):
    B, Cin, H, W = x_nchw.shape
    Cout, K_pad = prepped["wc"].shape
    Hp, Wp, _, tile_f, F_pad, P_pad, k_pad = _derive_shapes(H, W, Cin, Cout)
    assert k_pad == K_pad and prepped["w1"].shape[0] == F_pad

    # Pad the batch once at the input; padded rows flow through and are sliced
    # off at the end (rows are independent in every layer).
    Bp = max(_round_up(B, 8), B_PAD)
    x = jnp.pad(x_nchw, ((0, Bp - B), (0, 0), (0, 0), (0, 0)))

    patches = _build_phase_patches(x, Hp, Wp, P_pad, K_pad)
    pooled = conv_pool_relu(patches, prepped["wc"], Cout, P_pad)  # (Bp,Cout,P_pad)

    act = pooled.reshape(Bp, F_pad)          # channel-major flatten == PyTorch
    out = head(act, prepped["w1"], prepped["b1"], prepped["w2"], prepped["b2"],
               prepped["w3"], prepped["b3"], tile_f)              # (Bp, 7)
    return out[:B]


# ------------------------------ Reference ----------------------------------- #

def reference_forward(x_nchw, params):
    y = jax.lax.conv_general_dilated(
        x_nchw.astype(jnp.float32), params["conv_w"],
        window_strides=(1, 1), padding="VALID",
        dimension_numbers=("NCHW", "OIHW", "NCHW"))
    y = y + params["conv_b"][None, :, None, None]
    y = jax.lax.reduce_window(y, -jnp.inf, jax.lax.max,
                              (1, 1, 2, 2), (1, 1, 2, 2), "VALID")
    y = jnp.maximum(y, 0.0)
    flat = y.reshape(x_nchw.shape[0], -1)
    h = jnp.maximum(flat @ params["mlp_w"].T + params["mlp_b"], 0.0)
    h = jnp.maximum(h @ params["pred_w1"].T + params["pred_b1"], 0.0)
    return h @ params["pred_w2"].T + params["pred_b2"]


# ------------------------------ Param init ----------------------------------- #

def init_params(key, in_ch, conv_out, flat_size, hidden=200, mid=50, out_dim=7):
    ks = jax.random.split(key, 8)

    def rnd(k, shape, scale):
        return jax.random.normal(k, shape, jnp.float32) * scale

    return {
        "conv_w": rnd(ks[0], (conv_out, in_ch, 3, 3), 0.1),
        "conv_b": rnd(ks[1], (conv_out,), 0.1),
        "mlp_w": rnd(ks[2], (hidden, flat_size), 0.02),
        "mlp_b": rnd(ks[3], (hidden,), 0.02),
        "pred_w1": rnd(ks[4], (mid, hidden), 0.05),
        "pred_b1": rnd(ks[5], (mid,), 0.05),
        "pred_w2": rnd(ks[6], (out_dim, mid), 0.05),
        "pred_b2": rnd(ks[7], (out_dim,), 0.05),
    }


if __name__ == "__main__":
    key = jax.random.PRNGKey(0)
    kx, kp = jax.random.split(key)

    B, C, H, W = 2, 3, 16, 16
    x = jax.random.normal(kx, (B, C, H, W), jnp.float32)

    flat_size = 32 * ((H - 2) // 2) * ((W - 2) // 2)   # module's 605472 at 16x16
    params = init_params(kp, in_ch=C, conv_out=32, flat_size=flat_size)

    prepped = prepare_params(params, (H, W))           # one-time weight prep

    fwd = jax.jit(network_coarse_simple_forward)
    out = jax.block_until_ready(fwd(x, prepped))
    assert out.shape == (B, 7)

    ref = reference_forward(x, params)
    np.testing.assert_allclose(np.asarray(out), np.asarray(ref),
                               rtol=5e-2, atol=5e-2)
    print("KERNEL_OK")
</pallas_src>

<mosaic_0001>
module attributes {stable_mosaic.version = 11 : i64} {
  func.func @_conv_pool_relu_kernel(%arg0: i32, %arg1: memref<1x4x32x128xbf16, #tpu.memory_space<vmem>>, %arg2: memref<32x32xbf16, #tpu.memory_space<vmem>>, %arg3: memref<1x32x128xbf16, #tpu.memory_space<vmem>>) attributes {dimension_semantics = [#tpu.dimension_semantics<parallel>], iteration_bounds = array<i64: 8>, scalar_prefetch = 0 : i64, scratch_operands = 0 : i64, tpu.core_type = #tpu.core_type<tc>, window_params = [{transform_indices = @transform_0, window_bounds = array<i64: 1, 4, 32, 128>}, {pipeline_mode = #tpu.pipeline_mode<synchronous>, transform_indices = @transform_1, window_bounds = array<i64: 32, 32>}, {transform_indices = @transform_2, window_bounds = array<i64: 1, 32, 128>}]} {
    %c0 = arith.constant 0 : index
    %c0_0 = arith.constant 0 : index
    %0 = vector.load %arg2[%c0, %c0_0] : memref<32x32xbf16, #tpu.memory_space<vmem>>, vector<32x32xbf16>
    %c0_1 = arith.constant 0 : index
    %c0_2 = arith.constant 0 : index
    %c0_3 = arith.constant 0 : index
    %c0_4 = arith.constant 0 : index
    %1 = vector.load %arg1[%c0_1, %c0_2, %c0_3, %c0_4] : memref<1x4x32x128xbf16, #tpu.memory_space<vmem>>, vector<1x1x32x128xbf16>
    %2 = vector.shape_cast %1 : vector<1x1x32x128xbf16> to vector<32x128xbf16>
    %cst = arith.constant dense<0.000000e+00> : vector<32x128xf32>
    %3 = tpu.matmul %0, %2, %cst {dimension_numbers = #tpu.dot_dimension_numbers<[1], [0], [0], [1], [0, 0, 1, 1], [], []>} : vector<32x32xbf16>, vector<32x128xbf16>, vector<32x128xf32> -> vector<32x128xf32>
    %c0_5 = arith.constant 0 : index
    %c1 = arith.constant 1 : index
    %c0_6 = arith.constant 0 : index
    %c0_7 = arith.constant 0 : index
    %4 = vector.load %arg1[%c0_5, %c1, %c0_6, %c0_7] : memref<1x4x32x128xbf16, #tpu.memory_space<vmem>>, vector<1x1x32x128xbf16>
    %5 = vector.shape_cast %4 : vector<1x1x32x128xbf16> to vector<32x128xbf16>
    %cst_8 = arith.constant dense<0.000000e+00> : vector<32x128xf32>
    %6 = tpu.matmul %0, %5, %cst_8 {dimension_numbers = #tpu.dot_dimension_numbers<[1], [0], [0], [1], [0, 0, 1, 1], [], []>} : vector<32x32xbf16>, vector<32x128xbf16>, vector<32x128xf32> -> vector<32x128xf32>
    %7 = arith.maximumf %3, %6 : vector<32x128xf32>
    %c0_9 = arith.constant 0 : index
    %c2 = arith.constant 2 : index
    %c0_10 = arith.constant 0 : index
    %c0_11 = arith.constant 0 : index
    %8 = vector.load %arg1[%c0_9, %c2, %c0_10, %c0_11] : memref<1x4x32x128xbf16, #tpu.memory_space<vmem>>, vector<1x1x32x128xbf16>
    %9 = vector.shape_cast %8 : vector<1x1x32x128xbf16> to vector<32x128xbf16>
    %cst_12 = arith.constant dense<0.000000e+00> : vector<32x128xf32>
    %10 = tpu.matmul %0, %9, %cst_12 {dimension_numbers = #tpu.dot_dimension_numbers<[1], [0], [0], [1], [0, 0, 1, 1], [], []>} : vector<32x32xbf16>, vector<32x128xbf16>, vector<32x128xf32> -> vector<32x128xf32>
    %11 = arith.maximumf %7, %10 : vector<32x128xf32>
    %c0_13 = arith.constant 0 : index
    %c3 = arith.constant 3 : index
    %c0_14 = arith.constant 0 : index
    %c0_15 = arith.constant 0 : index
    %12 = vector.load %arg1[%c0_13, %c3, %c0_14, %c0_15] : memref<1x4x32x128xbf16, #tpu.memory_space<vmem>>, vector<1x1x32x128xbf16>
    %13 = vector.shape_cast %12 : vector<1x1x32x128xbf16> to vector<32x128xbf16>
    %cst_16 = arith.constant dense<0.000000e+00> : vector<32x128xf32>
    %14 = tpu.matmul %0, %13, %cst_16 {dimension_numbers = #tpu.dot_dimension_numbers<[1], [0], [0], [1], [0, 0, 1, 1], [], []>} : vector<32x32xbf16>, vector<32x128xbf16>, vector<32x128xf32> -> vector<32x128xf32>
    %15 = arith.maximumf %11, %14 : vector<32x128xf32>
    %cst_17 = arith.constant 0.000000e+00 : f32
    %16 = vector.broadcast %cst_17 : f32 to vector<32x128xf32>
    %17 = arith.maximumf %15, %16 : vector<32x128xf32>
    %18 = arith.truncf %17 : vector<32x128xf32> to vector<32x128xbf16>
    %c0_18 = arith.constant 0 : index
    %c0_19 = arith.constant 0 : index
    %c0_20 = arith.constant 0 : index
    %19 = vector.load %arg3[%c0_18, %c0_19, %c0_20] : memref<1x32x128xbf16, #tpu.memory_space<vmem>>, vector<1x32x128xbf16>
    %20 = vector.shape_cast %19 : vector<1x32x128xbf16> to vector<32x128xbf16>
    %21 = vector.shape_cast %18 : vector<32x128xbf16> to vector<1x32x128xbf16>
    tpu.vector_store %arg3[%c0_18, %c0_19, %c0_20], %21 {strides = array<i32>} : memref<1x32x128xbf16, #tpu.memory_space<vmem>>, vector<1x32x128xbf16>,
    return
  }
  func.func @transform_0(%arg0: i32) -> (i32, i32, i32, i32) {
    %c0_i32 = arith.constant 0 : i32
    %c0_i32_0 = arith.constant 0 : i32
    %c0_i32_1 = arith.constant 0 : i32
    %c0_i32_2 = arith.constant 0 : i32
    return %arg0, %c0_i32, %c0_i32_0, %c0_i32_1 : i32, i32, i32, i32
  }
  func.func @transform_1(%arg0: i32) -> (i32, i32) {
    %c0_i32 = arith.constant 0 : i32
    %c0_i32_0 = arith.constant 0 : i32
    %c0_i32_1 = arith.constant 0 : i32
    return %c0_i32, %c0_i32_0 : i32, i32
  }
  func.func @transform_2(%arg0: i32) -> (i32, i32, i32) {
    %c0_i32 = arith.constant 0 : i32
    %c0_i32_0 = arith.constant 0 : i32
    %c0_i32_1 = arith.constant 0 : i32
    return %arg0, %c0_i32, %c0_i32_0 : i32, i32, i32
  }
}

module attributes {stable_mosaic.version = 11 : i64} {
  func.func @_head_kernel(%arg0: i32, %arg1: memref<8x4096xbf16, #tpu.memory_space<vmem>>, %arg2: memref<4096x200xbf16, #tpu.memory_space<vmem>>, %arg3: memref<1x200xf32, #tpu.memory_space<vmem>>, %arg4: memref<200x50xf32, #tpu.memory_space<vmem>>, %arg5: memref<1x50xf32, #tpu.memory_space<vmem>>, %arg6: memref<50x7xf32, #tpu.memory_space<vmem>>, %arg7: memref<1x7xf32, #tpu.memory_space<vmem>>, %arg8: memref<8x7xf32, #tpu.memory_space<vmem>>, %arg9: memref<8x200xf32, #tpu.memory_space<vmem>>) attributes {dimension_semantics = [#tpu.dimension_semantics<arbitrary>], iteration_bounds = array<i64: 1>, scalar_prefetch = 0 : i64, scratch_operands = 1 : i64, tpu.core_type = #tpu.core_type<tc>, window_params = [{transform_indices = @transform_0, window_bounds = array<i64: 8, 4096>}, {transform_indices = @transform_1, window_bounds = array<i64: 4096, 200>}, {pipeline_mode = #tpu.pipeline_mode<synchronous>, transform_indices = @transform_2, window_bounds = array<i64: 1, 200>}, {pipeline_mode = #tpu.pipeline_mode<synchronous>, transform_indices = @transform_3, window_bounds = array<i64: 200, 50>}, {pipeline_mode = #tpu.pipeline_mode<synchronous>, transform_indices = @transform_4, window_bounds = array<i64: 1, 50>}, {pipeline_mode = #tpu.pipeline_mode<synchronous>, transform_indices = @transform_5, window_bounds = array<i64: 50, 7>}, {pipeline_mode = #tpu.pipeline_mode<synchronous>, transform_indices = @transform_6, window_bounds = array<i64: 1, 7>}, {pipeline_mode = #tpu.pipeline_mode<synchronous>, transform_indices = @transform_7, window_bounds = array<i64: 8, 7>}]} {
    %c0_i32 = arith.constant 0 : i32
    %0 = arith.cmpi eq, %arg0, %c0_i32 : i32
    %1 = arith.extui %0 : i1 to i32
    %c0_i32_0 = arith.constant 0 : i32
    %2 = arith.cmpi ne, %1, %c0_i32_0 : i32
    scf.if %2 {
      %cst_10 = arith.constant 0.000000e+00 : f32
      %12 = vector.broadcast %cst_10 : f32 to vector<8x200xf32>
      %c0_11 = arith.constant 0 : index
      %c0_12 = arith.constant 0 : index
      %13 = vector.load %arg9[%c0_11, %c0_12] : memref<8x200xf32, #tpu.memory_space<vmem>>, vector<8x200xf32>
      tpu.vector_store %arg9[%c0_11, %c0_12], %12 {strides = array<i32>} : memref<8x200xf32, #tpu.memory_space<vmem>>, vector<8x200xf32>,
    } else {
    }
    %c0 = arith.constant 0 : index
    %c0_1 = arith.constant 0 : index
    %3 = vector.load %arg9[%c0, %c0_1] : memref<8x200xf32, #tpu.memory_space<vmem>>, vector<8x200xf32>
    %c0_2 = arith.constant 0 : index
    %c0_3 = arith.constant 0 : index
    %4 = vector.load %arg1[%c0_2, %c0_3] : memref<8x4096xbf16, #tpu.memory_space<vmem>>, vector<8x4096xbf16>
    %c0_4 = arith.constant 0 : index
    %c0_5 = arith.constant 0 : index
    %5 = vector.load %arg2[%c0_4, %c0_5] : memref<4096x200xbf16, #tpu.memory_space<vmem>>, vector<4096x200xbf16>
    %cst = arith.constant dense<0.000000e+00> : vector<8x200xf32>
    %6 = tpu.matmul %4, %5, %cst {dimension_numbers = #tpu.dot_dimension_numbers<[1], [0], [0], [1], [0, 0, 1, 1], [], []>} : vector<8x4096xbf16>, vector<4096x200xbf16>, vector<8x200xf32> -> vector<8x200xf32>
    %7 = arith.addf %3, %6 : vector<8x200xf32>
    %c0_6 = arith.constant 0 : index
    %c0_7 = arith.constant 0 : index
    %8 = vector.load %arg9[%c0_6, %c0_7] : memref<8x200xf32, #tpu.memory_space<vmem>>, vector<8x200xf32>
    tpu.vector_store %arg9[%c0_6, %c0_7], %7 {strides = array<i32>} : memref<8x200xf32, #tpu.memory_space<vmem>>, vector<8x200xf32>,
    %c0_i32_8 = arith.constant 0 : i32
    %9 = arith.cmpi eq, %arg0, %c0_i32_8 : i32
    %10 = arith.extui %9 : i1 to i32
    %c0_i32_9 = arith.constant 0 : i32
    %11 = arith.cmpi ne, %10, %c0_i32_9 : i32
    scf.if %11 {
      %c0_10 = arith.constant 0 : index
      %c0_11 = arith.constant 0 : index
      %12 = vector.load %arg9[%c0_10, %c0_11] : memref<8x200xf32, #tpu.memory_space<vmem>>, vector<8x200xf32>
      %c0_12 = arith.constant 0 : index
      %c0_13 = arith.constant 0 : index
      %13 = vector.load %arg3[%c0_12, %c0_13] : memref<1x200xf32, #tpu.memory_space<vmem>>, vector<1x200xf32>
      %14 = vector.broadcast %13 : vector<1x200xf32> to vector<8x200xf32>
      %15 = arith.addf %12, %14 : vector<8x200xf32>
      %cst_14 = arith.constant 0.000000e+00 : f32
      %16 = vector.broadcast %cst_14 : f32 to vector<8x200xf32>
      %17 = arith.maximumf %15, %16 : vector<8x200xf32>
      %c0_15 = arith.constant 0 : index
      %c0_16 = arith.constant 0 : index
      %18 = vector.load %arg4[%c0_15, %c0_16] : memref<200x50xf32, #tpu.memory_space<vmem>>, vector<200x50xf32>
      %cst_17 = arith.constant dense<0.000000e+00> : vector<8x50xf32>
      %19 = tpu.matmul %17, %18, %cst_17 {dimension_numbers = #tpu.dot_dimension_numbers<[1], [0], [0], [1], [0, 0, 1, 1], [], []>} : vector<8x200xf32>, vector<200x50xf32>, vector<8x50xf32> -> vector<8x50xf32>
      %c0_18 = arith.constant 0 : index
      %c0_19 = arith.constant 0 : index
      %20 = vector.load %arg5[%c0_18, %c0_19] : memref<1x50xf32, #tpu.memory_space<vmem>>, vector<1x50xf32>
      %21 = vector.broadcast %20 : vector<1x50xf32> to vector<8x50xf32>
      %22 = arith.addf %19, %21 : vector<8x50xf32>
      %cst_20 = arith.constant 0.000000e+00 : f32
      %23 = vector.broadcast %cst_20 : f32 to vector<8x50xf32>
      %24 = arith.maximumf %22, %23 : vector<8x50xf32>
      %c0_21 = arith.constant 0 : index
      %c0_22 = arith.constant 0 : index
      %25 = vector.load %arg6[%c0_21, %c0_22] : memref<50x7xf32, #tpu.memory_space<vmem>>, vector<50x7xf32>
      %cst_23 = arith.constant dense<0.000000e+00> : vector<8x7xf32>
      %26 = tpu.matmul %24, %25, %cst_23 {dimension_numbers = #tpu.dot_dimension_numbers<[1], [0], [0], [1], [0, 0, 1, 1], [], []>} : vector<8x50xf32>, vector<50x7xf32>, vector<8x7xf32> -> vector<8x7xf32>
      %c0_24 = arith.constant 0 : index
      %c0_25 = arith.constant 0 : index
      %27 = vector.load %arg7[%c0_24, %c0_25] : memref<1x7xf32, #tpu.memory_space<vmem>>, vector<1x7xf32>
      %28 = vector.broadcast %27 : vector<1x7xf32> to vector<8x7xf32>
      %29 = arith.addf %26, %28 : vector<8x7xf32>
      %c0_26 = arith.constant 0 : index
      %c0_27 = arith.constant 0 : index
      %30 = vector.load %arg8[%c0_26, %c0_27] : memref<8x7xf32, #tpu.memory_space<vmem>>, vector<8x7xf32>
      tpu.vector_store %arg8[%c0_26, %c0_27], %29 {strides = array<i32>} : memref<8x7xf32, #tpu.memory_space<vmem>>, vector<8x7xf32>,
    } else {
    }
    return
  }
  func.func @transform_0(%arg0: i32) -> (i32, i32) {
    %c0_i32 = arith.constant 0 : i32
    %c0_i32_0 = arith.constant 0 : i32
    return %c0_i32, %arg0 : i32, i32
  }
  func.func @transform_1(%arg0: i32) -> (i32, i32) {
    %c0_i32 = arith.constant 0 : i32
    %c0_i32_0 = arith.constant 0 : i32
    return %arg0, %c0_i32 : i32, i32
  }
  func.func @transform_2(%arg0: i32) -> (i32, i32) {
    %c0_i32 = arith.constant 0 : i32
    %c0_i32_0 = arith.constant 0 : i32
    %c0_i32_1 = arith.constant 0 : i32
    return %c0_i32, %c0_i32_0 : i32, i32
  }
  func.func @transform_3(%arg0: i32) -> (i32, i32) {
    %c0_i32 = arith.constant 0 : i32
    %c0_i32_0 = arith.constant 0 : i32
    %c0_i32_1 = arith.constant 0 : i32
    return %c0_i32, %c0_i32_0 : i32, i32
  }
  func.func @transform_4(%arg0: i32) -> (i32, i32) {
    %c0_i32 = arith.constant 0 : i32
    %c0_i32_0 = arith.constant 0 : i32
    %c0_i32_1 = arith.constant 0 : i32
    return %c0_i32, %c0_i32_0 : i32, i32
  }
  func.func @transform_5(%arg0: i32) -> (i32, i32) {
    %c0_i32 = arith.constant 0 : i32
    %c0_i32_0 = arith.constant 0 : i32
    %c0_i32_1 = arith.constant 0 : i32
    return %c0_i32, %c0_i32_0 : i32, i32
  }
  func.func @transform_6(%arg0: i32) -> (i32, i32) {
    %c0_i32 = arith.constant 0 : i32
    %c0_i32_0 = arith.constant 0 : i32
    %c0_i32_1 = arith.constant 0 : i32
    return %c0_i32, %c0_i32_0 : i32, i32
  }
  func.func @transform_7(%arg0: i32) -> (i32, i32) {
    %c0_i32 = arith.constant 0 : i32
    %c0_i32_0 = arith.constant 0 : i32
    %c0_i32_1 = arith.constant 0 : i32
    return %c0_i32, %c0_i32_0 : i32, i32
  }
}

</mosaic_0001>

<llo_original>
// kernel: network_coarse_simple_forward.2
$region0: #{network_coarse_simple_forward.2}
  #allocation0 [shape = 'u32[]', space=smem, size = 0x4, offset = 0x4, fixed_abs, tag = 'smem constant byte address 0x4 - core index']
  #allocation1 [shape = 'u32[144,128]{1,0:T(1,128)}', space=vmem, size = 0x12000, scoped, tag = 'internal scratch']
  %s0 = inlined_call_operand.vmem [shape: bf16[8,4,32,128], index: 0, kind: input, shape index: {}]
  %s1 = inlined_call_operand.vmem [shape: bf16[32,32], index: 1, kind: input, shape index: {}]
  %s2 = inlined_call_operand.vmem [shape: bf16[8,32,128], index: 2, kind: output, shape index: {}]
  %s3 = sld [smem:[#allocation0]]
  $region41: #{network_coarse_simple_forward.2} parent=0
    _
  %s5 = ssub.s32 1, %s3
  %s6 = scalar_select 0, %s5, %s3
  loop: start=0, step=1, limit=10
  $region2: #{network_coarse_simple_forward.2} parent=0 // loop_pre_header
    _
  $region3: #{network_coarse_simple_forward.2} parent=0 // loop_header
    %s8 = sphi 0, %s12
    %p9 = scmp.ge.s32.totalorder %s8, 10
    %s18 = sphi 0, %s20
    %s21 = sphi 0, %s18
    %s22 = sphi 0, %s21
    %s38 = sphi 0, %s22
    %s42 = sphi 0, %s42
    %s44 = sphi 0, %s42
    %s45 = sphi 0, %s44
    %s59 = sphi 0, %s45
    %s65 = sphi 0, %s67
    %s68 = sphi 0, %s65
    %s69 = sphi 0, %s68
    %s85 = sphi 0, %s69
  $region4: #{network_coarse_simple_forward.2} parent=0 // loop_header_branch
    %11 = sbr.rel (%p9) target = $region8
  $region5: #{network_coarse_simple_forward.2} parent=0 // loop_body
    %s13 = ssub.s32 %s8, 1
    %s14 = ssub.s32 %s8, 2
    %s15 = sadd.s32 %s8, 1
    %s16 = ssub.s32 %s8, %s15
    %p17 = scmp.eq.s32.totalorder %s16, 0
    %s19 = sadd.s32 %s18, 1
    %s20 = scalar_select %p17, %s18, %s19
    %p23 = pneg %p17
    %p24 = scmp.eq.s32.totalorder %s8, 7
    %p25 = por %p23, %p24
    %p26 = scmp.ne.s32.totalorder %s18, %s21
    %p27 = scmp.eq.s32.totalorder %s8, 0
    %p28 = por %p26, %p27
    %p29 = scmp.ne.s32.totalorder %s18, %s21
    %p30 = scmp.eq.s32.totalorder %s13, 7
    %p31 = por %p29, %p30
    %p32 = scmp.ne.s32.totalorder %s21, %s22
    %p33 = scmp.eq.s32.totalorder %s13, 0
    %p34 = por %p32, %p33
    %p35 = scmp.ne.s32.totalorder %s21, %s22
    %p36 = scmp.eq.s32.totalorder %s14, 7
    %p37 = por %p35, %p36
    %p39 = scmp.ne.s32.totalorder %s22, %s38
    %p40 = scmp.eq.s32.totalorder %s14, 0
    %p41 = por %p39, %p40
    %s43 = sadd.s32 %s42, 1
    %p46 = scmp.eq.s32.totalorder %s8, 7
    %p47 = scmp.ne.s32.totalorder %s42, %s44
    %p48 = scmp.eq.s32.totalorder %s8, 0
    %p49 = por %p47, %p48
    %p50 = scmp.ne.s32.totalorder %s42, %s44
    %p51 = scmp.eq.s32.totalorder %s13, 7
    %p52 = por %p50, %p51
    %p53 = scmp.ne.s32.totalorder %s44, %s45
    %p54 = scmp.eq.s32.totalorder %s13, 0
    %p55 = por %p53, %p54
    %p56 = scmp.ne.s32.totalorder %s44, %s45
    %p57 = scmp.eq.s32.totalorder %s14, 7
    %p58 = por %p56, %p57
    %p60 = scmp.ne.s32.totalorder %s45, %s59
    %p61 = scmp.eq.s32.totalorder %s14, 0
    %p62 = por %p60, %p61
    %s63 = ssub.s32 %s8, %s15
    %p64 = scmp.eq.s32.totalorder %s63, 0
    %s66 = sadd.s32 %s65, 1
    %s67 = scalar_select %p64, %s65, %s66
    %p70 = pneg %p64
    %p71 = scmp.eq.s32.totalorder %s8, 7
    %p72 = por %p70, %p71
    %p73 = scmp.ne.s32.totalorder %s65, %s68
    %p74 = scmp.eq.s32.totalorder %s8, 0
    %p75 = por %p73, %p74
    %p76 = scmp.ne.s32.totalorder %s65, %s68
    %p77 = scmp.eq.s32.totalorder %s13, 7
    %p78 = por %p76, %p77
    %p79 = scmp.ne.s32.totalorder %s68, %s69
    %p80 = scmp.eq.s32.totalorder %s13, 0
    %p81 = por %p79, %p80
    %p82 = scmp.ne.s32.totalorder %s68, %s69
    %p83 = scmp.eq.s32.totalorder %s14, 7
    %p84 = por %p82, %p83
    %p86 = scmp.ne.s32.totalorder %s69, %s85
    %p87 = scmp.eq.s32.totalorder %s14, 0
    %p88 = por %p86, %p87
    %p89 = scmp.le.s32.totalorder 1, %s8
    %p90 = scmp.lt.s32.totalorder %s8, 9
    %p91 = pnand %p89, %p90
    %p92 = pneg %p91
    // Predicated region
    $region9: #{network_coarse_simple_forward.2} parent=5 // pred_check
      _
    $region10: #{network_coarse_simple_forward.2} parent=5 // pred_check_branch
      %94 = sbr.rel (%p91) target = $region12
    $region11: #{network_coarse_simple_forward.2} parent=5 // pred_region
      %s95 = ssub.s32 %s8, 1
      // Predicated region
      $region13: #{network_coarse_simple_forward.2} parent=11 // pred_check
        %p96 = pneg %p55
      $region14: #{network_coarse_simple_forward.2} parent=11 // pred_check_branch
        %98 = sbr.rel (%p96) target = $region16
      $region15: #{network_coarse_simple_forward.2} parent=11 // pred_region
        _
      $region16: #{network_coarse_simple_forward.2} parent=11 // pred_fallthru
        _
    $region12: #{network_coarse_simple_forward.2} parent=5 // pred_fallthru
      _
    %p99 = scmp.lt.s32.totalorder %s8, 8
    // Predicated region
    $region17: #{network_coarse_simple_forward.2} parent=5 // pred_check
      %p100 = pneg %p99
    $region18: #{network_coarse_simple_forward.2} parent=5 // pred_check_branch
      %102 = sbr.rel (%p100) target = $region20
    $region19: #{network_coarse_simple_forward.2} parent=5 // pred_region
      // Predicated region
      $region21: #{network_coarse_simple_forward.2} parent=19 // pred_check
        %p103 = pneg %p28
      $region22: #{network_coarse_simple_forward.2} parent=19 // pred_check_branch
        %105 = sbr.rel (%p103) target = $region24
      $region23: #{network_coarse_simple_forward.2} parent=19 // pred_region
        %p106 = scmp.lt.s32.totalorder %s8, 7
        %s107 = scalar_select %p106, %s8, 7
        %s108 = smul.addr %s107, 16
        %s109 = smul.addr %s108, 4
        %s110 = scalar_lea.vmem %s0, %s109
      $region24: #{network_coarse_simple_forward.2} parent=19 // pred_fallthru
        _
    $region20: #{network_coarse_simple_forward.2} parent=5 // pred_fallthru
      _
    %p111 = scmp.le.s32.totalorder 1, %s8
    %p112 = scmp.lt.s32.totalorder %s8, 9
    %p113 = pnand %p111, %p112
    %p114 = pneg %p113
    // Predicated region
    $region25: #{network_coarse_simple_forward.2} parent=5 // pred_check
      _
    $region26: #{network_coarse_simple_forward.2} parent=5 // pred_check_branch
      %116 = sbr.rel (%p113) target = $region28
    $region27: #{network_coarse_simple_forward.2} parent=5 // pred_region
      %s117 = ssub.s32 %s8, 1
      %p118 = scmp.lt.s32.totalorder %s13, 7
      %s119 = scalar_select %p118, %s13, 7
      %s120 = smul.addr %s119, 16
      %s121 = smul.addr %s120, 4
      %s122 = scalar_lea.vmem %s0, %s121
      %p123 = pneg %p34
      %p124 = pneg %p31
      %p125 = pneg %p55
      %p126 = pneg %p52
      %p127 = pneg %p81
      %p128 = pneg %p78
      %p129 = scmp.lt.s32.totalorder %s13, 7
      %s130 = scalar_select %p129, %s13, 7
      %s131 = smul.addr %s130, 4
      %s132 = smul.addr %s131, 4
      %s133 = scalar_lea.vmem %s2, %s132
      %p134 = scmp.lt.s32.totalorder %s13, 7
      %s135 = scalar_select %p134, %s13, 7
      %s136 = smul.addr %s135, 16
      %s137 = smul.addr %s136, 4
      %s138 = scalar_lea.vmem %s0, %s137
      %p139 = scmp.lt.s32.totalorder %s13, 7
      %s140 = scalar_select %p139, %s13, 7
      %s141 = smul.addr %s140, 4
      %s142 = smul.addr %s141, 4
      %s143 = scalar_lea.vmem %s2, %s142
      %v145 = vld [vmem:[%s1] sm:$0xf]
      %v146 = vld [vmem:[%s1 + $0x4] sm:$0xf]
      %v147 = vld [vmem:[%s1 + $0x8] sm:$0xf]
      %v148 = vld [vmem:[%s1 + $0xc] sm:$0xf]
      %v149 = vld [vmem:[%s138] sm:$0xf]
      %v150 = vld [vmem:[%s138 + $0x4] sm:$0xf]
      %v151 = vld [vmem:[%s138 + $0x8] sm:$0xf]
      %v152 = vld [vmem:[%s138 + $0xc] sm:$0xf]
      %v157 = vunpack.c.l.b16 %v145
      %v158 = vunpack.c.l.b16 %v146
      %v159 = vunpack.c.l.b16 %v147
      %v160 = vunpack.c.l.b16 %v148
      %v161 = vpack.c.b16 %v158, %v157
      %v162 = vpack.c.b16 %v160, %v159
      %v167 = vunpack.c.l.b16 %v149
      %v168 = vunpack.c.l.b16 %v150
      %v169 = vunpack.c.l.b16 %v151
      %v170 = vunpack.c.l.b16 %v152
      %v171 = vpack.c.b16 %v168, %v167
      %v172 = vpack.c.b16 %v170, %v169
      %vm175 = vcmask 261120
      %v177 = vsel %vm175, %v161, 0
      %v180 = vsel %vm175, %v162, 0
      %182 = vmatprep.subr.bf16.mxu0 0
      %183 = vmatpush1.bf16.msra.mxu0 0
      %184 = vmatprep.subr.bf16.mxu0 0
      %185 = vmatpush1.bf16.msra.mxu0 0
      %186 = vmatprep.subr.bf16.mxu0 0
      %187 = vmatpush1.bf16.msra.mxu0 0
      %188 = vmatprep.subr.bf16.mxu0 0
      %189 = vmatpush1.bf16.msra.mxu0 0
      %190 = vmatprep.subr.bf16.mxu0 0
      %191 = vmatpush1.bf16.msra.mxu0 0
      %192 = vmatprep.subr.bf16.mxu0 0
      %193 = vmatpush1.bf16.msra.mxu0 0
      %194 = vmatprep.subr.bf16.mxu0 0
      %195 = vmatpush1.bf16.msra.mxu0 %v172
      %196 = vmatprep.subr.bf16.mxu0 0
      %197 = vmatpush1.bf16.msra.mxu0 %v171
      %198 = vmatprep.subr.bf16.mxu0 0
      %199 = vmatpush2.bf16.msra.mxu0 0
      %200 = vmatprep.subr.bf16.mxu0 0
      %201 = vmatpush2.bf16.msra.mxu0 0
      %202 = vmatprep.subr.bf16.mxu0 0
      %203 = vmatpush2.bf16.msra.mxu0 0
      %204 = vmatprep.subr.bf16.mxu0 0
      %205 = vmatpush2.bf16.msra.mxu0 0
      %206 = vmatprep.subr.bf16.mxu0 0
      %207 = vmatpush2.bf16.msra.mxu0 0
      %208 = vmatprep.subr.bf16.mxu0 0
      %209 = vmatpush2.bf16.msra.mxu0 0
      %210 = vmatprep.subr.bf16.mxu0 0
      %211 = vmatpush2.bf16.msra.mxu0 0
      %212 = vmatprep.subr.bf16.mxu0 0
      %213 = vmatpush2.bf16.msra.mxu0 0
      %214 = vmatprep.mubr.bf16.mxu0 0
      %215 = vmatmul.mubr.bf16.gmra.mxu0 %v177
      %v216 = vpop.f32.mrf.mxu0
      %v217 = vadd.f32 0.0, %v216
      %v218 = vpop.f32.mrf.mxu0
      %v219 = vpop.f32.mrf.mxu0
      %v220 = vadd.f32 0.0, %v219
      %v221 = vpop.f32.mrf.mxu0
      %222 = vmatprep.mubr.bf16.mxu0 0
      %223 = vmatmul.mubr.bf16.gmra.mxu0 %v180
      %v224 = vpop.f32.mrf.mxu0
      %v225 = vadd.f32 0.0, %v224
      %v226 = vpop.f32.mrf.mxu0
      %v227 = vpop.f32.mrf.mxu0
      %v228 = vadd.f32 0.0, %v227
      %v229 = vpop.f32.mrf.mxu0
      %230 = vdwg.mxu0
      %s231 = scalar_lea.vmem %s138, 16
      %v232 = vld [vmem:[%s231] sm:$0xf]
      %v233 = vld [vmem:[%s231 + $0x4] sm:$0xf]
      %v234 = vld [vmem:[%s231 + $0x8] sm:$0xf]
      %v235 = vld [vmem:[%s231 + $0xc] sm:$0xf]
      %v240 = vunpack.c.l.b16 %v232
      %v241 = vunpack.c.l.b16 %v233
      %v242 = vunpack.c.l.b16 %v234
      %v243 = vunpack.c.l.b16 %v235
      %v244 = vpack.c.b16 %v241, %v240
      %v245 = vpack.c.b16 %v243, %v242
      %248 = vmatprep.subr.bf16.mxu0 0
      %249 = vmatpush1.bf16.msra.mxu0 0
      %250 = vmatprep.subr.bf16.mxu0 0
      %251 = vmatpush1.bf16.msra.mxu0 0
      %252 = vmatprep.subr.bf16.mxu0 0
      %253 = vmatpush1.bf16.msra.mxu0 0
      %254 = vmatprep.subr.bf16.mxu0 0
      %255 = vmatpush1.bf16.msra.mxu0 0
      %256 = vmatprep.subr.bf16.mxu0 0
      %257 = vmatpush1.bf16.msra.mxu0 0
      %258 = vmatprep.subr.bf16.mxu0 0
      %259 = vmatpush1.bf16.msra.mxu0 0
      %260 = vmatprep.subr.bf16.mxu0 0
      %261 = vmatpush1.bf16.msra.mxu0 %v245
      %262 = vmatprep.subr.bf16.mxu0 0
      %263 = vmatpush1.bf16.msra.mxu0 %v244
      %264 = vmatprep.subr.bf16.mxu0 0
      %265 = vmatpush2.bf16.msra.mxu0 0
      %266 = vmatprep.subr.bf16.mxu0 0
      %267 = vmatpush2.bf16.msra.mxu0 0
      %268 = vmatprep.subr.bf16.mxu0 0
      %269 = vmatpush2.bf16.msra.mxu0 0
      %270 = vmatprep.subr.bf16.mxu0 0
      %271 = vmatpush2.bf16.msra.mxu0 0
      %272 = vmatprep.subr.bf16.mxu0 0
      %273 = vmatpush2.bf16.msra.mxu0 0
      %274 = vmatprep.subr.bf16.mxu0 0
      %275 = vmatpush2.bf16.msra.mxu0 0
      %276 = vmatprep.subr.bf16.mxu0 0
      %277 = vmatpush2.bf16.msra.mxu0 0
      %278 = vmatprep.subr.bf16.mxu0 0
      %279 = vmatpush2.bf16.msra.mxu0 0
      %280 = vmatprep.mubr.bf16.mxu0 0
      %281 = vmatmul.mubr.bf16.gmra.mxu0 %v177
      %v282 = vpop.f32.mrf.mxu0
      %v283 = vadd.f32 0.0, %v282
      %v284 = vpop.f32.mrf.mxu0
      %v285 = vpop.f32.mrf.mxu0
      %v286 = vadd.f32 0.0, %v285
      %v287 = vpop.f32.mrf.mxu0
      %288 = vmatprep.mubr.bf16.mxu0 0
      %289 = vmatmul.mubr.bf16.gmra.mxu0 %v180
      %v290 = vpop.f32.mrf.mxu0
      %v291 = vadd.f32 0.0, %v290
      %v292 = vpop.f32.mrf.mxu0
      %v293 = vpop.f32.mrf.mxu0
      %v294 = vadd.f32 0.0, %v293
      %v295 = vpop.f32.mrf.mxu0
      %296 = vdwg.mxu0
      %v297 = vmax.f32 %v217, %v283
      %v298 = vmax.f32 %v220, %v286
      %v299 = vmax.f32 %v225, %v291
      %v300 = vmax.f32 %v228, %v294
      %s301 = scalar_lea.vmem %s138, 32
      %v302 = vld [vmem:[%s301] sm:$0xf]
      %v303 = vld [vmem:[%s301 + $0x4] sm:$0xf]
      %v304 = vld [vmem:[%s301 + $0x8] sm:$0xf]
      %v305 = vld [vmem:[%s301 + $0xc] sm:$0xf]
      %v310 = vunpack.c.l.b16 %v302
      %v311 = vunpack.c.l.b16 %v303
      %v312 = vunpack.c.l.b16 %v304
      %v313 = vunpack.c.l.b16 %v305
      %v314 = vpack.c.b16 %v311, %v310
      %v315 = vpack.c.b16 %v313, %v312
      %318 = vmatprep.subr.bf16.mxu0 0
      %319 = vmatpush1.bf16.msra.mxu0 0
      %320 = vmatprep.subr.bf16.mxu0 0
      %321 = vmatpush1.bf16.msra.mxu0 0
      %322 = vmatprep.subr.bf16.mxu0 0
      %323 = vmatpush1.bf16.msra.mxu0 0
      %324 = vmatprep.subr.bf16.mxu0 0
      %325 = vmatpush1.bf16.msra.mxu0 0
      %326 = vmatprep.subr.bf16.mxu0 0
      %327 = vmatpush1.bf16.msra.mxu0 0
      %328 = vmatprep.subr.bf16.mxu0 0
      %329 = vmatpush1.bf16.msra.mxu0 0
      %330 = vmatprep.subr.bf16.mxu0 0
      %331 = vmatpush1.bf16.msra.mxu0 %v315
      %332 = vmatprep.subr.bf16.mxu0 0
      %333 = vmatpush1.bf16.msra.mxu0 %v314
      %334 = vmatprep.subr.bf16.mxu0 0
      %335 = vmatpush2.bf16.msra.mxu0 0
      %336 = vmatprep.subr.bf16.mxu0 0
      %337 = vmatpush2.bf16.msra.mxu0 0
      %338 = vmatprep.subr.bf16.mxu0 0
      %339 = vmatpush2.bf16.msra.mxu0 0
      %340 = vmatprep.subr.bf16.mxu0 0
      %341 = vmatpush2.bf16.msra.mxu0 0
      %342 = vmatprep.subr.bf16.mxu0 0
      %343 = vmatpush2.bf16.msra.mxu0 0
      %344 = vmatprep.subr.bf16.mxu0 0
      %345 = vmatpush2.bf16.msra.mxu0 0
      %346 = vmatprep.subr.bf16.mxu0 0
      %347 = vmatpush2.bf16.msra.mxu0 0
      %348 = vmatprep.subr.bf16.mxu0 0
      %349 = vmatpush2.bf16.msra.mxu0 0
      %350 = vmatprep.mubr.bf16.mxu0 0
      %351 = vmatmul.mubr.bf16.gmra.mxu0 %v177
      %v352 = vpop.f32.mrf.mxu0
      %v353 = vadd.f32 0.0, %v352
      %v354 = vpop.f32.mrf.mxu0
      %v355 = vpop.f32.mrf.mxu0
      %v356 = vadd.f32 0.0, %v355
      %v357 = vpop.f32.mrf.mxu0
      %358 = vmatprep.mubr.bf16.mxu0 0
      %359 = vmatmul.mubr.bf16.gmra.mxu0 %v180
      %v360 = vpop.f32.mrf.mxu0
      %v361 = vadd.f32 0.0, %v360
      %v362 = vpop.f32.mrf.mxu0
      %v363 = vpop.f32.mrf.mxu0
      %v364 = vadd.f32 0.0, %v363
      %v365 = vpop.f32.mrf.mxu0
      %366 = vdwg.mxu0
      %v367 = vmax.f32 %v297, %v353
      %v368 = vmax.f32 %v298, %v356
      %v369 = vmax.f32 %v299, %v361
      %v370 = vmax.f32 %v300, %v364
      %s371 = scalar_lea.vmem %s138, 48
      %v372 = vld [vmem:[%s371] sm:$0xf]
      %v373 = vld [vmem:[%s371 + $0x4] sm:$0xf]
      %v374 = vld [vmem:[%s371 + $0x8] sm:$0xf]
      %v375 = vld [vmem:[%s371 + $0xc] sm:$0xf]
      %v380 = vunpack.c.l.b16 %v372
      %v381 = vunpack.c.l.b16 %v373
      %v382 = vunpack.c.l.b16 %v374
      %v383 = vunpack.c.l.b16 %v375
      %v384 = vpack.c.b16 %v381, %v380
      %v385 = vpack.c.b16 %v383, %v382
      %388 = vmatprep.subr.bf16.mxu0 0
      %389 = vmatpush1.bf16.msra.mxu0 0
      %390 = vmatprep.subr.bf16.mxu0 0
      %391 = vmatpush1.bf16.msra.mxu0 0
      %392 = vmatprep.subr.bf16.mxu0 0
      %393 = vmatpush1.bf16.msra.mxu0 0
      %394 = vmatprep.subr.bf16.mxu0 0
      %395 = vmatpush1.bf16.msra.mxu0 0
      %396 = vmatprep.subr.bf16.mxu0 0
      %397 = vmatpush1.bf16.msra.mxu0 0
      %398 = vmatprep.subr.bf16.mxu0 0
      %399 = vmatpush1.bf16.msra.mxu0 0
      %400 = vmatprep.subr.bf16.mxu0 0
      %401 = vmatpush1.bf16.msra.mxu0 %v385
      %402 = vmatprep.subr.bf16.mxu0 0
      %403 = vmatpush1.bf16.msra.mxu0 %v384
      %404 = vmatprep.subr.bf16.mxu0 0
      %405 = vmatpush2.bf16.msra.mxu0 0
      %406 = vmatprep.subr.bf16.mxu0 0
      %407 = vmatpush2.bf16.msra.mxu0 0
      %408 = vmatprep.subr.bf16.mxu0 0
      %409 = vmatpush2.bf16.msra.mxu0 0
      %410 = vmatprep.subr.bf16.mxu0 0
      %411 = vmatpush2.bf16.msra.mxu0 0
      %412 = vmatprep.subr.bf16.mxu0 0
      %413 = vmatpush2.bf16.msra.mxu0 0
      %414 = vmatprep.subr.bf16.mxu0 0
      %415 = vmatpush2.bf16.msra.mxu0 0
      %416 = vmatprep.subr.bf16.mxu0 0
      %417 = vmatpush2.bf16.msra.mxu0 0
      %418 = vmatprep.subr.bf16.mxu0 0
      %419 = vmatpush2.bf16.msra.mxu0 0
      %420 = vmatprep.mubr.bf16.mxu0 0
      %421 = vmatmul.mubr.bf16.gmra.mxu0 %v177
      %v422 = vpop.f32.mrf.mxu0
      %v423 = vadd.f32 0.0, %v422
      %v424 = vpop.f32.mrf.mxu0
      %v425 = vpop.f32.mrf.mxu0
      %v426 = vadd.f32 0.0, %v425
      %v427 = vpop.f32.mrf.mxu0
      %428 = vmatprep.mubr.bf16.mxu0 0
      %429 = vmatmul.mubr.bf16.gmra.mxu0 %v180
      %v430 = vpop.f32.mrf.mxu0
      %v431 = vadd.f32 0.0, %v430
      %v432 = vpop.f32.mrf.mxu0
      %v433 = vpop.f32.mrf.mxu0
      %v434 = vadd.f32 0.0, %v433
      %v435 = vpop.f32.mrf.mxu0
      %436 = vdwg.mxu0
      %v437 = vmax.f32 %v367, %v423
      %v438 = vmax.f32 %v368, %v426
      %v439 = vmax.f32 %v369, %v431
      %v440 = vmax.f32 %v370, %v434
      %v441 = vmax.f32 %v437, 0.0
      %v442 = vmax.f32 %v438, 0.0
      %v443 = vmax.f32 %v439, 0.0
      %v444 = vmax.f32 %v440, 0.0
      %v445 = vpack.c.bf16 %v442, %v441
      %v446 = vpack.c.bf16 %v444, %v443
      %v449 = vunpack.c.l.b16 %v445
      %v450 = vunpack.c.h.b16 %v445
      %v451 = vunpack.c.l.b16 %v446
      %v452 = vunpack.c.h.b16 %v446
      %v453 = vpack.c.b16 %v449, %v449
      %v454 = vpack.c.b16 %v450, %v450
      %v455 = vpack.c.b16 %v451, %v451
      %v456 = vpack.c.b16 %v452, %v452
      %461 = vst [vmem:[%s143] sm:$0xf] %v453
      %462 = vst [vmem:[%s143 + $0x4] sm:$0xf] %v454
      %463 = vst [vmem:[%s143 + $0x8] sm:$0xf] %v455
      %464 = vst [vmem:[%s143 + $0xc] sm:$0xf] %v456
      %p465 = scmp.lt.s32.totalorder %s13, 7
      %s466 = scalar_select %p465, %s13, 7
      %s467 = smul.addr %s466, 4
      %s468 = smul.addr %s467, 4
      %s469 = scalar_lea.vmem %s2, %s468
      // Predicated region
      $region29: #{network_coarse_simple_forward.2} parent=27 // pred_check
        %p470 = pneg %p78
      $region30: #{network_coarse_simple_forward.2} parent=27 // pred_check_branch
        %472 = sbr.rel (%p470) target = $region32
      $region31: #{network_coarse_simple_forward.2} parent=27 // pred_region
        _
      $region32: #{network_coarse_simple_forward.2} parent=27 // pred_fallthru
        _
    $region28: #{network_coarse_simple_forward.2} parent=5 // pred_fallthru
      _
    %p473 = scmp.le.s32.totalorder 2, %s8
    // Predicated region
    $region33: #{network_coarse_simple_forward.2} parent=5 // pred_check
      %p474 = pneg %p473
    $region34: #{network_coarse_simple_forward.2} parent=5 // pred_check_branch
      %476 = sbr.rel (%p474) target = $region36
    $region35: #{network_coarse_simple_forward.2} parent=5 // pred_region
      %s477 = ssub.s32 %s8, 2
      // Predicated region
      $region37: #{network_coarse_simple_forward.2} parent=35 // pred_check
        %p478 = pneg %p84
      $region38: #{network_coarse_simple_forward.2} parent=35 // pred_check_branch
        %480 = sbr.rel (%p478) target = $region40
      $region39: #{network_coarse_simple_forward.2} parent=35 // pred_region
        %p481 = scmp.lt.s32.totalorder %s14, 7
        %s482 = scalar_select %p481, %s14, 7
        %s483 = smul.addr %s482, 4
        %s484 = smul.addr %s483, 4
        %s485 = scalar_lea.vmem %s2, %s484
      $region40: #{network_coarse_simple_forward.2} parent=35 // pred_fallthru
        _
    $region36: #{network_coarse_simple_forward.2} parent=5 // pred_fallthru
      _
  $region6: #{network_coarse_simple_forward.2} parent=0 // loop_footer
    %s12 = sadd.s32 1, %s8
  $region7: #{network_coarse_simple_forward.2} parent=0 // loop_footer_branch
    %7 = sbr.rel target = $region3
  $region8: #{network_coarse_simple_forward.2} parent=0 // loop_exit
    _

// kernel: network_coarse_simple_forward.3
$region0: #{network_coarse_simple_forward.3}
  #allocation0 [shape = 'u32[]', space=smem, size = 0x4, offset = 0x4, fixed_abs, tag = 'smem constant byte address 0x4 - core index']
  #allocation1 [shape = 'u32[144,128]{1,0:T(1,128)}', space=vmem, size = 0x12000, scoped, tag = 'internal scratch']
  #allocation2 [shape = 'f32[8,200]{1,0:T(8,128)}', space=vmem, size = 0x2000, scoped, tag = 'scratch operand']
  %s0 = inlined_call_operand.vmem [shape: bf16[8,4096], index: 0, kind: input, shape index: {}]
  %s1 = inlined_call_operand.vmem [shape: bf16[4096,200], index: 1, kind: input, shape index: {}]
  %s2 = inlined_call_operand.vmem [shape: f32[1,200], index: 2, kind: input, shape index: {}]
  %s3 = inlined_call_operand.vmem [shape: f32[200,50], index: 3, kind: input, shape index: {}]
  %s4 = inlined_call_operand.vmem [shape: f32[1,50], index: 4, kind: input, shape index: {}]
  %s5 = inlined_call_operand.vmem [shape: f32[50,7], index: 5, kind: input, shape index: {}]
  %s6 = inlined_call_operand.vmem [shape: f32[1,7], index: 6, kind: input, shape index: {}]
  %s7 = inlined_call_operand.vmem [shape: f32[8,7], index: 7, kind: output, shape index: {}]
  %s8 = sld [smem:[#allocation0]]
  $region46: #{network_coarse_simple_forward.3} parent=0
    _
  %s10 = ssub.s32 1, %s8
  %s11 = scalar_select 0, %s10, %s8
  // Predicated region
  $region2: #{network_coarse_simple_forward.3} parent=0 // pred_check
    _
  $region3: #{network_coarse_simple_forward.3} parent=0 // pred_check_branch
    %13 = sbr.rel (0) target = $region5
  $region4: #{network_coarse_simple_forward.3} parent=0 // pred_region
    _
  $region5: #{network_coarse_simple_forward.3} parent=0 // pred_fallthru
    _
  // Predicated region
  $region6: #{network_coarse_simple_forward.3} parent=0 // pred_check
    _
  $region7: #{network_coarse_simple_forward.3} parent=0 // pred_check_branch
    %15 = sbr.rel (0) target = $region9
  $region8: #{network_coarse_simple_forward.3} parent=0 // pred_region
    _
  $region9: #{network_coarse_simple_forward.3} parent=0 // pred_fallthru
    _
  // Predicated region
  $region10: #{network_coarse_simple_forward.3} parent=0 // pred_check
    _
  $region11: #{network_coarse_simple_forward.3} parent=0 // pred_check_branch
    %17 = sbr.rel (0) target = $region13
  $region12: #{network_coarse_simple_forward.3} parent=0 // pred_region
    _
  $region13: #{network_coarse_simple_forward.3} parent=0 // pred_fallthru
    _
  // Predicated region
  $region14: #{network_coarse_simple_forward.3} parent=0 // pred_check
    _
  $region15: #{network_coarse_simple_forward.3} parent=0 // pred_check_branch
    %19 = sbr.rel (0) target = $region17
  $region16: #{network_coarse_simple_forward.3} parent=0 // pred_region
    _
  $region17: #{network_coarse_simple_forward.3} parent=0 // pred_fallthru
    _
  // Predicated region
  $region18: #{network_coarse_simple_forward.3} parent=0 // pred_check
    _
  $region19: #{network_coarse_simple_forward.3} parent=0 // pred_check_branch
    %21 = sbr.rel (0) target = $region21
  $region20: #{network_coarse_simple_forward.3} parent=0 // pred_region
    _
  $region21: #{network_coarse_simple_forward.3} parent=0 // pred_fallthru
    _
  // Predicated region
  $region22: #{network_coarse_simple_forward.3} parent=0 // pred_check
    _
  $region23: #{network_coarse_simple_forward.3} parent=0 // pred_check_branch
    %23 = sbr.rel (0) target = $region25
  $region24: #{network_coarse_simple_forward.3} parent=0 // pred_region
    _
  $region25: #{network_coarse_simple_forward.3} parent=0 // pred_fallthru
    _
  // Predicated region
  $region26: #{network_coarse_simple_forward.3} parent=0 // pred_check
    _
  $region27: #{network_coarse_simple_forward.3} parent=0 // pred_check_branch
    %25 = sbr.rel (0) target = $region29
  $region28: #{network_coarse_simple_forward.3} parent=0 // pred_region
    _
  $region29: #{network_coarse_simple_forward.3} parent=0 // pred_fallthru
    _
  %p26 = scmp.eq.s32.totalorder 0, 0
  // Predicated region
  $region30: #{network_coarse_simple_forward.3} parent=0 // pred_check
    %p27 = pneg %p26
  $region31: #{network_coarse_simple_forward.3} parent=0 // pred_check_branch
    %29 = sbr.rel (%p27) target = $region33
  $region32: #{network_coarse_simple_forward.3} parent=0 // pred_region
    %30 = vst [vmem:[#allocation2] sm:$0xff] 0.0
    %vm31 = vcmask 588800
    %32 = vst.msk [vmem:[#allocation2 + $0x8] sm:$0xff] %vm31, 0.0
  $region33: #{network_coarse_simple_forward.3} parent=0 // pred_fallthru
    _
  %v33 = vld [vmem:[#allocation2] sm:$0xff]
  %v34 = vld [vmem:[#allocation2 + $0x8] sm:$0xff]
  %v35 = vld [vmem:[%s0] sm:$0xff]
  %v36 = vld [vmem:[%s0 + $0x8] sm:$0xff]
  %v37 = vld [vmem:[%s0 + $0x10] sm:$0xff]
  %v38 = vld [vmem:[%s0 + $0x18] sm:$0xff]
  %v39 = vld [vmem:[%s0 + $0x20] sm:$0xff]
  %v40 = vld [vmem:[%s0 + $0x28] sm:$0xff]
  %v41 = vld [vmem:[%s0 + $0x30] sm:$0xff]
  %v42 = vld [vmem:[%s0 + $0x38] sm:$0xff]
  %v43 = vld [vmem:[%s0 + $0x40] sm:$0xff]
  %v44 = vld [vmem:[%s0 + $0x48] sm:$0xff]
  %v45 = vld [vmem:[%s0 + $0x50] sm:$0xff]
  %v46 = vld [vmem:[%s0 + $0x58] sm:$0xff]
  %v47 = vld [vmem:[%s0 + $0x60] sm:$0xff]
  %v48 = vld [vmem:[%s0 + $0x68] sm:$0xff]
  %v49 = vld [vmem:[%s0 + $0x70] sm:$0xff]
  %v50 = vld [vmem:[%s0 + $0x78] sm:$0xff]
  %v51 = vld [vmem:[%s1] sm:$0xff]
  %v52 = vld [vmem:[%s1 + $0x8] sm:$0xff]
  %v53 = vld [vmem:[%s1 + $0x10] sm:$0xff]
  %v54 = vld [vmem:[%s1 + $0x18] sm:$0xff]
  %v55 = vld [vmem:[%s1 + $0x20] sm:$0xff]
  %v56 = vld [vmem:[%s1 + $0x28] sm:$0xff]
  %v57 = vld [vmem:[%s1 + $0x30] sm:$0xff]
  %v58 = vld [vmem:[%s1 + $0x38] sm:$0xff]
  %v59 = vld [vmem:[%s1 + $0x40] sm:$0xff]
  %v60 = vld [vmem:[%s1 + $0x48] sm:$0xff]
  %v61 = vld [vmem:[%s1 + $0x50] sm:$0xff]
  %v62 = vld [vmem:[%s1 + $0x58] sm:$0xff]
  %v63 = vld [vmem:[%s1 + $0x60] sm:$0xff]
  %v64 = vld [vmem:[%s1 + $0x68] sm:$0xff]
  %v65 = vld [vmem:[%s1 + $0x70] sm:$0xff]
  %v66 = vld [vmem:[%s1 + $0x78] sm:$0xff]
  %v67 = vld [vmem:[%s1 + $0x80] sm:$0xff]
  %v68 = vld [vmem:[%s1 + $0x88] sm:$0xff]
  %v69 = vld [vmem:[%s1 + $0x90] sm:$0xff]
  %v70 = vld [vmem:[%s1 + $0x98] sm:$0xff]
  %v71 = vld [vmem:[%s1 + $0xa0] sm:$0xff]
  %v72 = vld [vmem:[%s1 + $0xa8] sm:$0xff]
  %v73 = vld [vmem:[%s1 + $0xb0] sm:$0xff]
  %v74 = vld [vmem:[%s1 + $0xb8] sm:$0xff]
  %v75 = vld [vmem:[%s1 + $0xc0] sm:$0xff]
  %v76 = vld [vmem:[%s1 + $0xc8] sm:$0xff]
  %v77 = vld [vmem:[%s1 + $0xd0] sm:$0xff]
  %v78 = vld [vmem:[%s1 + $0xd8] sm:$0xff]
  %v79 = vld [vmem:[%s1 + $0xe0] sm:$0xff]
  %v80 = vld [vmem:[%s1 + $0xe8] sm:$0xff]
  %v81 = vld [vmem:[%s1 + $0xf0] sm:$0xff]
  %v82 = vld [vmem:[%s1 + $0xf8] sm:$0xff]
  %v83 = vld [vmem:[%s1 + $0x100] sm:$0xff]
  %v84 = vld [vmem:[%s1 + $0x108] sm:$0xff]
  %v85 = vld [vmem:[%s1 + $0x110] sm:$0xff]
  %v86 = vld [vmem:[%s1 + $0x118] sm:$0xff]
  %v87 = vld [vmem:[%s1 + $0x120] sm:$0xff]
  %v88 = vld [vmem:[%s1 + $0x128] sm:$0xff]
  %v89 = vld [vmem:[%s1 + $0x130] sm:$0xff]
  %v90 = vld [vmem:[%s1 + $0x138] sm:$0xff]
  %v91 = vld [vmem:[%s1 + $0x140] sm:$0xff]
  %v92 = vld [vmem:[%s1 + $0x148] sm:$0xff]
  %v93 = vld [vmem:[%s1 + $0x150] sm:$0xff]
  %v94 = vld [vmem:[%s1 + $0x158] sm:$0xff]
  %v95 = vld [vmem:[%s1 + $0x160] sm:$0xff]
  %v96 = vld [vmem:[%s1 + $0x168] sm:$0xff]
  %v97 = vld [vmem:[%s1 + $0x170] sm:$0xff]
  %v98 = vld [vmem:[%s1 + $0x178] sm:$0xff]
  %v99 = vld [vmem:[%s1 + $0x180] sm:$0xff]
  %v100 = vld [vmem:[%s1 + $0x188] sm:$0xff]
  %v101 = vld [vmem:[%s1 + $0x190] sm:$0xff]
  %v102 = vld [vmem:[%s1 + $0x198] sm:$0xff]
  %v103 = vld [vmem:[%s1 + $0x1a0] sm:$0xff]
  %v104 = vld [vmem:[%s1 + $0x1a8] sm:$0xff]
  %v105 = vld [vmem:[%s1 + $0x1b0] sm:$0xff]
  %v106 = vld [vmem:[%s1 + $0x1b8] sm:$0xff]
  %v107 = vld [vmem:[%s1 + $0x1c0] sm:$0xff]
  %v108 = vld [vmem:[%s1 + $0x1c8] sm:$0xff]
  %v109 = vld [vmem:[%s1 + $0x1d0] sm:$0xff]
  %v110 = vld [vmem:[%s1 + $0x1d8] sm:$0xff]
  %v111 = vld [vmem:[%s1 + $0x1e0] sm:$0xff]
  %v112 = vld [vmem:[%s1 + $0x1e8] sm:$0xff]
  %v113 = vld [vmem:[%s1 + $0x1f0] sm:$0xff]
  %v114 = vld [vmem:[%s1 + $0x1f8] sm:$0xff]
  %v115 = vld [vmem:[%s1 + $0x200] sm:$0xff]
  %v116 = vld [vmem:[%s1 + $0x208] sm:$0xff]
  %v117 = vld [vmem:[%s1 + $0x210] sm:$0xff]
  %v118 = vld [vmem:[%s1 + $0x218] sm:$0xff]
  %v119 = vld [vmem:[%s1 + $0x220] sm:$0xff]
  %v120 = vld [vmem:[%s1 + $0x228] sm:$0xff]
  %v121 = vld [vmem:[%s1 + $0x230] sm:$0xff]
  %v122 = vld [vmem:[%s1 + $0x238] sm:$0xff]
  %v123 = vld [vmem:[%s1 + $0x240] sm:$0xff]
  %v124 = vld [vmem:[%s1 + $0x248] sm:$0xff]
  %v125 = vld [vmem:[%s1 + $0x250] sm:$0xff]
  %v126 = vld [vmem:[%s1 + $0x258] sm:$0xff]
  %v127 = vld [vmem:[%s1 + $0x260] sm:$0xff]
  %v128 = vld [vmem:[%s1 + $0x268] sm:$0xff]
  %v129 = vld [vmem:[%s1 + $0x270] sm:$0xff]
  %v130 = vld [vmem:[%s1 + $0x278] sm:$0xff]
  %v131 = vld [vmem:[%s1 + $0x280] sm:$0xff]
  %v132 = vld [vmem:[%s1 + $0x288] sm:$0xff]
  %v133 = vld [vmem:[%s1 + $0x290] sm:$0xff]
  %v134 = vld [vmem:[%s1 + $0x298] sm:$0xff]
  %v135 = vld [vmem:[%s1 + $0x2a0] sm:$0xff]
  %v136 = vld [vmem:[%s1 + $0x2a8] sm:$0xff]
  %v137 = vld [vmem:[%s1 + $0x2b0] sm:$0xff]
  %v138 = vld [vmem:[%s1 + $0x2b8] sm:$0xff]
  %v139 = vld [vmem:[%s1 + $0x2c0] sm:$0xff]
  %v140 = vld [vmem:[%s1 + $0x2c8] sm:$0xff]
  %v141 = vld [vmem:[%s1 + $0x2d0] sm:$0xff]
  %v142 = vld [vmem:[%s1 + $0x2d8] sm:$0xff]
  %v143 = vld [vmem:[%s1 + $0x2e0] sm:$0xff]
  %v144 = vld [vmem:[%s1 + $0x2e8] sm:$0xff]
  %v145 = vld [vmem:[%s1 + $0x2f0] sm:$0xff]
  %v146 = vld [vmem:[%s1 + $0x2f8] sm:$0xff]
  %v147 = vld [vmem:[%s1 + $0x300] sm:$0xff]
  %v148 = vld [vmem:[%s1 + $0x308] sm:$0xff]
  %v149 = vld [vmem:[%s1 + $0x310] sm:$0xff]
  %v150 = vld [vmem:[%s1 + $0x318] sm:$0xff]
  %v151 = vld [vmem:[%s1 + $0x320] sm:$0xff]
  %v152 = vld [vmem:[%s1 + $0x328] sm:$0xff]
  %v153 = vld [vmem:[%s1 + $0x330] sm:$0xff]
  %v154 = vld [vmem:[%s1 + $0x338] sm:$0xff]
  %v155 = vld [vmem:[%s1 + $0x340] sm:$0xff]
  %v156 = vld [vmem:[%s1 + $0x348] sm:$0xff]
  %v157 = vld [vmem:[%s1 + $0x350] sm:$0xff]
  %v158 = vld [vmem:[%s1 + $0x358] sm:$0xff]
  %v159 = vld [vmem:[%s1 + $0x360] sm:$0xff]
  %v160 = vld [vmem:[%s1 + $0x368] sm:$0xff]
  %v161 = vld [vmem:[%s1 + $0x370] sm:$0xff]
  %v162 = vld [vmem:[%s1 + $0x378] sm:$0xff]
  %v163 = vld [vmem:[%s1 + $0x380] sm:$0xff]
  %v164 = vld [vmem:[%s1 + $0x388] sm:$0xff]
  %v165 = vld [vmem:[%s1 + $0x390] sm:$0xff]
  %v166 = vld [vmem:[%s1 + $0x398] sm:$0xff]
  %v167 = vld [vmem:[%s1 + $0x3a0] sm:$0xff]
  %v168 = vld [vmem:[%s1 + $0x3a8] sm:$0xff]
  %v169 = vld [vmem:[%s1 + $0x3b0] sm:$0xff]
  %v170 = vld [vmem:[%s1 + $0x3b8] sm:$0xff]
  %v171 = vld [vmem:[%s1 + $0x3c0] sm:$0xff]
  %v172 = vld [vmem:[%s1 + $0x3c8] sm:$0xff]
  %v173 = vld [vmem:[%s1 + $0x3d0] sm:$0xff]
  %v174 = vld [vmem:[%s1 + $0x3d8] sm:$0xff]
  %v175 = vld [vmem:[%s1 + $0x3e0] sm:$0xff]
  %v176 = vld [vmem:[%s1 + $0x3e8] sm:$0xff]
  %v177 = vld [vmem:[%s1 + $0x3f0] sm:$0xff]
  %v178 = vld [vmem:[%s1 + $0x3f8] sm:$0xff]
  %v179 = vld [vmem:[%s1 + $0x400] sm:$0xff]
  %v180 = vld [vmem:[%s1 + $0x408] sm:$0xff]
  %v181 = vld [vmem:[%s1 + $0x410] sm:$0xff]
  %v182 = vld [vmem:[%s1 + $0x418] sm:$0xff]
  %v183 = vld [vmem:[%s1 + $0x420] sm:$0xff]
  %v184 = vld [vmem:[%s1 + $0x428] sm:$0xff]
  %v185 = vld [vmem:[%s1 + $0x430] sm:$0xff]
  %v186 = vld [vmem:[%s1 + $0x438] sm:$0xff]
  %v187 = vld [vmem:[%s1 + $0x440] sm:$0xff]
  %v188 = vld [vmem:[%s1 + $0x448] sm:$0xff]
  %v189 = vld [vmem:[%s1 + $0x450] sm:$0xff]
  %v190 = vld [vmem:[%s1 + $0x458] sm:$0xff]
  %v191 = vld [vmem:[%s1 + $0x460] sm:$0xff]
  %v192 = vld [vmem:[%s1 + $0x468] sm:$0xff]
  %v193 = vld [vmem:[%s1 + $0x470] sm:$0xff]
  %v194 = vld [vmem:[%s1 + $0x478] sm:$0xff]
  %v195 = vld [vmem:[%s1 + $0x480] sm:$0xff]
  %v196 = vld [vmem:[%s1 + $0x488] sm:$0xff]
  %v197 = vld [vmem:[%s1 + $0x490] sm:$0xff]
  %v198 = vld [vmem:[%s1 + $0x498] sm:$0xff]
  %v199 = vld [vmem:[%s1 + $0x4a0] sm:$0xff]
  %v200 = vld [vmem:[%s1 + $0x4a8] sm:$0xff]
  %v201 = vld [vmem:[%s1 + $0x4b0] sm:$0xff]
  %v202 = vld [vmem:[%s1 + $0x4b8] sm:$0xff]
  %v203 = vld [vmem:[%s1 + $0x4c0] sm:$0xff]
  %v204 = vld [vmem:[%s1 + $0x4c8] sm:$0xff]
  %v205 = vld [vmem:[%s1 + $0x4d0] sm:$0xff]
  %v206 = vld [vmem:[%s1 + $0x4d8] sm:$0xff]
  %v207 = vld [vmem:[%s1 + $0x4e0] sm:$0xff]
  %v208 = vld [vmem:[%s1 + $0x4e8] sm:$0xff]
  %v209 = vld [vmem:[%s1 + $0x4f0] sm:$0xff]
  %v210 = vld [vmem:[%s1 + $0x4f8] sm:$0xff]
  %v211 = vld [vmem:[%s1 + $0x500] sm:$0xff]
  %v212 = vld [vmem:[%s1 + $0x508] sm:$0xff]
  %v213 = vld [vmem:[%s1 + $0x510] sm:$0xff]
  %v214 = vld [vmem:[%s1 + $0x518] sm:$0xff]
  %v215 = vld [vmem:[%s1 + $0x520] sm:$0xff]
  %v216 = vld [vmem:[%s1 + $0x528] sm:$0xff]
  %v217 = vld [vmem:[%s1 + $0x530] sm:$0xff]
  %v218 = vld [vmem:[%s1 + $0x538] sm:$0xff]
  %v219 = vld [vmem:[%s1 + $0x540] sm:$0xff]
  %v220 = vld [vmem:[%s1 + $0x548] sm:$0xff]
  %v221 = vld [vmem:[%s1 + $0x550] sm:$0xff]
  %v222 = vld [vmem:[%s1 + $0x558] sm:$0xff]
  %v223 = vld [vmem:[%s1 + $0x560] sm:$0xff]
  %v224 = vld [vmem:[%s1 + $0x568] sm:$0xff]
  %v225 = vld [vmem:[%s1 + $0x570] sm:$0xff]
  %v226 = vld [vmem:[%s1 + $0x578] sm:$0xff]
  %v227 = vld [vmem:[%s1 + $0x580] sm:$0xff]
  %v228 = vld [vmem:[%s1 + $0x588] sm:$0xff]
  %v229 = vld [vmem:[%s1 + $0x590] sm:$0xff]
  %v230 = vld [vmem:[%s1 + $0x598] sm:$0xff]
  %v231 = vld [vmem:[%s1 + $0x5a0] sm:$0xff]
  %v232 = vld [vmem:[%s1 + $0x5a8] sm:$0xff]
  %v233 = vld [vmem:[%s1 + $0x5b0] sm:$0xff]
  %v234 = vld [vmem:[%s1 + $0x5b8] sm:$0xff]
  %v235 = vld [vmem:[%s1 + $0x5c0] sm:$0xff]
  %v236 = vld [vmem:[%s1 + $0x5c8] sm:$0xff]
  %v237 = vld [vmem:[%s1 + $0x5d0] sm:$0xff]
  %v238 = vld [vmem:[%s1 + $0x5d8] sm:$0xff]
  %v239 = vld [vmem:[%s1 + $0x5e0] sm:$0xff]
  %v240 = vld [vmem:[%s1 + $0x5e8] sm:$0xff]
  %v241 = vld [vmem:[%s1 + $0x5f0] sm:$0xff]
  %v242 = vld [vmem:[%s1 + $0x5f8] sm:$0xff]
  %v243 = vld [vmem:[%s1 + $0x600] sm:$0xff]
  %v244 = vld [vmem:[%s1 + $0x608] sm:$0xff]
  %v245 = vld [vmem:[%s1 + $0x610] sm:$0xff]
  %v246 = vld [vmem:[%s1 + $0x618] sm:$0xff]
  %v247 = vld [vmem:[%s1 + $0x620] sm:$0xff]
  %v248 = vld [vmem:[%s1 + $0x628] sm:$0xff]
  %v249 = vld [vmem:[%s1 + $0x630] sm:$0xff]
  %v250 = vld [vmem:[%s1 + $0x638] sm:$0xff]
  %v251 = vld [vmem:[%s1 + $0x640] sm:$0xff]
  %v252 = vld [vmem:[%s1 + $0x648] sm:$0xff]
  %v253 = vld [vmem:[%s1 + $0x650] sm:$0xff]
  %v254 = vld [vmem:[%s1 + $0x658] sm:$0xff]
  %v255 = vld [vmem:[%s1 + $0x660] sm:$0xff]
  %v256 = vld [vmem:[%s1 + $0x668] sm:$0xff]
  %v257 = vld [vmem:[%s1 + $0x670] sm:$0xff]
  %v258 = vld [vmem:[%s1 + $0x678] sm:$0xff]
  %v259 = vld [vmem:[%s1 + $0x680] sm:$0xff]
  %v260 = vld [vmem:[%s1 + $0x688] sm:$0xff]
  %v261 = vld [vmem:[%s1 + $0x690] sm:$0xff]
  %v262 = vld [vmem:[%s1 + $0x698] sm:$0xff]
  %v263 = vld [vmem:[%s1 + $0x6a0] sm:$0xff]
  %v264 = vld [vmem:[%s1 + $0x6a8] sm:$0xff]
  %v265 = vld [vmem:[%s1 + $0x6b0] sm:$0xff]
  %v266 = vld [vmem:[%s1 + $0x6b8] sm:$0xff]
  %v267 = vld [vmem:[%s1 + $0x6c0] sm:$0xff]
  %v268 = vld [vmem:[%s1 + $0x6c8] sm:$0xff]
  %v269 = vld [vmem:[%s1 + $0x6d0] sm:$0xff]
  %v270 = vld [vmem:[%s1 + $0x6d8] sm:$0xff]
  %v271 = vld [vmem:[%s1 + $0x6e0] sm:$0xff]
  %v272 = vld [vmem:[%s1 + $0x6e8] sm:$0xff]
  %v273 = vld [vmem:[%s1 + $0x6f0] sm:$0xff]
  %v274 = vld [vmem:[%s1 + $0x6f8] sm:$0xff]
  %v275 = vld [vmem:[%s1 + $0x700] sm:$0xff]
  %v276 = vld [vmem:[%s1 + $0x708] sm:$0xff]
  %v277 = vld [vmem:[%s1 + $0x710] sm:$0xff]
  %v278 = vld [vmem:[%s1 + $0x718] sm:$0xff]
  %v279 = vld [vmem:[%s1 + $0x720] sm:$0xff]
  %v280 = vld [vmem:[%s1 + $0x728] sm:$0xff]
  %v281 = vld [vmem:[%s1 + $0x730] sm:$0xff]
  %v282 = vld [vmem:[%s1 + $0x738] sm:$0xff]
  %v283 = vld [vmem:[%s1 + $0x740] sm:$0xff]
  %v284 = vld [vmem:[%s1 + $0x748] sm:$0xff]
  %v285 = vld [vmem:[%s1 + $0x750] sm:$0xff]
  %v286 = vld [vmem:[%s1 + $0x758] sm:$0xff]
  %v287 = vld [vmem:[%s1 + $0x760] sm:$0xff]
  %v288 = vld [vmem:[%s1 + $0x768] sm:$0xff]
  %v289 = vld [vmem:[%s1 + $0x770] sm:$0xff]
  %v290 = vld [vmem:[%s1 + $0x778] sm:$0xff]
  %v291 = vld [vmem:[%s1 + $0x780] sm:$0xff]
  %v292 = vld [vmem:[%s1 + $0x788] sm:$0xff]
  %v293 = vld [vmem:[%s1 + $0x790] sm:$0xff]
  %v294 = vld [vmem:[%s1 + $0x798] sm:$0xff]
  %v295 = vld [vmem:[%s1 + $0x7a0] sm:$0xff]
  %v296 = vld [vmem:[%s1 + $0x7a8] sm:$0xff]
  %v297 = vld [vmem:[%s1 + $0x7b0] sm:$0xff]
  %v298 = vld [vmem:[%s1 + $0x7b8] sm:$0xff]
  %v299 = vld [vmem:[%s1 + $0x7c0] sm:$0xff]
  %v300 = vld [vmem:[%s1 + $0x7c8] sm:$0xff]
  %v301 = vld [vmem:[%s1 + $0x7d0] sm:$0xff]
  %v302 = vld [vmem:[%s1 + $0x7d8] sm:$0xff]
  %v303 = vld [vmem:[%s1 + $0x7e0] sm:$0xff]
  %v304 = vld [vmem:[%s1 + $0x7e8] sm:$0xff]
  %v305 = vld [vmem:[%s1 + $0x7f0] sm:$0xff]
  %v306 = vld [vmem:[%s1 + $0x7f8] sm:$0xff]
  %v307 = vld [vmem:[%s1 + $0x800] sm:$0xff]
  %v308 = vld [vmem:[%s1 + $0x808] sm:$0xff]
  %v309 = vld [vmem:[%s1 + $0x810] sm:$0xff]
  %v310 = vld [vmem:[%s1 + $0x818] sm:$0xff]
  %v311 = vld [vmem:[%s1 + $0x820] sm:$0xff]
  %v312 = vld [vmem:[%s1 + $0x828] sm:$0xff]
  %v313 = vld [vmem:[%s1 + $0x830] sm:$0xff]
  %v314 = vld [vmem:[%s1 + $0x838] sm:$0xff]
  %v315 = vld [vmem:[%s1 + $0x840] sm:$0xff]
  %v316 = vld [vmem:[%s1 + $0x848] sm:$0xff]
  %v317 = vld [vmem:[%s1 + $0x850] sm:$0xff]
  %v318 = vld [vmem:[%s1 + $0x858] sm:$0xff]
  %v319 = vld [vmem:[%s1 + $0x860] sm:$0xff]
  %v320 = vld [vmem:[%s1 + $0x868] sm:$0xff]
  %v321 = vld [vmem:[%s1 + $0x870] sm:$0xff]
  %v322 = vld [vmem:[%s1 + $0x878] sm:$0xff]
  %v323 = vld [vmem:[%s1 + $0x880] sm:$0xff]
  %v324 = vld [vmem:[%s1 + $0x888] sm:$0xff]
  %v325 = vld [vmem:[%s1 + $0x890] sm:$0xff]
  %v326 = vld [vmem:[%s1 + $0x898] sm:$0xff]
  %v327 = vld [vmem:[%s1 + $0x8a0] sm:$0xff]
  %v328 = vld [vmem:[%s1 + $0x8a8] sm:$0xff]
  %v329 = vld [vmem:[%s1 + $0x8b0] sm:$0xff]
  %v330 = vld [vmem:[%s1 + $0x8b8] sm:$0xff]
  %v331 = vld [vmem:[%s1 + $0x8c0] sm:$0xff]
  %v332 = vld [vmem:[%s1 + $0x8c8] sm:$0xff]
  %v333 = vld [vmem:[%s1 + $0x8d0] sm:$0xff]
  %v334 = vld [vmem:[%s1 + $0x8d8] sm:$0xff]
  %v335 = vld [vmem:[%s1 + $0x8e0] sm:$0xff]
  %v336 = vld [vmem:[%s1 + $0x8e8] sm:$0xff]
  %v337 = vld [vmem:[%s1 + $0x8f0] sm:$0xff]
  %v338 = vld [vmem:[%s1 + $0x8f8] sm:$0xff]
  %v339 = vld [vmem:[%s1 + $0x900] sm:$0xff]
  %v340 = vld [vmem:[%s1 + $0x908] sm:$0xff]
  %v341 = vld [vmem:[%s1 + $0x910] sm:$0xff]
  %v342 = vld [vmem:[%s1 + $0x918] sm:$0xff]
  %v343 = vld [vmem:[%s1 + $0x920] sm:$0xff]
  %v344 = vld [vmem:[%s1 + $0x928] sm:$0xff]
  %v345 = vld [vmem:[%s1 + $0x930] sm:$0xff]
  %v346 = vld [vmem:[%s1 + $0x938] sm:$0xff]
  %v347 = vld [vmem:[%s1 + $0x940] sm:$0xff]
  %v348 = vld [vmem:[%s1 + $0x948] sm:$0xff]
  %v349 = vld [vmem:[%s1 + $0x950] sm:$0xff]
  %v350 = vld [vmem:[%s1 + $0x958] sm:$0xff]
  %v351 = vld [vmem:[%s1 + $0x960] sm:$0xff]
  %v352 = vld [vmem:[%s1 + $0x968] sm:$0xff]
  %v353 = vld [vmem:[%s1 + $0x970] sm:$0xff]
  %v354 = vld [vmem:[%s1 + $0x978] sm:$0xff]
  %v355 = vld [vmem:[%s1 + $0x980] sm:$0xff]
  %v356 = vld [vmem:[%s1 + $0x988] sm:$0xff]
  %v357 = vld [vmem:[%s1 + $0x990] sm:$0xff]
  %v358 = vld [vmem:[%s1 + $0x998] sm:$0xff]
  %v359 = vld [vmem:[%s1 + $0x9a0] sm:$0xff]
  %v360 = vld [vmem:[%s1 + $0x9a8] sm:$0xff]
  %v361 = vld [vmem:[%s1 + $0x9b0] sm:$0xff]
  %v362 = vld [vmem:[%s1 + $0x9b8] sm:$0xff]
  %v363 = vld [vmem:[%s1 + $0x9c0] sm:$0xff]
  %v364 = vld [vmem:[%s1 + $0x9c8] sm:$0xff]
  %v365 = vld [vmem:[%s1 + $0x9d0] sm:$0xff]
  %v366 = vld [vmem:[%s1 + $0x9d8] sm:$0xff]
  %v367 = vld [vmem:[%s1 + $0x9e0] sm:$0xff]
  %v368 = vld [vmem:[%s1 + $0x9e8] sm:$0xff]
  %v369 = vld [vmem:[%s1 + $0x9f0] sm:$0xff]
  %v370 = vld [vmem:[%s1 + $0x9f8] sm:$0xff]
  %v371 = vld [vmem:[%s1 + $0xa00] sm:$0xff]
  %v372 = vld [vmem:[%s1 + $0xa08] sm:$0xff]
  %v373 = vld [vmem:[%s1 + $0xa10] sm:$0xff]
  %v374 = vld [vmem:[%s1 + $0xa18] sm:$0xff]
  %v375 = vld [vmem:[%s1 + $0xa20] sm:$0xff]
  %v376 = vld [vmem:[%s1 + $0xa28] sm:$0xff]
  %v377 = vld [vmem:[%s1 + $0xa30] sm:$0xff]
  %v378 = vld [vmem:[%s1 + $0xa38] sm:$0xff]
  %v379 = vld [vmem:[%s1 + $0xa40] sm:$0xff]
  %v380 = vld [vmem:[%s1 + $0xa48] sm:$0xff]
  %v381 = vld [vmem:[%s1 + $0xa50] sm:$0xff]
  %v382 = vld [vmem:[%s1 + $0xa58] sm:$0xff]
  %v383 = vld [vmem:[%s1 + $0xa60] sm:$0xff]
  %v384 = vld [vmem:[%s1 + $0xa68] sm:$0xff]
  %v385 = vld [vmem:[%s1 + $0xa70] sm:$0xff]
  %v386 = vld [vmem:[%s1 + $0xa78] sm:$0xff]
  %v387 = vld [vmem:[%s1 + $0xa80] sm:$0xff]
  %v388 = vld [vmem:[%s1 + $0xa88] sm:$0xff]
  %v389 = vld [vmem:[%s1 + $0xa90] sm:$0xff]
  %v390 = vld [vmem:[%s1 + $0xa98] sm:$0xff]
  %v391 = vld [vmem:[%s1 + $0xaa0] sm:$0xff]
  %v392 = vld [vmem:[%s1 + $0xaa8] sm:$0xff]
  %v393 = vld [vmem:[%s1 + $0xab0] sm:$0xff]
  %v394 = vld [vmem:[%s1 + $0xab8] sm:$0xff]
  %v395 = vld [vmem:[%s1 + $0xac0] sm:$0xff]
  %v396 = vld [vmem:[%s1 + $0xac8] sm:$0xff]
  %v397 = vld [vmem:[%s1 + $0xad0] sm:$0xff]
  %v398 = vld [vmem:[%s1 + $0xad8] sm:$0xff]
  %v399 = vld [vmem:[%s1 + $0xae0] sm:$0xff]
  %v400 = vld [vmem:[%s1 + $0xae8] sm:$0xff]
  %v401 = vld [vmem:[%s1 + $0xaf0] sm:$0xff]
  %v402 = vld [vmem:[%s1 + $0xaf8] sm:$0xff]
  %v403 = vld [vmem:[%s1 + $0xb00] sm:$0xff]
  %v404 = vld [vmem:[%s1 + $0xb08] sm:$0xff]
  %v405 = vld [vmem:[%s1 + $0xb10] sm:$0xff]
  %v406 = vld [vmem:[%s1 + $0xb18] sm:$0xff]
  %v407 = vld [vmem:[%s1 + $0xb20] sm:$0xff]
  %v408 = vld [vmem:[%s1 + $0xb28] sm:$0xff]
  %v409 = vld [vmem:[%s1 + $0xb30] sm:$0xff]
  %v410 = vld [vmem:[%s1 + $0xb38] sm:$0xff]
  %v411 = vld [vmem:[%s1 + $0xb40] sm:$0xff]
  %v412 = vld [vmem:[%s1 + $0xb48] sm:$0xff]
  %v413 = vld [vmem:[%s1 + $0xb50] sm:$0xff]
  %v414 = vld [vmem:[%s1 + $0xb58] sm:$0xff]
  %v415 = vld [vmem:[%s1 + $0xb60] sm:$0xff]
  %v416 = vld [vmem:[%s1 + $0xb68] sm:$0xff]
  %v417 = vld [vmem:[%s1 + $0xb70] sm:$0xff]
  %v418 = vld [vmem:[%s1 + $0xb78] sm:$0xff]
  %v419 = vld [vmem:[%s1 + $0xb80] sm:$0xff]
  %v420 = vld [vmem:[%s1 + $0xb88] sm:$0xff]
  %v421 = vld [vmem:[%s1 + $0xb90] sm:$0xff]
  %v422 = vld [vmem:[%s1 + $0xb98] sm:$0xff]
  %v423 = vld [vmem:[%s1 + $0xba0] sm:$0xff]
  %v424 = vld [vmem:[%s1 + $0xba8] sm:$0xff]
  %v425 = vld [vmem:[%s1 + $0xbb0] sm:$0xff]
  %v426 = vld [vmem:[%s1 + $0xbb8] sm:$0xff]
  %v427 = vld [vmem:[%s1 + $0xbc0] sm:$0xff]
  %v428 = vld [vmem:[%s1 + $0xbc8] sm:$0xff]
  %v429 = vld [vmem:[%s1 + $0xbd0] sm:$0xff]
  %v430 = vld [vmem:[%s1 + $0xbd8] sm:$0xff]
  %v431 = vld [vmem:[%s1 + $0xbe0] sm:$0xff]
  %v432 = vld [vmem:[%s1 + $0xbe8] sm:$0xff]
  %v433 = vld [vmem:[%s1 + $0xbf0] sm:$0xff]
  %v434 = vld [vmem:[%s1 + $0xbf8] sm:$0xff]
  %v435 = vld [vmem:[%s1 + $0xc00] sm:$0xff]
  %v436 = vld [vmem:[%s1 + $0xc08] sm:$0xff]
  %v437 = vld [vmem:[%s1 + $0xc10] sm:$0xff]
  %v438 = vld [vmem:[%s1 + $0xc18] sm:$0xff]
  %v439 = vld [vmem:[%s1 + $0xc20] sm:$0xff]
  %v440 = vld [vmem:[%s1 + $0xc28] sm:$0xff]
  %v441 = vld [vmem:[%s1 + $0xc30] sm:$0xff]
  %v442 = vld [vmem:[%s1 + $0xc38] sm:$0xff]
  %v443 = vld [vmem:[%s1 + $0xc40] sm:$0xff]
  %v444 = vld [vmem:[%s1 + $0xc48] sm:$0xff]
  %v445 = vld [vmem:[%s1 + $0xc50] sm:$0xff]
  %v446 = vld [vmem:[%s1 + $0xc58] sm:$0xff]
  %v447 = vld [vmem:[%s1 + $0xc60] sm:$0xff]
  %v448 = vld [vmem:[%s1 + $0xc68] sm:$0xff]
  %v449 = vld [vmem:[%s1 + $0xc70] sm:$0xff]
  %v450 = vld [vmem:[%s1 + $0xc78] sm:$0xff]
  %v451 = vld [vmem:[%s1 + $0xc80] sm:$0xff]
  %v452 = vld [vmem:[%s1 + $0xc88] sm:$0xff]
  %v453 = vld [vmem:[%s1 + $0xc90] sm:$0xff]
  %v454 = vld [vmem:[%s1 + $0xc98] sm:$0xff]
  %v455 = vld [vmem:[%s1 + $0xca0] sm:$0xff]
  %v456 = vld [vmem:[%s1 + $0xca8] sm:$0xff]
  %v457 = vld [vmem:[%s1 + $0xcb0] sm:$0xff]
  %v458 = vld [vmem:[%s1 + $0xcb8] sm:$0xff]
  %v459 = vld [vmem:[%s1 + $0xcc0] sm:$0xff]
  %v460 = vld [vmem:[%s1 + $0xcc8] sm:$0xff]
  %v461 = vld [vmem:[%s1 + $0xcd0] sm:$0xff]
  %v462 = vld [vmem:[%s1 + $0xcd8] sm:$0xff]
  %v463 = vld [vmem:[%s1 + $0xce0] sm:$0xff]
  %v464 = vld [vmem:[%s1 + $0xce8] sm:$0xff]
  %v465 = vld [vmem:[%s1 + $0xcf0] sm:$0xff]
  %v466 = vld [vmem:[%s1 + $0xcf8] sm:$0xff]
  %v467 = vld [vmem:[%s1 + $0xd00] sm:$0xff]
  %v468 = vld [vmem:[%s1 + $0xd08] sm:$0xff]
  %v469 = vld [vmem:[%s1 + $0xd10] sm:$0xff]
  %v470 = vld [vmem:[%s1 + $0xd18] sm:$0xff]
  %v471 = vld [vmem:[%s1 + $0xd20] sm:$0xff]
  %v472 = vld [vmem:[%s1 + $0xd28] sm:$0xff]
  %v473 = vld [vmem:[%s1 + $0xd30] sm:$0xff]
  %v474 = vld [vmem:[%s1 + $0xd38] sm:$0xff]
  %v475 = vld [vmem:[%s1 + $0xd40] sm:$0xff]
  %v476 = vld [vmem:[%s1 + $0xd48] sm:$0xff]
  %v477 = vld [vmem:[%s1 + $0xd50] sm:$0xff]
  %v478 = vld [vmem:[%s1 + $0xd58] sm:$0xff]
  %v479 = vld [vmem:[%s1 + $0xd60] sm:$0xff]
  %v480 = vld [vmem:[%s1 + $0xd68] sm:$0xff]
  %v481 = vld [vmem:[%s1 + $0xd70] sm:$0xff]
  %v482 = vld [vmem:[%s1 + $0xd78] sm:$0xff]
  %v483 = vld [vmem:[%s1 + $0xd80] sm:$0xff]
  %v484 = vld [vmem:[%s1 + $0xd88] sm:$0xff]
  %v485 = vld [vmem:[%s1 + $0xd90] sm:$0xff]
  %v486 = vld [vmem:[%s1 + $0xd98] sm:$0xff]
  %v487 = vld [vmem:[%s1 + $0xda0] sm:$0xff]
  %v488 = vld [vmem:[%s1 + $0xda8] sm:$0xff]
  %v489 = vld [vmem:[%s1 + $0xdb0] sm:$0xff]
  %v490 = vld [vmem:[%s1 + $0xdb8] sm:$0xff]
  %v491 = vld [vmem:[%s1 + $0xdc0] sm:$0xff]
  %v492 = vld [vmem:[%s1 + $0xdc8] sm:$0xff]
  %v493 = vld [vmem:[%s1 + $0xdd0] sm:$0xff]
  %v494 = vld [vmem:[%s1 + $0xdd8] sm:$0xff]
  %v495 = vld [vmem:[%s1 + $0xde0] sm:$0xff]
  %v496 = vld [vmem:[%s1 + $0xde8] sm:$0xff]
  %v497 = vld [vmem:[%s1 + $0xdf0] sm:$0xff]
  %v498 = vld [vmem:[%s1 + $0xdf8] sm:$0xff]
  %v499 = vld [vmem:[%s1 + $0xe00] sm:$0xff]
  %v500 = vld [vmem:[%s1 + $0xe08] sm:$0xff]
  %v501 = vld [vmem:[%s1 + $0xe10] sm:$0xff]
  %v502 = vld [vmem:[%s1 + $0xe18] sm:$0xff]
  %v503 = vld [vmem:[%s1 + $0xe20] sm:$0xff]
  %v504 = vld [vmem:[%s1 + $0xe28] sm:$0xff]
  %v505 = vld [vmem:[%s1 + $0xe30] sm:$0xff]
  %v506 = vld [vmem:[%s1 + $0xe38] sm:$0xff]
  %v507 = vld [vmem:[%s1 + $0xe40] sm:$0xff]
  %v508 = vld [vmem:[%s1 + $0xe48] sm:$0xff]
  %v509 = vld [vmem:[%s1 + $0xe50] sm:$0xff]
  %v510 = vld [vmem:[%s1 + $0xe58] sm:$0xff]
  %v511 = vld [vmem:[%s1 + $0xe60] sm:$0xff]
  %v512 = vld [vmem:[%s1 + $0xe68] sm:$0xff]
  %v513 = vld [vmem:[%s1 + $0xe70] sm:$0xff]
  %v514 = vld [vmem:[%s1 + $0xe78] sm:$0xff]
  %v515 = vld [vmem:[%s1 + $0xe80] sm:$0xff]
  %v516 = vld [vmem:[%s1 + $0xe88] sm:$0xff]
  %v517 = vld [vmem:[%s1 + $0xe90] sm:$0xff]
  %v518 = vld [vmem:[%s1 + $0xe98] sm:$0xff]
  %v519 = vld [vmem:[%s1 + $0xea0] sm:$0xff]
  %v520 = vld [vmem:[%s1 + $0xea8] sm:$0xff]
  %v521 = vld [vmem:[%s1 + $0xeb0] sm:$0xff]
  %v522 = vld [vmem:[%s1 + $0xeb8] sm:$0xff]
  %v523 = vld [vmem:[%s1 + $0xec0] sm:$0xff]
  %v524 = vld [vmem:[%s1 + $0xec8] sm:$0xff]
  %v525 = vld [vmem:[%s1 + $0xed0] sm:$0xff]
  %v526 = vld [vmem:[%s1 + $0xed8] sm:$0xff]
  %v527 = vld [vmem:[%s1 + $0xee0] sm:$0xff]
  %v528 = vld [vmem:[%s1 + $0xee8] sm:$0xff]
  %v529 = vld [vmem:[%s1 + $0xef0] sm:$0xff]
  %v530 = vld [vmem:[%s1 + $0xef8] sm:$0xff]
  %v531 = vld [vmem:[%s1 + $0xf00] sm:$0xff]
  %v532 = vld [vmem:[%s1 + $0xf08] sm:$0xff]
  %v533 = vld [vmem:[%s1 + $0xf10] sm:$0xff]
  %v534 = vld [vmem:[%s1 + $0xf18] sm:$0xff]
  %v535 = vld [vmem:[%s1 + $0xf20] sm:$0xff]
  %v536 = vld [vmem:[%s1 + $0xf28] sm:$0xff]
  %v537 = vld [vmem:[%s1 + $0xf30] sm:$0xff]
  %v538 = vld [vmem:[%s1 + $0xf38] sm:$0xff]
  %v539 = vld [vmem:[%s1 + $0xf40] sm:$0xff]
  %v540 = vld [vmem:[%s1 + $0xf48] sm:$0xff]
  %v541 = vld [vmem:[%s1 + $0xf50] sm:$0xff]
  %v542 = vld [vmem:[%s1 + $0xf58] sm:$0xff]
  %v543 = vld [vmem:[%s1 + $0xf60] sm:$0xff]
  %v544 = vld [vmem:[%s1 + $0xf68] sm:$0xff]
  %v545 = vld [vmem:[%s1 + $0xf70] sm:$0xff]
  %v546 = vld [vmem:[%s1 + $0xf78] sm:$0xff]
  %v547 = vld [vmem:[%s1 + $0xf80] sm:$0xff]
  %v548 = vld [vmem:[%s1 + $0xf88] sm:$0xff]
  %v549 = vld [vmem:[%s1 + $0xf90] sm:$0xff]
  %v550 = vld [vmem:[%s1 + $0xf98] sm:$0xff]
  %v551 = vld [vmem:[%s1 + $0xfa0] sm:$0xff]
  %v552 = vld [vmem:[%s1 + $0xfa8] sm:$0xff]
  %v553 = vld [vmem:[%s1 + $0xfb0] sm:$0xff]
  %v554 = vld [vmem:[%s1 + $0xfb8] sm:$0xff]
  %v555 = vld [vmem:[%s1 + $0xfc0] sm:$0xff]
  %v556 = vld [vmem:[%s1 + $0xfc8] sm:$0xff]
  %v557 = vld [vmem:[%s1 + $0xfd0] sm:$0xff]
  %v558 = vld [vmem:[%s1 + $0xfd8] sm:$0xff]
  %v559 = vld [vmem:[%s1 + $0xfe0] sm:$0xff]
  %v560 = vld [vmem:[%s1 + $0xfe8] sm:$0xff]
  %v561 = vld [vmem:[%s1 + $0xff0] sm:$0xff]
  %v562 = vld [vmem:[%s1 + $0xff8] sm:$0xff]
  %v579 = vunpack.c.l.b16 %v35
  %v580 = vunpack.c.h.b16 %v35
  %v581 = vunpack.c.l.b16 %v36
  %v582 = vunpack.c.h.b16 %v36
  %v583 = vunpack.c.l.b16 %v37
  %v584 = vunpack.c.h.b16 %v37
  %v585 = vunpack.c.l.b16 %v38
  %v586 = vunpack.c.h.b16 %v38
  %v587 = vunpack.c.l.b16 %v39
  %v588 = vunpack.c.h.b16 %v39
  %v589 = vunpack.c.l.b16 %v40
  %v590 = vunpack.c.h.b16 %v40
  %v591 = vunpack.c.l.b16 %v41
  %v592 = vunpack.c.h.b16 %v41
  %v593 = vunpack.c.l.b16 %v42
  %v594 = vunpack.c.h.b16 %v42
  %v595 = vunpack.c.l.b16 %v43
  %v596 = vunpack.c.h.b16 %v43
  %v597 = vunpack.c.l.b16 %v44
  %v598 = vunpack.c.h.b16 %v44
  %v599 = vunpack.c.l.b16 %v45
  %v600 = vunpack.c.h.b16 %v45
  %v601 = vunpack.c.l.b16 %v46
  %v602 = vunpack.c.h.b16 %v46
  %v603 = vunpack.c.l.b16 %v47
  %v604 = vunpack.c.h.b16 %v47
  %v605 = vunpack.c.l.b16 %v48
  %v606 = vunpack.c.h.b16 %v48
  %v607 = vunpack.c.l.b16 %v49
  %v608 = vunpack.c.h.b16 %v49
  %v609 = vunpack.c.l.b16 %v50
  %v610 = vunpack.c.h.b16 %v50
  %v611 = vpack.c.b16 %v579, %v579
  %v612 = vpack.c.b16 %v580, %v580
  %v613 = vpack.c.b16 %v581, %v581
  %v614 = vpack.c.b16 %v582, %v582
  %v615 = vpack.c.b16 %v583, %v583
  %v616 = vpack.c.b16 %v584, %v584
  %v617 = vpack.c.b16 %v585, %v585
  %v618 = vpack.c.b16 %v586, %v586
  %v619 = vpack.c.b16 %v587, %v587
  %v620 = vpack.c.b16 %v588, %v588
  %v621 = vpack.c.b16 %v589, %v589
  %v622 = vpack.c.b16 %v590, %v590
  %v623 = vpack.c.b16 %v591, %v591
  %v624 = vpack.c.b16 %v592, %v592
  %v625 = vpack.c.b16 %v593, %v593
  %v626 = vpack.c.b16 %v594, %v594
  %v627 = vpack.c.b16 %v595, %v595
  %v628 = vpack.c.b16 %v596, %v596
  %v629 = vpack.c.b16 %v597, %v597
  %v630 = vpack.c.b16 %v598, %v598
  %v631 = vpack.c.b16 %v599, %v599
  %v632 = vpack.c.b16 %v600, %v600
  %v633 = vpack.c.b16 %v601, %v601
  %v634 = vpack.c.b16 %v602, %v602
  %v635 = vpack.c.b16 %v603, %v603
  %v636 = vpack.c.b16 %v604, %v604
  %v637 = vpack.c.b16 %v605, %v605
  %v638 = vpack.c.b16 %v606, %v606
  %v639 = vpack.c.b16 %v607, %v607
  %v640 = vpack.c.b16 %v608, %v608
  %v641 = vpack.c.b16 %v609, %v609
  %v642 = vpack.c.b16 %v610, %v610
  %v1187 = vunpack.c.l.b16 %v51
  %v1188 = vunpack.c.h.b16 %v51
  %v1189 = vunpack.c.l.b16 %v52
  %v1190 = vunpack.c.h.b16 %v52
  %v1191 = vunpack.c.l.b16 %v53
  %v1192 = vunpack.c.h.b16 %v53
  %v1193 = vunpack.c.l.b16 %v54
  %v1194 = vunpack.c.h.b16 %v54
  %v1195 = vunpack.c.l.b16 %v55
  %v1196 = vunpack.c.h.b16 %v55
  %v1197 = vunpack.c.l.b16 %v56
  %v1198 = vunpack.c.h.b16 %v56
  %v1199 = vunpack.c.l.b16 %v57
  %v1200 = vunpack.c.h.b16 %v57
  %v1201 = vunpack.c.l.b16 %v58
  %v1202 = vunpack.c.h.b16 %v58
  %v1203 = vunpack.c.l.b16 %v59
  %v1204 = vunpack.c.h.b16 %v59
  %v1205 = vunpack.c.l.b16 %v60
  %v1206 = vunpack.c.h.b16 %v60
  %v1207 = vunpack.c.l.b16 %v61
  %v1208 = vunpack.c.h.b16 %v61
  %v1209 = vunpack.c.l.b16 %v62
  %v1210 = vunpack.c.h.b16 %v62
  %v1211 = vunpack.c.l.b16 %v63
  %v1212 = vunpack.c.h.b16 %v63
  %v1213 = vunpack.c.l.b16 %v64
  %v1214 = vunpack.c.h.b16 %v64
  %v1215 = vunpack.c.l.b16 %v65
  %v1216 = vunpack.c.h.b16 %v65
  %v1217 = vunpack.c.l.b16 %v66
  %v1218 = vunpack.c.h.b16 %v66
  %v1219 = vunpack.c.l.b16 %v67
  %v1220 = vunpack.c.h.b16 %v67
  %v1221 = vunpack.c.l.b16 %v68
  %v1222 = vunpack.c.h.b16 %v68
  %v1223 = vunpack.c.l.b16 %v69
  %v1224 = vunpack.c.h.b16 %v69
  %v1225 = vunpack.c.l.b16 %v70
  %v1226 = vunpack.c.h.b16 %v70
  %v1227 = vunpack.c.l.b16 %v71
  %v1228 = vunpack.c.h.b16 %v71
  %v1229 = vunpack.c.l.b16 %v72
  %v1230 = vunpack.c.h.b16 %v72
  %v1231 = vunpack.c.l.b16 %v73
  %v1232 = vunpack.c.h.b16 %v73
  %v1233 = vunpack.c.l.b16 %v74
  %v1234 = vunpack.c.h.b16 %v74
  %v1235 = vunpack.c.l.b16 %v75
  %v1236 = vunpack.c.h.b16 %v75
  %v1237 = vunpack.c.l.b16 %v76
  %v1238 = vunpack.c.h.b16 %v76
  %v1239 = vunpack.c.l.b16 %v77
  %v1240 = vunpack.c.h.b16 %v77
  %v1241 = vunpack.c.l.b16 %v78
  %v1242 = vunpack.c.h.b16 %v78
  %v1243 = vunpack.c.l.b16 %v79
  %v1244 = vunpack.c.h.b16 %v79
  %v1245 = vunpack.c.l.b16 %v80
  %v1246 = vunpack.c.h.b16 %v80
  %v1247 = vunpack.c.l.b16 %v81
  %v1248 = vunpack.c.h.b16 %v81
  %v1249 = vunpack.c.l.b16 %v82
  %v1250 = vunpack.c.h.b16 %v82
  %v1251 = vunpack.c.l.b16 %v83
  %v1252 = vunpack.c.h.b16 %v83
  %v1253 = vunpack.c.l.b16 %v84
  %v1254 = vunpack.c.h.b16 %v84
  %v1255 = vunpack.c.l.b16 %v85
  %v1256 = vunpack.c.h.b16 %v85
  %v1257 = vunpack.c.l.b16 %v86
  %v1258 = vunpack.c.h.b16 %v86
  %v1259 = vunpack.c.l.b16 %v87
  %v1260 = vunpack.c.h.b16 %v87
  %v1261 = vunpack.c.l.b16 %v88
  %v1262 = vunpack.c.h.b16 %v88
  %v1263 = vunpack.c.l.b16 %v89
  %v1264 = vunpack.c.h.b16 %v89
  %v1265 = vunpack.c.l.b16 %v90
  %v1266 = vunpack.c.h.b16 %v90
  %v1267 = vunpack.c.l.b16 %v91
  %v1268 = vunpack.c.h.b16 %v91
  %v1269 = vunpack.c.l.b16 %v92
  %v1270 = vunpack.c.h.b16 %v92
  %v1271 = vunpack.c.l.b16 %v93
  %v1272 = vunpack.c.h.b16 %v93
  %v1273 = vunpack.c.l.b16 %v94
  %v1274 = vunpack.c.h.b16 %v94
  %v1275 = vunpack.c.l.b16 %v95
  %v1276 = vunpack.c.h.b16 %v95
  %v1277 = vunpack.c.l.b16 %v96
  %v1278 = vunpack.c.h.b16 %v96
  %v1279 = vunpack.c.l.b16 %v97
  %v1280 = vunpack.c.h.b16 %v97
  %v1281 = vunpack.c.l.b16 %v98
  %v1282 = vunpack.c.h.b16 %v98
  %v1283 = vunpack.c.l.b16 %v99
  %v1284 = vunpack.c.h.b16 %v99
  %v1285 = vunpack.c.l.b16 %v100
  %v1286 = vunpack.c.h.b16 %v100
  %v1287 = vunpack.c.l.b16 %v101
  %v1288 = vunpack.c.h.b16 %v101
  %v1289 = vunpack.c.l.b16 %v102
  %v1290 = vunpack.c.h.b16 %v102
  %v1291 = vunpack.c.l.b16 %v103
  %v1292 = vunpack.c.h.b16 %v103
  %v1293 = vunpack.c.l.b16 %v104
  %v1294 = vunpack.c.h.b16 %v104
  %v1295 = vunpack.c.l.b16 %v105
  %v1296 = vunpack.c.h.b16 %v105
  %v1297 = vunpack.c.l.b16 %v106
  %v1298 = vunpack.c.h.b16 %v106
  %v1299 = vunpack.c.l.b16 %v107
  %v1300 = vunpack.c.h.b16 %v107
  %v1301 = vunpack.c.l.b16 %v108
  %v1302 = vunpack.c.h.b16 %v108
  %v1303 = vunpack.c.l.b16 %v109
  %v1304 = vunpack.c.h.b16 %v109
  %v1305 = vunpack.c.l.b16 %v110
  %v1306 = vunpack.c.h.b16 %v110
  %v1307 = vunpack.c.l.b16 %v111
  %v1308 = vunpack.c.h.b16 %v111
  %v1309 = vunpack.c.l.b16 %v112
  %v1310 = vunpack.c.h.b16 %v112
  %v1311 = vunpack.c.l.b16 %v113
  %v1312 = vunpack.c.h.b16 %v113
  %v1313 = vunpack.c.l.b16 %v114
  %v1314 = vunpack.c.h.b16 %v114
  %v1315 = vunpack.c.l.b16 %v115
  %v1316 = vunpack.c.h.b16 %v115
  %v1317 = vunpack.c.l.b16 %v116
  %v1318 = vunpack.c.h.b16 %v116
  %v1319 = vunpack.c.l.b16 %v117
  %v1320 = vunpack.c.h.b16 %v117
  %v1321 = vunpack.c.l.b16 %v118
  %v1322 = vunpack.c.h.b16 %v118
  %v1323 = vunpack.c.l.b16 %v119
  %v1324 = vunpack.c.h.b16 %v119
  %v1325 = vunpack.c.l.b16 %v120
  %v1326 = vunpack.c.h.b16 %v120
  %v1327 = vunpack.c.l.b16 %v121
  %v1328 = vunpack.c.h.b16 %v121
  %v1329 = vunpack.c.l.b16 %v122
  %v1330 = vunpack.c.h.b16 %v122
  %v1331 = vunpack.c.l.b16 %v123
  %v1332 = vunpack.c.h.b16 %v123
  %v1333 = vunpack.c.l.b16 %v124
  %v1334 = vunpack.c.h.b16 %v124
  %v1335 = vunpack.c.l.b16 %v125
  %v1336 = vunpack.c.h.b16 %v125
  %v1337 = vunpack.c.l.b16 %v126
  %v1338 = vunpack.c.h.b16 %v126
  %v1339 = vunpack.c.l.b16 %v127
  %v1340 = vunpack.c.h.b16 %v127
  %v1341 = vunpack.c.l.b16 %v128
  %v1342 = vunpack.c.h.b16 %v128
  %v1343 = vunpack.c.l.b16 %v129
  %v1344 = vunpack.c.h.b16 %v129
  %v1345 = vunpack.c.l.b16 %v130
  %v1346 = vunpack.c.h.b16 %v130
  %v1347 = vunpack.c.l.b16 %v131
  %v1348 = vunpack.c.h.b16 %v131
  %v1349 = vunpack.c.l.b16 %v132
  %v1350 = vunpack.c.h.b16 %v132
  %v1351 = vunpack.c.l.b16 %v133
  %v1352 = vunpack.c.h.b16 %v133
  %v1353 = vunpack.c.l.b16 %v134
  %v1354 = vunpack.c.h.b16 %v134
  %v1355 = vunpack.c.l.b16 %v135
  %v1356 = vunpack.c.h.b16 %v135
  %v1357 = vunpack.c.l.b16 %v136
  %v1358 = vunpack.c.h.b16 %v136
  %v1359 = vunpack.c.l.b16 %v137
  %v1360 = vunpack.c.h.b16 %v137
  %v1361 = vunpack.c.l.b16 %v138
  %v1362 = vunpack.c.h.b16 %v138
  %v1363 = vunpack.c.l.b16 %v139
  %v1364 = vunpack.c.h.b16 %v139
  %v1365 = vunpack.c.l.b16 %v140
  %v1366 = vunpack.c.h.b16 %v140
  %v1367 = vunpack.c.l.b16 %v141
  %v1368 = vunpack.c.h.b16 %v141
  %v1369 = vunpack.c.l.b16 %v142
  %v1370 = vunpack.c.h.b16 %v142
  %v1371 = vunpack.c.l.b16 %v143
  %v1372 = vunpack.c.h.b16 %v143
  %v1373 = vunpack.c.l.b16 %v144
  %v1374 = vunpack.c.h.b16 %v144
  %v1375 = vunpack.c.l.b16 %v145
  %v1376 = vunpack.c.h.b16 %v145
  %v1377 = vunpack.c.l.b16 %v146
  %v1378 = vunpack.c.h.b16 %v146
  %v1379 = vunpack.c.l.b16 %v147
  %v1380 = vunpack.c.h.b16 %v147
  %v1381 = vunpack.c.l.b16 %v148
  %v1382 = vunpack.c.h.b16 %v148
  %v1383 = vunpack.c.l.b16 %v149
  %v1384 = vunpack.c.h.b16 %v149
  %v1385 = vunpack.c.l.b16 %v150
  %v1386 = vunpack.c.h.b16 %v150
  %v1387 = vunpack.c.l.b16 %v151
  %v1388 = vunpack.c.h.b16 %v151
  %v1389 = vunpack.c.l.b16 %v152
  %v1390 = vunpack.c.h.b16 %v152
  %v1391 = vunpack.c.l.b16 %v153
  %v1392 = vunpack.c.h.b16 %v153
  %v1393 = vunpack.c.l.b16 %v154
  %v1394 = vunpack.c.h.b16 %v154
  %v1395 = vunpack.c.l.b16 %v155
  %v1396 = vunpack.c.h.b16 %v155
  %v1397 = vunpack.c.l.b16 %v156
  %v1398 = vunpack.c.h.b16 %v156
  %v1399 = vunpack.c.l.b16 %v157
  %v1400 = vunpack.c.h.b16 %v157
  %v1401 = vunpack.c.l.b16 %v158
  %v1402 = vunpack.c.h.b16 %v158
  %v1403 = vunpack.c.l.b16 %v159
  %v1404 = vunpack.c.h.b16 %v159
  %v1405 = vunpack.c.l.b16 %v160
  %v1406 = vunpack.c.h.b16 %v160
  %v1407 = vunpack.c.l.b16 %v161
  %v1408 = vunpack.c.h.b16 %v161
  %v1409 = vunpack.c.l.b16 %v162
  %v1410 = vunpack.c.h.b16 %v162
  %v1411 = vunpack.c.l.b16 %v163
  %v1412 = vunpack.c.h.b16 %v163
  %v1413 = vunpack.c.l.b16 %v164
  %v1414 = vunpack.c.h.b16 %v164
  %v1415 = vunpack.c.l.b16 %v165
  %v1416 = vunpack.c.h.b16 %v165
  %v1417 = vunpack.c.l.b16 %v166
  %v1418 = vunpack.c.h.b16 %v166
  %v1419 = vunpack.c.l.b16 %v167
  %v1420 = vunpack.c.h.b16 %v167
  %v1421 = vunpack.c.l.b16 %v168
  %v1422 = vunpack.c.h.b16 %v168
  %v1423 = vunpack.c.l.b16 %v169
  %v1424 = vunpack.c.h.b16 %v169
  %v1425 = vunpack.c.l.b16 %v170
  %v1426 = vunpack.c.h.b16 %v170
  %v1427 = vunpack.c.l.b16 %v171
  %v1428 = vunpack.c.h.b16 %v171
  %v1429 = vunpack.c.l.b16 %v172
  %v1430 = vunpack.c.h.b16 %v172
  %v1431 = vunpack.c.l.b16 %v173
  %v1432 = vunpack.c.h.b16 %v173
  %v1433 = vunpack.c.l.b16 %v174
  %v1434 = vunpack.c.h.b16 %v174
  %v1435 = vunpack.c.l.b16 %v175
  %v1436 = vunpack.c.h.b16 %v175
  %v1437 = vunpack.c.l.b16 %v176
  %v1438 = vunpack.c.h.b16 %v176
  %v1439 = vunpack.c.l.b16 %v177
  %v1440 = vunpack.c.h.b16 %v177
  %v1441 = vunpack.c.l.b16 %v178
  %v1442 = vunpack.c.h.b16 %v178
  %v1443 = vunpack.c.l.b16 %v179
  %v1444 = vunpack.c.h.b16 %v179
  %v1445 = vunpack.c.l.b16 %v180
  %v1446 = vunpack.c.h.b16 %v180
  %v1447 = vunpack.c.l.b16 %v181
  %v1448 = vunpack.c.h.b16 %v181
  %v1449 = vunpack.c.l.b16 %v182
  %v1450 = vunpack.c.h.b16 %v182
  %v1451 = vunpack.c.l.b16 %v183
  %v1452 = vunpack.c.h.b16 %v183
  %v1453 = vunpack.c.l.b16 %v184
  %v1454 = vunpack.c.h.b16 %v184
  %v1455 = vunpack.c.l.b16 %v185
  %v1456 = vunpack.c.h.b16 %v185
  %v1457 = vunpack.c.l.b16 %v186
  %v1458 = vunpack.c.h.b16 %v186
  %v1459 = vunpack.c.l.b16 %v187
  %v1460 = vunpack.c.h.b16 %v187
  %v1461 = vunpack.c.l.b16 %v188
  %v1462 = vunpack.c.h.b16 %v188
  %v1463 = vunpack.c.l.b16 %v189
  %v1464 = vunpack.c.h.b16 %v189
  %v1465 = vunpack.c.l.b16 %v190
  %v1466 = vunpack.c.h.b16 %v190
  %v1467 = vunpack.c.l.b16 %v191
  %v1468 = vunpack.c.h.b16 %v191
  %v1469 = vunpack.c.l.b16 %v192
  %v1470 = vunpack.c.h.b16 %v192
  %v1471 = vunpack.c.l.b16 %v193
  %v1472 = vunpack.c.h.b16 %v193
  %v1473 = vunpack.c.l.b16 %v194
  %v1474 = vunpack.c.h.b16 %v194
  %v1475 = vunpack.c.l.b16 %v195
  %v1476 = vunpack.c.h.b16 %v195
  %v1477 = vunpack.c.l.b16 %v196
  %v1478 = vunpack.c.h.b16 %v196
  %v1479 = vunpack.c.l.b16 %v197
  %v1480 = vunpack.c.h.b16 %v197
  %v1481 = vunpack.c.l.b16 %v198
  %v1482 = vunpack.c.h.b16 %v198
  %v1483 = vunpack.c.l.b16 %v199
  %v1484 = vunpack.c.h.b16 %v199
  %v1485 = vunpack.c.l.b16 %v200
  %v1486 = vunpack.c.h.b16 %v200
  %v1487 = vunpack.c.l.b16 %v201
  %v1488 = vunpack.c.h.b16 %v201
  %v1489 = vunpack.c.l.b16 %v202
  %v1490 = vunpack.c.h.b16 %v202
  %v1491 = vunpack.c.l.b16 %v203
  %v1492 = vunpack.c.h.b16 %v203
  %v1493 = vunpack.c.l.b16 %v204
  %v1494 = vunpack.c.h.b16 %v204
  %v1495 = vunpack.c.l.b16 %v205
  %v1496 = vunpack.c.h.b16 %v205
  %v1497 = vunpack.c.l.b16 %v206
  %v1498 = vunpack.c.h.b16 %v206
  %v1499 = vunpack.c.l.b16 %v207
  %v1500 = vunpack.c.h.b16 %v207
  %v1501 = vunpack.c.l.b16 %v208
  %v1502 = vunpack.c.h.b16 %v208
  %v1503 = vunpack.c.l.b16 %v209
  %v1504 = vunpack.c.h.b16 %v209
  %v1505 = vunpack.c.l.b16 %v210
  %v1506 = vunpack.c.h.b16 %v210
  %v1507 = vunpack.c.l.b16 %v211
  %v1508 = vunpack.c.h.b16 %v211
  %v1509 = vunpack.c.l.b16 %v212
  %v1510 = vunpack.c.h.b16 %v212
  %v1511 = vunpack.c.l.b16 %v213
  %v1512 = vunpack.c.h.b16 %v213
  %v1513 = vunpack.c.l.b16 %v214
  %v1514 = vunpack.c.h.b16 %v214
  %v1515 = vunpack.c.l.b16 %v215
  %v1516 = vunpack.c.h.b16 %v215
  %v1517 = vunpack.c.l.b16 %v216
  %v1518 = vunpack.c.h.b16 %v216
  %v1519 = vunpack.c.l.b16 %v217
  %v1520 = vunpack.c.h.b16 %v217
  %v1521 = vunpack.c.l.b16 %v218
  %v1522 = vunpack.c.h.b16 %v218
  %v1523 = vunpack.c.l.b16 %v219
  %v1524 = vunpack.c.h.b16 %v219
  %v1525 = vunpack.c.l.b16 %v220
  %v1526 = vunpack.c.h.b16 %v220
  %v1527 = vunpack.c.l.b16 %v221
  %v1528 = vunpack.c.h.b16 %v221
  %v1529 = vunpack.c.l.b16 %v222
  %v1530 = vunpack.c.h.b16 %v222
  %v1531 = vunpack.c.l.b16 %v223
  %v1532 = vunpack.c.h.b16 %v223
  %v1533 = vunpack.c.l.b16 %v224
  %v1534 = vunpack.c.h.b16 %v224
  %v1535 = vunpack.c.l.b16 %v225
  %v1536 = vunpack.c.h.b16 %v225
  %v1537 = vunpack.c.l.b16 %v226
  %v1538 = vunpack.c.h.b16 %v226
  %v1539 = vunpack.c.l.b16 %v227
  %v1540 = vunpack.c.h.b16 %v227
  %v1541 = vunpack.c.l.b16 %v228
  %v1542 = vunpack.c.h.b16 %v228
  %v1543 = vunpack.c.l.b16 %v229
  %v1544 = vunpack.c.h.b16 %v229
  %v1545 = vunpack.c.l.b16 %v230
  %v1546 = vunpack.c.h.b16 %v230
  %v1547 = vunpack.c.l.b16 %v231
  %v1548 = vunpack.c.h.b16 %v231
  %v1549 = vunpack.c.l.b16 %v232
  %v1550 = vunpack.c.h.b16 %v232
  %v1551 = vunpack.c.l.b16 %v233
  %v1552 = vunpack.c.h.b16 %v233
  %v1553 = vunpack.c.l.b16 %v234
  %v1554 = vunpack.c.h.b16 %v234
  %v1555 = vunpack.c.l.b16 %v235
  %v1556 = vunpack.c.h.b16 %v235
  %v1557 = vunpack.c.l.b16 %v236
  %v1558 = vunpack.c.h.b16 %v236
  %v1559 = vunpack.c.l.b16 %v237
  %v1560 = vunpack.c.h.b16 %v237
  %v1561 = vunpack.c.l.b16 %v238
  %v1562 = vunpack.c.h.b16 %v238
  %v1563 = vunpack.c.l.b16 %v239
  %v1564 = vunpack.c.h.b16 %v239
  %v1565 = vunpack.c.l.b16 %v240
  %v1566 = vunpack.c.h.b16 %v240
  %v1567 = vunpack.c.l.b16 %v241
  %v1568 = vunpack.c.h.b16 %v241
  %v1569 = vunpack.c.l.b16 %v242
  %v1570 = vunpack.c.h.b16 %v242
  %v1571 = vunpack.c.l.b16 %v243
  %v1572 = vunpack.c.h.b16 %v243
  %v1573 = vunpack.c.l.b16 %v244
  %v1574 = vunpack.c.h.b16 %v244
  %v1575 = vunpack.c.l.b16 %v245
  %v1576 = vunpack.c.h.b16 %v245
  %v1577 = vunpack.c.l.b16 %v246
  %v1578 = vunpack.c.h.b16 %v246
  %v1579 = vunpack.c.l.b16 %v247
  %v1580 = vunpack.c.h.b16 %v247
  %v1581 = vunpack.c.l.b16 %v248
  %v1582 = vunpack.c.h.b16 %v248
  %v1583 = vunpack.c.l.b16 %v249
  %v1584 = vunpack.c.h.b16 %v249
  %v1585 = vunpack.c.l.b16 %v250
  %v1586 = vunpack.c.h.b16 %v250
  %v1587 = vunpack.c.l.b16 %v251
  %v1588 = vunpack.c.h.b16 %v251
  %v1589 = vunpack.c.l.b16 %v252
  %v1590 = vunpack.c.h.b16 %v252
  %v1591 = vunpack.c.l.b16 %v253
  %v1592 = vunpack.c.h.b16 %v253
  %v1593 = vunpack.c.l.b16 %v254
  %v1594 = vunpack.c.h.b16 %v254
  %v1595 = vunpack.c.l.b16 %v255
  %v1596 = vunpack.c.h.b16 %v255
  %v1597 = vunpack.c.l.b16 %v256
  %v1598 = vunpack.c.h.b16 %v256
  %v1599 = vunpack.c.l.b16 %v257
  %v1600 = vunpack.c.h.b16 %v257
  %v1601 = vunpack.c.l.b16 %v258
  %v1602 = vunpack.c.h.b16 %v258
  %v1603 = vunpack.c.l.b16 %v259
  %v1604 = vunpack.c.h.b16 %v259
  %v1605 = vunpack.c.l.b16 %v260
  %v1606 = vunpack.c.h.b16 %v260
  %v1607 = vunpack.c.l.b16 %v261
  %v1608 = vunpack.c.h.b16 %v261
  %v1609 = vunpack.c.l.b16 %v262
  %v1610 = vunpack.c.h.b16 %v262
  %v1611 = vunpack.c.l.b16 %v263
  %v1612 = vunpack.c.h.b16 %v263
  %v1613 = vunpack.c.l.b16 %v264
  %v1614 = vunpack.c.h.b16 %v264
  %v1615 = vunpack.c.l.b16 %v265
  %v1616 = vunpack.c.h.b16 %v265
  %v1617 = vunpack.c.l.b16 %v266
  %v1618 = vunpack.c.h.b16 %v266
  %v1619 = vunpack.c.l.b16 %v267
  %v1620 = vunpack.c.h.b16 %v267
  %v1621 = vunpack.c.l.b16 %v268
  %v1622 = vunpack.c.h.b16 %v268
  %v1623 = vunpack.c.l.b16 %v269
  %v1624 = vunpack.c.h.b16 %v269
  %v1625 = vunpack.c.l.b16 %v270
  %v1626 = vunpack.c.h.b16 %v270
  %v1627 = vunpack.c.l.b16 %v271
  %v1628 = vunpack.c.h.b16 %v271
  %v1629 = vunpack.c.l.b16 %v272
  %v1630 = vunpack.c.h.b16 %v272
  %v1631 = vunpack.c.l.b16 %v273
  %v1632 = vunpack.c.h.b16 %v273
  %v1633 = vunpack.c.l.b16 %v274
  %v1634 = vunpack.c.h.b16 %v274
  %v1635 = vunpack.c.l.b16 %v275
  %v1636 = vunpack.c.h.b16 %v275
  %v1637 = vunpack.c.l.b16 %v276
  %v1638 = vunpack.c.h.b16 %v276
  %v1639 = vunpack.c.l.b16 %v277
  %v1640 = vunpack.c.h.b16 %v277
  %v1641 = vunpack.c.l.b16 %v278
  %v1642 = vunpack.c.h.b16 %v278
  %v1643 = vunpack.c.l.b16 %v279
  %v1644 = vunpack.c.h.b16 %v279
  %v1645 = vunpack.c.l.b16 %v280
  %v1646 = vunpack.c.h.b16 %v280
  %v1647 = vunpack.c.l.b16 %v281
  %v1648 = vunpack.c.h.b16 %v281
  %v1649 = vunpack.c.l.b16 %v282
  %v1650 = vunpack.c.h.b16 %v282
  %v1651 = vunpack.c.l.b16 %v283
  %v1652 = vunpack.c.h.b16 %v283
  %v1653 = vunpack.c.l.b16 %v284
  %v1654 = vunpack.c.h.b16 %v284
  %v1655 = vunpack.c.l.b16 %v285
  %v1656 = vunpack.c.h.b16 %v285
  %v1657 = vunpack.c.l.b16 %v286
  %v1658 = vunpack.c.h.b16 %v286
  %v1659 = vunpack.c.l.b16 %v287
  %v1660 = vunpack.c.h.b16 %v287
  %v1661 = vunpack.c.l.b16 %v288
  %v1662 = vunpack.c.h.b16 %v288
  %v1663 = vunpack.c.l.b16 %v289
  %v1664 = vunpack.c.h.b16 %v289
  %v1665 = vunpack.c.l.b16 %v290
  %v1666 = vunpack.c.h.b16 %v290
  %v1667 = vunpack.c.l.b16 %v291
  %v1668 = vunpack.c.h.b16 %v291
  %v1669 = vunpack.c.l.b16 %v292
  %v1670 = vunpack.c.h.b16 %v292
  %v1671 = vunpack.c.l.b16 %v293
  %v1672 = vunpack.c.h.b16 %v293
  %v1673 = vunpack.c.l.b16 %v294
  %v1674 = vunpack.c.h.b16 %v294
  %v1675 = vunpack.c.l.b16 %v295
  %v1676 = vunpack.c.h.b16 %v295
  %v1677 = vunpack.c.l.b16 %v296
  %v1678 = vunpack.c.h.b16 %v296
  %v1679 = vunpack.c.l.b16 %v297
  %v1680 = vunpack.c.h.b16 %v297
  %v1681 = vunpack.c.l.b16 %v298
  %v1682 = vunpack.c.h.b16 %v298
  %v1683 = vunpack.c.l.b16 %v299
  %v1684 = vunpack.c.h.b16 %v299
  %v1685 = vunpack.c.l.b16 %v300
  %v1686 = vunpack.c.h.b16 %v300
  %v1687 = vunpack.c.l.b16 %v301
  %v1688 = vunpack.c.h.b16 %v301
  %v1689 = vunpack.c.l.b16 %v302
  %v1690 = vunpack.c.h.b16 %v302
  %v1691 = vunpack.c.l.b16 %v303
  %v1692 = vunpack.c.h.b16 %v303
  %v1693 = vunpack.c.l.b16 %v304
  %v1694 = vunpack.c.h.b16 %v304
  %v1695 = vunpack.c.l.b16 %v305
  %v1696 = vunpack.c.h.b16 %v305
  %v1697 = vunpack.c.l.b16 %v306
  %v1698 = vunpack.c.h.b16 %v306
  %v1699 = vunpack.c.l.b16 %v307
  %v1700 = vunpack.c.h.b16 %v307
  %v1701 = vunpack.c.l.b16 %v308
  %v1702 = vunpack.c.h.b16 %v308
  %v1703 = vunpack.c.l.b16 %v309
  %v1704 = vunpack.c.h.b16 %v309
  %v1705 = vunpack.c.l.b16 %v310
  %v1706 = vunpack.c.h.b16 %v310
  %v1707 = vunpack.c.l.b16 %v311
  %v1708 = vunpack.c.h.b16 %v311
  %v1709 = vunpack.c.l.b16 %v312
  %v1710 = vunpack.c.h.b16 %v312
  %v1711 = vunpack.c.l.b16 %v313
  %v1712 = vunpack.c.h.b16 %v313
  %v1713 = vunpack.c.l.b16 %v314
  %v1714 = vunpack.c.h.b16 %v314
  %v1715 = vunpack.c.l.b16 %v315
  %v1716 = vunpack.c.h.b16 %v315
  %v1717 = vunpack.c.l.b16 %v316
  %v1718 = vunpack.c.h.b16 %v316
  %v1719 = vunpack.c.l.b16 %v317
  %v1720 = vunpack.c.h.b16 %v317
  %v1721 = vunpack.c.l.b16 %v318
  %v1722 = vunpack.c.h.b16 %v318
  %v1723 = vunpack.c.l.b16 %v319
  %v1724 = vunpack.c.h.b16 %v319
  %v1725 = vunpack.c.l.b16 %v320
  %v1726 = vunpack.c.h.b16 %v320
  %v1727 = vunpack.c.l.b16 %v321
  %v1728 = vunpack.c.h.b16 %v321
  %v1729 = vunpack.c.l.b16 %v322
  %v1730 = vunpack.c.h.b16 %v322
  %v1731 = vunpack.c.l.b16 %v323
  %v1732 = vunpack.c.h.b16 %v323
  %v1733 = vunpack.c.l.b16 %v324
  %v1734 = vunpack.c.h.b16 %v324
  %v1735 = vunpack.c.l.b16 %v325
  %v1736 = vunpack.c.h.b16 %v325
  %v1737 = vunpack.c.l.b16 %v326
  %v1738 = vunpack.c.h.b16 %v326
  %v1739 = vunpack.c.l.b16 %v327
  %v1740 = vunpack.c.h.b16 %v327
  %v1741 = vunpack.c.l.b16 %v328
  %v1742 = vunpack.c.h.b16 %v328
  %v1743 = vunpack.c.l.b16 %v329
  %v1744 = vunpack.c.h.b16 %v329
  %v1745 = vunpack.c.l.b16 %v330
  %v1746 = vunpack.c.h.b16 %v330
  %v1747 = vunpack.c.l.b16 %v331
  %v1748 = vunpack.c.h.b16 %v331
  %v1749 = vunpack.c.l.b16 %v332
  %v1750 = vunpack.c.h.b16 %v332
  %v1751 = vunpack.c.l.b16 %v333
  %v1752 = vunpack.c.h.b16 %v333
  %v1753 = vunpack.c.l.b16 %v334
  %v1754 = vunpack.c.h.b16 %v334
  %v1755 = vunpack.c.l.b16 %v335
  %v1756 = vunpack.c.h.b16 %v335
  %v1757 = vunpack.c.l.b16 %v336
  %v1758 = vunpack.c.h.b16 %v336
  %v1759 = vunpack.c.l.b16 %v337
  %v1760 = vunpack.c.h.b16 %v337
  %v1761 = vunpack.c.l.b16 %v338
  %v1762 = vunpack.c.h.b16 %v338
  %v1763 = vunpack.c.l.b16 %v339
  %v1764 = vunpack.c.h.b16 %v339
  %v1765 = vunpack.c.l.b16 %v340
  %v1766 = vunpack.c.h.b16 %v340
  %v1767 = vunpack.c.l.b16 %v341
  %v1768 = vunpack.c.h.b16 %v341
  %v1769 = vunpack.c.l.b16 %v342
  %v1770 = vunpack.c.h.b16 %v342
  %v1771 = vunpack.c.l.b16 %v343
  %v1772 = vunpack.c.h.b16 %v343
  %v1773 = vunpack.c.l.b16 %v344
  %v1774 = vunpack.c.h.b16 %v344
  %v1775 = vunpack.c.l.b16 %v345
  %v1776 = vunpack.c.h.b16 %v345
  %v1777 = vunpack.c.l.b16 %v346
  %v1778 = vunpack.c.h.b16 %v346
  %v1779 = vunpack.c.l.b16 %v347
  %v1780 = vunpack.c.h.b16 %v347
  %v1781 = vunpack.c.l.b16 %v348
  %v1782 = vunpack.c.h.b16 %v348
  %v1783 = vunpack.c.l.b16 %v349
  %v1784 = vunpack.c.h.b16 %v349
  %v1785 = vunpack.c.l.b16 %v350
  %v1786 = vunpack.c.h.b16 %v350
  %v1787 = vunpack.c.l.b16 %v351
  %v1788 = vunpack.c.h.b16 %v351
  %v1789 = vunpack.c.l.b16 %v352
  %v1790 = vunpack.c.h.b16 %v352
  %v1791 = vunpack.c.l.b16 %v353
  %v1792 = vunpack.c.h.b16 %v353
  %v1793 = vunpack.c.l.b16 %v354
  %v1794 = vunpack.c.h.b16 %v354
  %v1795 = vunpack.c.l.b16 %v355
  %v1796 = vunpack.c.h.b16 %v355
  %v1797 = vunpack.c.l.b16 %v356
  %v1798 = vunpack.c.h.b16 %v356
  %v1799 = vunpack.c.l.b16 %v357
  %v1800 = vunpack.c.h.b16 %v357
  %v1801 = vunpack.c.l.b16 %v358
  %v1802 = vunpack.c.h.b16 %v358
  %v1803 = vunpack.c.l.b16 %v359
  %v1804 = vunpack.c.h.b16 %v359
  %v1805 = vunpack.c.l.b16 %v360
  %v1806 = vunpack.c.h.b16 %v360
  %v1807 = vunpack.c.l.b16 %v361
  %v1808 = vunpack.c.h.b16 %v361
  %v1809 = vunpack.c.l.b16 %v362
  %v1810 = vunpack.c.h.b16 %v362
  %v1811 = vunpack.c.l.b16 %v363
  %v1812 = vunpack.c.h.b16 %v363
  %v1813 = vunpack.c.l.b16 %v364
  %v1814 = vunpack.c.h.b16 %v364
  %v1815 = vunpack.c.l.b16 %v365
  %v1816 = vunpack.c.h.b16 %v365
  %v1817 = vunpack.c.l.b16 %v366
  %v1818 = vunpack.c.h.b16 %v366
  %v1819 = vunpack.c.l.b16 %v367
  %v1820 = vunpack.c.h.b16 %v367
  %v1821 = vunpack.c.l.b16 %v368
  %v1822 = vunpack.c.h.b16 %v368
  %v1823 = vunpack.c.l.b16 %v369
  %v1824 = vunpack.c.h.b16 %v369
  %v1825 = vunpack.c.l.b16 %v370
  %v1826 = vunpack.c.h.b16 %v370
  %v1827 = vunpack.c.l.b16 %v371
  %v1828 = vunpack.c.h.b16 %v371
  %v1829 = vunpack.c.l.b16 %v372
  %v1830 = vunpack.c.h.b16 %v372
  %v1831 = vunpack.c.l.b16 %v373
  %v1832 = vunpack.c.h.b16 %v373
  %v1833 = vunpack.c.l.b16 %v374
  %v1834 = vunpack.c.h.b16 %v374
  %v1835 = vunpack.c.l.b16 %v375
  %v1836 = vunpack.c.h.b16 %v375
  %v1837 = vunpack.c.l.b16 %v376
  %v1838 = vunpack.c.h.b16 %v376
  %v1839 = vunpack.c.l.b16 %v377
  %v1840 = vunpack.c.h.b16 %v377
  %v1841 = vunpack.c.l.b16 %v378
  %v1842 = vunpack.c.h.b16 %v378
  %v1843 = vunpack.c.l.b16 %v379
  %v1844 = vunpack.c.h.b16 %v379
  %v1845 = vunpack.c.l.b16 %v380
  %v1846 = vunpack.c.h.b16 %v380
  %v1847 = vunpack.c.l.b16 %v381
  %v1848 = vunpack.c.h.b16 %v381
  %v1849 = vunpack.c.l.b16 %v382
  %v1850 = vunpack.c.h.b16 %v382
  %v1851 = vunpack.c.l.b16 %v383
  %v1852 = vunpack.c.h.b16 %v383
  %v1853 = vunpack.c.l.b16 %v384
  %v1854 = vunpack.c.h.b16 %v384
  %v1855 = vunpack.c.l.b16 %v385
  %v1856 = vunpack.c.h.b16 %v385
  %v1857 = vunpack.c.l.b16 %v386
  %v1858 = vunpack.c.h.b16 %v386
  %v1859 = vunpack.c.l.b16 %v387
  %v1860 = vunpack.c.h.b16 %v387
  %v1861 = vunpack.c.l.b16 %v388
  %v1862 = vunpack.c.h.b16 %v388
  %v1863 = vunpack.c.l.b16 %v389
  %v1864 = vunpack.c.h.b16 %v389
  %v1865 = vunpack.c.l.b16 %v390
  %v1866 = vunpack.c.h.b16 %v390
  %v1867 = vunpack.c.l.b16 %v391
  %v1868 = vunpack.c.h.b16 %v391
  %v1869 = vunpack.c.l.b16 %v392
  %v1870 = vunpack.c.h.b16 %v392
  %v1871 = vunpack.c.l.b16 %v393
  %v1872 = vunpack.c.h.b16 %v393
  %v1873 = vunpack.c.l.b16 %v394
  %v1874 = vunpack.c.h.b16 %v394
  %v1875 = vunpack.c.l.b16 %v395
  %v1876 = vunpack.c.h.b16 %v395
  %v1877 = vunpack.c.l.b16 %v396
  %v1878 = vunpack.c.h.b16 %v396
  %v1879 = vunpack.c.l.b16 %v397
  %v1880 = vunpack.c.h.b16 %v397
  %v1881 = vunpack.c.l.b16 %v398
  %v1882 = vunpack.c.h.b16 %v398
  %v1883 = vunpack.c.l.b16 %v399
  %v1884 = vunpack.c.h.b16 %v399
  %v1885 = vunpack.c.l.b16 %v400
  %v1886 = vunpack.c.h.b16 %v400
  %v1887 = vunpack.c.l.b16 %v401
  %v1888 = vunpack.c.h.b16 %v401
  %v1889 = vunpack.c.l.b16 %v402
  %v1890 = vunpack.c.h.b16 %v402
  %v1891 = vunpack.c.l.b16 %v403
  %v1892 = vunpack.c.h.b16 %v403
  %v1893 = vunpack.c.l.b16 %v404
  %v1894 = vunpack.c.h.b16 %v404
  %v1895 = vunpack.c.l.b16 %v405
  %v1896 = vunpack.c.h.b16 %v405
  %v1897 = vunpack.c.l.b16 %v406
  %v1898 = vunpack.c.h.b16 %v406
  %v1899 = vunpack.c.l.b16 %v407
  %v1900 = vunpack.c.h.b16 %v407
  %v1901 = vunpack.c.l.b16 %v408
  %v1902 = vunpack.c.h.b16 %v408
  %v1903 = vunpack.c.l.b16 %v409
  %v1904 = vunpack.c.h.b16 %v409
  %v1905 = vunpack.c.l.b16 %v410
  %v1906 = vunpack.c.h.b16 %v410
  %v1907 = vunpack.c.l.b16 %v411
  %v1908 = vunpack.c.h.b16 %v411
  %v1909 = vunpack.c.l.b16 %v412
  %v1910 = vunpack.c.h.b16 %v412
  %v1911 = vunpack.c.l.b16 %v413
  %v1912 = vunpack.c.h.b16 %v413
  %v1913 = vunpack.c.l.b16 %v414
  %v1914 = vunpack.c.h.b16 %v414
  %v1915 = vunpack.c.l.b16 %v415
  %v1916 = vunpack.c.h.b16 %v415
  %v1917 = vunpack.c.l.b16 %v416
  %v1918 = vunpack.c.h.b16 %v416
  %v1919 = vunpack.c.l.b16 %v417
  %v1920 = vunpack.c.h.b16 %v417
  %v1921 = vunpack.c.l.b16 %v418
  %v1922 = vunpack.c.h.b16 %v418
  %v1923 = vunpack.c.l.b16 %v419
  %v1924 = vunpack.c.h.b16 %v419
  %v1925 = vunpack.c.l.b16 %v420
  %v1926 = vunpack.c.h.b16 %v420
  %v1927 = vunpack.c.l.b16 %v421
  %v1928 = vunpack.c.h.b16 %v421
  %v1929 = vunpack.c.l.b16 %v422
  %v1930 = vunpack.c.h.b16 %v422
  %v1931 = vunpack.c.l.b16 %v423
  %v1932 = vunpack.c.h.b16 %v423
  %v1933 = vunpack.c.l.b16 %v424
  %v1934 = vunpack.c.h.b16 %v424
  %v1935 = vunpack.c.l.b16 %v425
  %v1936 = vunpack.c.h.b16 %v425
  %v1937 = vunpack.c.l.b16 %v426
  %v1938 = vunpack.c.h.b16 %v426
  %v1939 = vunpack.c.l.b16 %v427
  %v1940 = vunpack.c.h.b16 %v427
  %v1941 = vunpack.c.l.b16 %v428
  %v1942 = vunpack.c.h.b16 %v428
  %v1943 = vunpack.c.l.b16 %v429
  %v1944 = vunpack.c.h.b16 %v429
  %v1945 = vunpack.c.l.b16 %v430
  %v1946 = vunpack.c.h.b16 %v430
  %v1947 = vunpack.c.l.b16 %v431
  %v1948 = vunpack.c.h.b16 %v431
  %v1949 = vunpack.c.l.b16 %v432
  %v1950 = vunpack.c.h.b16 %v432
  %v1951 = vunpack.c.l.b16 %v433
  %v1952 = vunpack.c.h.b16 %v433
  %v1953 = vunpack.c.l.b16 %v434
  %v1954 = vunpack.c.h.b16 %v434
  %v1955 = vunpack.c.l.b16 %v435
  %v1956 = vunpack.c.h.b16 %v435
  %v1957 = vunpack.c.l.b16 %v436
  %v1958 = vunpack.c.h.b16 %v436
  %v1959 = vunpack.c.l.b16 %v437
  %v1960 = vunpack.c.h.b16 %v437
  %v1961 = vunpack.c.l.b16 %v438
  %v1962 = vunpack.c.h.b16 %v438
  %v1963 = vunpack.c.l.b16 %v439
  %v1964 = vunpack.c.h.b16 %v439
  %v1965 = vunpack.c.l.b16 %v440
  %v1966 = vunpack.c.h.b16 %v440
  %v1967 = vunpack.c.l.b16 %v441
  %v1968 = vunpack.c.h.b16 %v441
  %v1969 = vunpack.c.l.b16 %v442
  %v1970 = vunpack.c.h.b16 %v442
  %v1971 = vunpack.c.l.b16 %v443
  %v1972 = vunpack.c.h.b16 %v443
  %v1973 = vunpack.c.l.b16 %v444
  %v1974 = vunpack.c.h.b16 %v444
  %v1975 = vunpack.c.l.b16 %v445
  %v1976 = vunpack.c.h.b16 %v445
  %v1977 = vunpack.c.l.b16 %v446
  %v1978 = vunpack.c.h.b16 %v446
  %v1979 = vunpack.c.l.b16 %v447
  %v1980 = vunpack.c.h.b16 %v447
  %v1981 = vunpack.c.l.b16 %v448
  %v1982 = vunpack.c.h.b16 %v448
  %v1983 = vunpack.c.l.b16 %v449
  %v1984 = vunpack.c.h.b16 %v449
  %v1985 = vunpack.c.l.b16 %v450
  %v1986 = vunpack.c.h.b16 %v450
  %v1987 = vunpack.c.l.b16 %v451
  %v1988 = vunpack.c.h.b16 %v451
  %v1989 = vunpack.c.l.b16 %v452
  %v1990 = vunpack.c.h.b16 %v452
  %v1991 = vunpack.c.l.b16 %v453
  %v1992 = vunpack.c.h.b16 %v453
  %v1993 = vunpack.c.l.b16 %v454
  %v1994 = vunpack.c.h.b16 %v454
  %v1995 = vunpack.c.l.b16 %v455
  %v1996 = vunpack.c.h.b16 %v455
  %v1997 = vunpack.c.l.b16 %v456
  %v1998 = vunpack.c.h.b16 %v456
  %v1999 = vunpack.c.l.b16 %v457
  %v2000 = vunpack.c.h.b16 %v457
  %v2001 = vunpack.c.l.b16 %v458
  %v2002 = vunpack.c.h.b16 %v458
  %v2003 = vunpack.c.l.b16 %v459
  %v2004 = vunpack.c.h.b16 %v459
  %v2005 = vunpack.c.l.b16 %v460
  %v2006 = vunpack.c.h.b16 %v460
  %v2007 = vunpack.c.l.b16 %v461
  %v2008 = vunpack.c.h.b16 %v461
  %v2009 = vunpack.c.l.b16 %v462
  %v2010 = vunpack.c.h.b16 %v462
  %v2011 = vunpack.c.l.b16 %v463
  %v2012 = vunpack.c.h.b16 %v463
  %v2013 = vunpack.c.l.b16 %v464
  %v2014 = vunpack.c.h.b16 %v464
  %v2015 = vunpack.c.l.b16 %v465
  %v2016 = vunpack.c.h.b16 %v465
  %v2017 = vunpack.c.l.b16 %v466
  %v2018 = vunpack.c.h.b16 %v466
  %v2019 = vunpack.c.l.b16 %v467
  %v2020 = vunpack.c.h.b16 %v467
  %v2021 = vunpack.c.l.b16 %v468
  %v2022 = vunpack.c.h.b16 %v468
  %v2023 = vunpack.c.l.b16 %v469
  %v2024 = vunpack.c.h.b16 %v469
  %v2025 = vunpack.c.l.b16 %v470
  %v2026 = vunpack.c.h.b16 %v470
  %v2027 = vunpack.c.l.b16 %v471
  %v2028 = vunpack.c.h.b16 %v471
  %v2029 = vunpack.c.l.b16 %v472
  %v2030 = vunpack.c.h.b16 %v472
  %v2031 = vunpack.c.l.b16 %v473
  %v2032 = vunpack.c.h.b16 %v473
  %v2033 = vunpack.c.l.b16 %v474
  %v2034 = vunpack.c.h.b16 %v474
  %v2035 = vunpack.c.l.b16 %v475
  %v2036 = vunpack.c.h.b16 %v475
  %v2037 = vunpack.c.l.b16 %v476
  %v2038 = vunpack.c.h.b16 %v476
  %v2039 = vunpack.c.l.b16 %v477
  %v2040 = vunpack.c.h.b16 %v477
  %v2041 = vunpack.c.l.b16 %v478
  %v2042 = vunpack.c.h.b16 %v478
  %v2043 = vunpack.c.l.b16 %v479
  %v2044 = vunpack.c.h.b16 %v479
  %v2045 = vunpack.c.l.b16 %v480
  %v2046 = vunpack.c.h.b16 %v480
  %v2047 = vunpack.c.l.b16 %v481
  %v2048 = vunpack.c.h.b16 %v481
  %v2049 = vunpack.c.l.b16 %v482
  %v2050 = vunpack.c.h.b16 %v482
  %v2051 = vunpack.c.l.b16 %v483
  %v2052 = vunpack.c.h.b16 %v483
  %v2053 = vunpack.c.l.b16 %v484
  %v2054 = vunpack.c.h.b16 %v484
  %v2055 = vunpack.c.l.b16 %v485
  %v2056 = vunpack.c.h.b16 %v485
  %v2057 = vunpack.c.l.b16 %v486
  %v2058 = vunpack.c.h.b16 %v486
  %v2059 = vunpack.c.l.b16 %v487
  %v2060 = vunpack.c.h.b16 %v487
  %v2061 = vunpack.c.l.b16 %v488
  %v2062 = vunpack.c.h.b16 %v488
  %v2063 = vunpack.c.l.b16 %v489
  %v2064 = vunpack.c.h.b16 %v489
  %v2065 = vunpack.c.l.b16 %v490
  %v2066 = vunpack.c.h.b16 %v490
  %v2067 = vunpack.c.l.b16 %v491
  %v2068 = vunpack.c.h.b16 %v491
  %v2069 = vunpack.c.l.b16 %v492
  %v2070 = vunpack.c.h.b16 %v492
  %v2071 = vunpack.c.l.b16 %v493
  %v2072 = vunpack.c.h.b16 %v493
  %v2073 = vunpack.c.l.b16 %v494
  %v2074 = vunpack.c.h.b16 %v494
  %v2075 = vunpack.c.l.b16 %v495
  %v2076 = vunpack.c.h.b16 %v495
  %v2077 = vunpack.c.l.b16 %v496
  %v2078 = vunpack.c.h.b16 %v496
  %v2079 = vunpack.c.l.b16 %v497
  %v2080 = vunpack.c.h.b16 %v497
  %v2081 = vunpack.c.l.b16 %v498
  %v2082 = vunpack.c.h.b16 %v498
  %v2083 = vunpack.c.l.b16 %v499
  %v2084 = vunpack.c.h.b16 %v499
  %v2085 = vunpack.c.l.b16 %v500
  %v2086 = vunpack.c.h.b16 %v500
  %v2087 = vunpack.c.l.b16 %v501
  %v2088 = vunpack.c.h.b16 %v501
  %v2089 = vunpack.c.l.b16 %v502
  %v2090 = vunpack.c.h.b16 %v502
  %v2091 = vunpack.c.l.b16 %v503
  %v2092 = vunpack.c.h.b16 %v503
  %v2093 = vunpack.c.l.b16 %v504
  %v2094 = vunpack.c.h.b16 %v504
  %v2095 = vunpack.c.l.b16 %v505
  %v2096 = vunpack.c.h.b16 %v505
  %v2097 = vunpack.c.l.b16 %v506
  %v2098 = vunpack.c.h.b16 %v506
  %v2099 = vunpack.c.l.b16 %v507
  %v2100 = vunpack.c.h.b16 %v507
  %v2101 = vunpack.c.l.b16 %v508
  %v2102 = vunpack.c.h.b16 %v508
  %v2103 = vunpack.c.l.b16 %v509
  %v2104 = vunpack.c.h.b16 %v509
  %v2105 = vunpack.c.l.b16 %v510
  %v2106 = vunpack.c.h.b16 %v510
  %v2107 = vunpack.c.l.b16 %v511
  %v2108 = vunpack.c.h.b16 %v511
  %v2109 = vunpack.c.l.b16 %v512
  %v2110 = vunpack.c.h.b16 %v512
  %v2111 = vunpack.c.l.b16 %v513
  %v2112 = vunpack.c.h.b16 %v513
  %v2113 = vunpack.c.l.b16 %v514
  %v2114 = vunpack.c.h.b16 %v514
  %v2115 = vunpack.c.l.b16 %v515
  %v2116 = vunpack.c.h.b16 %v515
  %v2117 = vunpack.c.l.b16 %v516
  %v2118 = vunpack.c.h.b16 %v516
  %v2119 = vunpack.c.l.b16 %v517
  %v2120 = vunpack.c.h.b16 %v517
  %v2121 = vunpack.c.l.b16 %v518
  %v2122 = vunpack.c.h.b16 %v518
  %v2123 = vunpack.c.l.b16 %v519
  %v2124 = vunpack.c.h.b16 %v519
  %v2125 = vunpack.c.l.b16 %v520
  %v2126 = vunpack.c.h.b16 %v520
  %v2127 = vunpack.c.l.b16 %v521
  %v2128 = vunpack.c.h.b16 %v521
  %v2129 = vunpack.c.l.b16 %v522
  %v2130 = vunpack.c.h.b16 %v522
  %v2131 = vunpack.c.l.b16 %v523
  %v2132 = vunpack.c.h.b16 %v523
  %v2133 = vunpack.c.l.b16 %v524
  %v2134 = vunpack.c.h.b16 %v524
  %v2135 = vunpack.c.l.b16 %v525
  %v2136 = vunpack.c.h.b16 %v525
  %v2137 = vunpack.c.l.b16 %v526
  %v2138 = vunpack.c.h.b16 %v526
  %v2139 = vunpack.c.l.b16 %v527
  %v2140 = vunpack.c.h.b16 %v527
  %v2141 = vunpack.c.l.b16 %v528
  %v2142 = vunpack.c.h.b16 %v528
  %v2143 = vunpack.c.l.b16 %v529
  %v2144 = vunpack.c.h.b16 %v529
  %v2145 = vunpack.c.l.b16 %v530
  %v2146 = vunpack.c.h.b16 %v530
  %v2147 = vunpack.c.l.b16 %v531
  %v2148 = vunpack.c.h.b16 %v531
  %v2149 = vunpack.c.l.b16 %v532
  %v2150 = vunpack.c.h.b16 %v532
  %v2151 = vunpack.c.l.b16 %v533
  %v2152 = vunpack.c.h.b16 %v533
  %v2153 = vunpack.c.l.b16 %v534
  %v2154 = vunpack.c.h.b16 %v534
  %v2155 = vunpack.c.l.b16 %v535
  %v2156 = vunpack.c.h.b16 %v535
  %v2157 = vunpack.c.l.b16 %v536
  %v2158 = vunpack.c.h.b16 %v536
  %v2159 = vunpack.c.l.b16 %v537
  %v2160 = vunpack.c.h.b16 %v537
  %v2161 = vunpack.c.l.b16 %v538
  %v2162 = vunpack.c.h.b16 %v538
  %v2163 = vunpack.c.l.b16 %v539
  %v2164 = vunpack.c.h.b16 %v539
  %v2165 = vunpack.c.l.b16 %v540
  %v2166 = vunpack.c.h.b16 %v540
  %v2167 = vunpack.c.l.b16 %v541
  %v2168 = vunpack.c.h.b16 %v541
  %v2169 = vunpack.c.l.b16 %v542
  %v2170 = vunpack.c.h.b16 %v542
  %v2171 = vunpack.c.l.b16 %v543
  %v2172 = vunpack.c.h.b16 %v543
  %v2173 = vunpack.c.l.b16 %v544
  %v2174 = vunpack.c.h.b16 %v544
  %v2175 = vunpack.c.l.b16 %v545
  %v2176 = vunpack.c.h.b16 %v545
  %v2177 = vunpack.c.l.b16 %v546
  %v2178 = vunpack.c.h.b16 %v546
  %v2179 = vunpack.c.l.b16 %v547
  %v2180 = vunpack.c.h.b16 %v547
  %v2181 = vunpack.c.l.b16 %v548
  %v2182 = vunpack.c.h.b16 %v548
  %v2183 = vunpack.c.l.b16 %v549
  %v2184 = vunpack.c.h.b16 %v549
  %v2185 = vunpack.c.l.b16 %v550
  %v2186 = vunpack.c.h.b16 %v550
  %v2187 = vunpack.c.l.b16 %v551
  %v2188 = vunpack.c.h.b16 %v551
  %v2189 = vunpack.c.l.b16 %v552
  %v2190 = vunpack.c.h.b16 %v552
  %v2191 = vunpack.c.l.b16 %v553
  %v2192 = vunpack.c.h.b16 %v553
  %v2193 = vunpack.c.l.b16 %v554
  %v2194 = vunpack.c.h.b16 %v554
  %v2195 = vunpack.c.l.b16 %v555
  %v2196 = vunpack.c.h.b16 %v555
  %v2197 = vunpack.c.l.b16 %v556
  %v2198 = vunpack.c.h.b16 %v556
  %v2199 = vunpack.c.l.b16 %v557
  %v2200 = vunpack.c.h.b16 %v557
  %v2201 = vunpack.c.l.b16 %v558
  %v2202 = vunpack.c.h.b16 %v558
  %v2203 = vunpack.c.l.b16 %v559
  %v2204 = vunpack.c.h.b16 %v559
  %v2205 = vunpack.c.l.b16 %v560
  %v2206 = vunpack.c.h.b16 %v560
  %v2207 = vunpack.c.l.b16 %v561
  %v2208 = vunpack.c.h.b16 %v561
  %v2209 = vunpack.c.l.b16 %v562
  %v2210 = vunpack.c.h.b16 %v562
  %v2211 = vpack.c.b16 %v1189, %v1187
  %v2212 = vpack.c.b16 %v1190, %v1188
  %v2213 = vpack.c.b16 %v1193, %v1191
  %v2214 = vpack.c.b16 %v1194, %v1192
  %v2215 = vpack.c.b16 %v1197, %v1195
  %v2216 = vpack.c.b16 %v1198, %v1196
  %v2217 = vpack.c.b16 %v1201, %v1199
  %v2218 = vpack.c.b16 %v1202, %v1200
  %v2219 = vpack.c.b16 %v1205, %v1203
  %v2220 = vpack.c.b16 %v1206, %v1204
  %v2221 = vpack.c.b16 %v1209, %v1207
  %v2222 = vpack.c.b16 %v1210, %v1208
  %v2223 = vpack.c.b16 %v1213, %v1211
  %v2224 = vpack.c.b16 %v1214, %v1212
  %v2225 = vpack.c.b16 %v1217, %v1215
  %v2226 = vpack.c.b16 %v1218, %v1216
  %v2227 = vpack.c.b16 %v1221, %v1219
  %v2228 = vpack.c.b16 %v1222, %v1220
  %v2229 = vpack.c.b16 %v1225, %v1223
  %v2230 = vpack.c.b16 %v1226, %v1224
  %v2231 = vpack.c.b16 %v1229, %v1227
  %v2232 = vpack.c.b16 %v1230, %v1228
  %v2233 = vpack.c.b16 %v1233, %v1231
  %v2234 = vpack.c.b16 %v1234, %v1232
  %v2235 = vpack.c.b16 %v1237, %v1235
  %v2236 = vpack.c.b16 %v1238, %v1236
  %v2237 = vpack.c.b16 %v1241, %v1239
  %v2238 = vpack.c.b16 %v1242, %v1240
  %v2239 = vpack.c.b16 %v1245, %v1243
  %v2240 = vpack.c.b16 %v1246, %v1244
  %v2241 = vpack.c.b16 %v1249, %v1247
  %v2242 = vpack.c.b16 %v1250, %v1248
  %v2243 = vpack.c.b16 %v1253, %v1251
  %v2244 = vpack.c.b16 %v1254, %v1252
  %v2245 = vpack.c.b16 %v1257, %v1255
  %v2246 = vpack.c.b16 %v1258, %v1256
  %v2247 = vpack.c.b16 %v1261, %v1259
  %v2248 = vpack.c.b16 %v1262, %v1260
  %v2249 = vpack.c.b16 %v1265, %v1263
  %v2250 = vpack.c.b16 %v1266, %v1264
  %v2251 = vpack.c.b16 %v1269, %v1267
  %v2252 = vpack.c.b16 %v1270, %v1268
  %v2253 = vpack.c.b16 %v1273, %v1271
  %v2254 = vpack.c.b16 %v1274, %v1272
  %v2255 = vpack.c.b16 %v1277, %v1275
  %v2256 = vpack.c.b16 %v1278, %v1276
  %v2257 = vpack.c.b16 %v1281, %v1279
  %v2258 = vpack.c.b16 %v1282, %v1280
  %v2259 = vpack.c.b16 %v1285, %v1283
  %v2260 = vpack.c.b16 %v1286, %v1284
  %v2261 = vpack.c.b16 %v1289, %v1287
  %v2262 = vpack.c.b16 %v1290, %v1288
  %v2263 = vpack.c.b16 %v1293, %v1291
  %v2264 = vpack.c.b16 %v1294, %v1292
  %v2265 = vpack.c.b16 %v1297, %v1295
  %v2266 = vpack.c.b16 %v1298, %v1296
  %v2267 = vpack.c.b16 %v1301, %v1299
  %v2268 = vpack.c.b16 %v1302, %v1300
  %v2269 = vpack.c.b16 %v1305, %v1303
  %v2270 = vpack.c.b16 %v1306, %v1304
  %v2271 = vpack.c.b16 %v1309, %v1307
  %v2272 = vpack.c.b16 %v1310, %v1308
  %v2273 = vpack.c.b16 %v1313, %v1311
  %v2274 = vpack.c.b16 %v1314, %v1312
  %v2275 = vpack.c.b16 %v1317, %v1315
  %v2276 = vpack.c.b16 %v1318, %v1316
  %v2277 = vpack.c.b16 %v1321, %v1319
  %v2278 = vpack.c.b16 %v1322, %v1320
  %v2279 = vpack.c.b16 %v1325, %v1323
  %v2280 = vpack.c.b16 %v1326, %v1324
  %v2281 = vpack.c.b16 %v1329, %v1327
  %v2282 = vpack.c.b16 %v1330, %v1328
  %v2283 = vpack.c.b16 %v1333, %v1331
  %v2284 = vpack.c.b16 %v1334, %v1332
  %v2285 = vpack.c.b16 %v1337, %v1335
  %v2286 = vpack.c.b16 %v1338, %v1336
  %v2287 = vpack.c.b16 %v1341, %v1339
  %v2288 = vpack.c.b16 %v1342, %v1340
  %v2289 = vpack.c.b16 %v1345, %v1343
  %v2290 = vpack.c.b16 %v1346, %v1344
  %v2291 = vpack.c.b16 %v1349, %v1347
  %v2292 = vpack.c.b16 %v1350, %v1348
  %v2293 = vpack.c.b16 %v1353, %v1351
  %v2294 = vpack.c.b16 %v1354, %v1352
  %v2295 = vpack.c.b16 %v1357, %v1355
  %v2296 = vpack.c.b16 %v1358, %v1356
  %v2297 = vpack.c.b16 %v1361, %v1359
  %v2298 = vpack.c.b16 %v1362, %v1360
  %v2299 = vpack.c.b16 %v1365, %v1363
  %v2300 = vpack.c.b16 %v1366, %v1364
  %v2301 = vpack.c.b16 %v1369, %v1367
  %v2302 = vpack.c.b16 %v1370, %v1368
  %v2303 = vpack.c.b16 %v1373, %v1371
  %v2304 = vpack.c.b16 %v1374, %v1372
  %v2305 = vpack.c.b16 %v1377, %v1375
  %v2306 = vpack.c.b16 %v1378, %v1376
  %v2307 = vpack.c.b16 %v1381, %v1379
  %v2308 = vpack.c.b16 %v1382, %v1380
  %v2309 = vpack.c.b16 %v1385, %v1383
  %v2310 = vpack.c.b16 %v1386, %v1384
  %v2311 = vpack.c.b16 %v1389, %v1387
  %v2312 = vpack.c.b16 %v1390, %v1388
  %v2313 = vpack.c.b16 %v1393, %v1391
  %v2314 = vpack.c.b16 %v1394, %v1392
  %v2315 = vpack.c.b16 %v1397, %v1395
  %v2316 = vpack.c.b16 %v1398, %v1396
  %v2317 = vpack.c.b16 %v1401, %v1399
  %v2318 = vpack.c.b16 %v1402, %v1400
  %v2319 = vpack.c.b16 %v1405, %v1403
  %v2320 = vpack.c.b16 %v1406, %v1404
  %v2321 = vpack.c.b16 %v1409, %v1407
  %v2322 = vpack.c.b16 %v1410, %v1408
  %v2323 = vpack.c.b16 %v1413, %v1411
  %v2324 = vpack.c.b16 %v1414, %v1412
  %v2325 = vpack.c.b16 %v1417, %v1415
  %v2326 = vpack.c.b16 %v1418, %v1416
  %v2327 = vpack.c.b16 %v1421, %v1419
  %v2328 = vpack.c.b16 %v1422, %v1420
  %v2329 = vpack.c.b16 %v1425, %v1423
  %v2330 = vpack.c.b16 %v1426, %v1424
  %v2331 = vpack.c.b16 %v1429, %v1427
  %v2332 = vpack.c.b16 %v1430, %v1428
  %v2333 = vpack.c.b16 %v1433, %v1431
  %v2334 = vpack.c.b16 %v1434, %v1432
  %v2335 = vpack.c.b16 %v1437, %v1435
  %v2336 = vpack.c.b16 %v1438, %v1436
  %v2337 = vpack.c.b16 %v1441, %v1439
  %v2338 = vpack.c.b16 %v1442, %v1440
  %v2339 = vpack.c.b16 %v1445, %v1443
  %v2340 = vpack.c.b16 %v1446, %v1444
  %v2341 = vpack.c.b16 %v1449, %v1447
  %v2342 = vpack.c.b16 %v1450, %v1448
  %v2343 = vpack.c.b16 %v1453, %v1451
  %v2344 = vpack.c.b16 %v1454, %v1452
  %v2345 = vpack.c.b16 %v1457, %v1455
  %v2346 = vpack.c.b16 %v1458, %v1456
  %v2347 = vpack.c.b16 %v1461, %v1459
  %v2348 = vpack.c.b16 %v1462, %v1460
  %v2349 = vpack.c.b16 %v1465, %v1463
  %v2350 = vpack.c.b16 %v1466, %v1464
  %v2351 = vpack.c.b16 %v1469, %v1467
  %v2352 = vpack.c.b16 %v1470, %v1468
  %v2353 = vpack.c.b16 %v1473, %v1471
  %v2354 = vpack.c.b16 %v1474, %v1472
  %v2355 = vpack.c.b16 %v1477, %v1475
  %v2356 = vpack.c.b16 %v1478, %v1476
  %v2357 = vpack.c.b16 %v1481, %v1479
  %v2358 = vpack.c.b16 %v1482, %v1480
  %v2359 = vpack.c.b16 %v1485, %v1483
  %v2360 = vpack.c.b16 %v1486, %v1484
  %v2361 = vpack.c.b16 %v1489, %v1487
  %v2362 = vpack.c.b16 %v1490, %v1488
  %v2363 = vpack.c.b16 %v1493, %v1491
  %v2364 = vpack.c.b16 %v1494, %v1492
  %v2365 = vpack.c.b16 %v1497, %v1495
  %v2366 = vpack.c.b16 %v1498, %v1496
  %v2367 = vpack.c.b16 %v1501, %v1499
  %v2368 = vpack.c.b16 %v1502, %v1500
  %v2369 = vpack.c.b16 %v1505, %v1503
  %v2370 = vpack.c.b16 %v1506, %v1504
  %v2371 = vpack.c.b16 %v1509, %v1507
  %v2372 = vpack.c.b16 %v1510, %v1508
  %v2373 = vpack.c.b16 %v1513, %v1511
  %v2374 = vpack.c.b16 %v1514, %v1512
  %v2375 = vpack.c.b16 %v1517, %v1515
  %v2376 = vpack.c.b16 %v1518, %v1516
  %v2377 = vpack.c.b16 %v1521, %v1519
  %v2378 = vpack.c.b16 %v1522, %v1520
  %v2379 = vpack.c.b16 %v1525, %v1523
  %v2380 = vpack.c.b16 %v1526, %v1524
  %v2381 = vpack.c.b16 %v1529, %v1527
  %v2382 = vpack.c.b16 %v1530, %v1528
  %v2383 = vpack.c.b16 %v1533, %v1531
  %v2384 = vpack.c.b16 %v1534, %v1532
  %v2385 = vpack.c.b16 %v1537, %v1535
  %v2386 = vpack.c.b16 %v1538, %v1536
  %v2387 = vpack.c.b16 %v1541, %v1539
  %v2388 = vpack.c.b16 %v1542, %v1540
  %v2389 = vpack.c.b16 %v1545, %v1543
  %v2390 = vpack.c.b16 %v1546, %v1544
  %v2391 = vpack.c.b16 %v1549, %v1547
  %v2392 = vpack.c.b16 %v1550, %v1548
  %v2393 = vpack.c.b16 %v1553, %v1551
  %v2394 = vpack.c.b16 %v1554, %v1552
  %v2395 = vpack.c.b16 %v1557, %v1555
  %v2396 = vpack.c.b16 %v1558, %v1556
  %v2397 = vpack.c.b16 %v1561, %v1559
  %v2398 = vpack.c.b16 %v1562, %v1560
  %v2399 = vpack.c.b16 %v1565, %v1563
  %v2400 = vpack.c.b16 %v1566, %v1564
  %v2401 = vpack.c.b16 %v1569, %v1567
  %v2402 = vpack.c.b16 %v1570, %v1568
  %v2403 = vpack.c.b16 %v1573, %v1571
  %v2404 = vpack.c.b16 %v1574, %v1572
  %v2405 = vpack.c.b16 %v1577, %v1575
  %v2406 = vpack.c.b16 %v1578, %v1576
  %v2407 = vpack.c.b16 %v1581, %v1579
  %v2408 = vpack.c.b16 %v1582, %v1580
  %v2409 = vpack.c.b16 %v1585, %v1583
  %v2410 = vpack.c.b16 %v1586, %v1584
  %v2411 = vpack.c.b16 %v1589, %v1587
  %v2412 = vpack.c.b16 %v1590, %v1588
  %v2413 = vpack.c.b16 %v1593, %v1591
  %v2414 = vpack.c.b16 %v1594, %v1592
  %v2415 = vpack.c.b16 %v1597, %v1595
  %v2416 = vpack.c.b16 %v1598, %v1596
  %v2417 = vpack.c.b16 %v1601, %v1599
  %v2418 = vpack.c.b16 %v1602, %v1600
  %v2419 = vpack.c.b16 %v1605, %v1603
  %v2420 = vpack.c.b16 %v1606, %v1604
  %v2421 = vpack.c.b16 %v1609, %v1607
  %v2422 = vpack.c.b16 %v1610, %v1608
  %v2423 = vpack.c.b16 %v1613, %v1611
  %v2424 = vpack.c.b16 %v1614, %v1612
  %v2425 = vpack.c.b16 %v1617, %v1615
  %v2426 = vpack.c.b16 %v1618, %v1616
  %v2427 = vpack.c.b16 %v1621, %v1619
  %v2428 = vpack.c.b16 %v1622, %v1620
  %v2429 = vpack.c.b16 %v1625, %v1623
  %v2430 = vpack.c.b16 %v1626, %v1624
  %v2431 = vpack.c.b16 %v1629, %v1627
  %v2432 = vpack.c.b16 %v1630, %v1628
  %v2433 = vpack.c.b16 %v1633, %v1631
  %v2434 = vpack.c.b16 %v1634, %v1632
  %v2435 = vpack.c.b16 %v1637, %v1635
  %v2436 = vpack.c.b16 %v1638, %v1636
  %v2437 = vpack.c.b16 %v1641, %v1639
  %v2438 = vpack.c.b16 %v1642, %v1640
  %v2439 = vpack.c.b16 %v1645, %v1643
  %v2440 = vpack.c.b16 %v1646, %v1644
  %v2441 = vpack.c.b16 %v1649, %v1647
  %v2442 = vpack.c.b16 %v1650, %v1648
  %v2443 = vpack.c.b16 %v1653, %v1651
  %v2444 = vpack.c.b16 %v1654, %v1652
  %v2445 = vpack.c.b16 %v1657, %v1655
  %v2446 = vpack.c.b16 %v1658, %v1656
  %v2447 = vpack.c.b16 %v1661, %v1659
  %v2448 = vpack.c.b16 %v1662, %v1660
  %v2449 = vpack.c.b16 %v1665, %v1663
  %v2450 = vpack.c.b16 %v1666, %v1664
  %v2451 = vpack.c.b16 %v1669, %v1667
  %v2452 = vpack.c.b16 %v1670, %v1668
  %v2453 = vpack.c.b16 %v1673, %v1671
  %v2454 = vpack.c.b16 %v1674, %v1672
  %v2455 = vpack.c.b16 %v1677, %v1675
  %v2456 = vpack.c.b16 %v1678, %v1676
  %v2457 = vpack.c.b16 %v1681, %v1679
  %v2458 = vpack.c.b16 %v1682, %v1680
  %v2459 = vpack.c.b16 %v1685, %v1683
  %v2460 = vpack.c.b16 %v1686, %v1684
  %v2461 = vpack.c.b16 %v1689, %v1687
  %v2462 = vpack.c.b16 %v1690, %v1688
  %v2463 = vpack.c.b16 %v1693, %v1691
  %v2464 = vpack.c.b16 %v1694, %v1692
  %v2465 = vpack.c.b16 %v1697, %v1695
  %v2466 = vpack.c.b16 %v1698, %v1696
  %v2467 = vpack.c.b16 %v1701, %v1699
  %v2468 = vpack.c.b16 %v1702, %v1700
  %v2469 = vpack.c.b16 %v1705, %v1703
  %v2470 = vpack.c.b16 %v1706, %v1704
  %v2471 = vpack.c.b16 %v1709, %v1707
  %v2472 = vpack.c.b16 %v1710, %v1708
  %v2473 = vpack.c.b16 %v1713, %v1711
  %v2474 = vpack.c.b16 %v1714, %v1712
  %v2475 = vpack.c.b16 %v1717, %v1715
  %v2476 = vpack.c.b16 %v1718, %v1716
  %v2477 = vpack.c.b16 %v1721, %v1719
  %v2478 = vpack.c.b16 %v1722, %v1720
  %v2479 = vpack.c.b16 %v1725, %v1723
  %v2480 = vpack.c.b16 %v1726, %v1724
  %v2481 = vpack.c.b16 %v1729, %v1727
  %v2482 = vpack.c.b16 %v1730, %v1728
  %v2483 = vpack.c.b16 %v1733, %v1731
  %v2484 = vpack.c.b16 %v1734, %v1732
  %v2485 = vpack.c.b16 %v1737, %v1735
  %v2486 = vpack.c.b16 %v1738, %v1736
  %v2487 = vpack.c.b16 %v1741, %v1739
  %v2488 = vpack.c.b16 %v1742, %v1740
  %v2489 = vpack.c.b16 %v1745, %v1743
  %v2490 = vpack.c.b16 %v1746, %v1744
  %v2491 = vpack.c.b16 %v1749, %v1747
  %v2492 = vpack.c.b16 %v1750, %v1748
  %v2493 = vpack.c.b16 %v1753, %v1751
  %v2494 = vpack.c.b16 %v1754, %v1752
  %v2495 = vpack.c.b16 %v1757, %v1755
  %v2496 = vpack.c.b16 %v1758, %v1756
  %v2497 = vpack.c.b16 %v1761, %v1759
  %v2498 = vpack.c.b16 %v1762, %v1760
  %v2499 = vpack.c.b16 %v1765, %v1763
  %v2500 = vpack.c.b16 %v1766, %v1764
  %v2501 = vpack.c.b16 %v1769, %v1767
  %v2502 = vpack.c.b16 %v1770, %v1768
  %v2503 = vpack.c.b16 %v1773, %v1771
  %v2504 = vpack.c.b16 %v1774, %v1772
  %v2505 = vpack.c.b16 %v1777, %v1775
  %v2506 = vpack.c.b16 %v1778, %v1776
  %v2507 = vpack.c.b16 %v1781, %v1779
  %v2508 = vpack.c.b16 %v1782, %v1780
  %v2509 = vpack.c.b16 %v1785, %v1783
  %v2510 = vpack.c.b16 %v1786, %v1784
  %v2511 = vpack.c.b16 %v1789, %v1787
  %v2512 = vpack.c.b16 %v1790, %v1788
  %v2513 = vpack.c.b16 %v1793, %v1791
  %v2514 = vpack.c.b16 %v1794, %v1792
  %v2515 = vpack.c.b16 %v1797, %v1795
  %v2516 = vpack.c.b16 %v1798, %v1796
  %v2517 = vpack.c.b16 %v1801, %v1799
  %v2518 = vpack.c.b16 %v1802, %v1800
  %v2519 = vpack.c.b16 %v1805, %v1803
  %v2520 = vpack.c.b16 %v1806, %v1804
  %v2521 = vpack.c.b16 %v1809, %v1807
  %v2522 = vpack.c.b16 %v1810, %v1808
  %v2523 = vpack.c.b16 %v1813, %v1811
  %v2524 = vpack.c.b16 %v1814, %v1812
  %v2525 = vpack.c.b16 %v1817, %v1815
  %v2526 = vpack.c.b16 %v1818, %v1816
  %v2527 = vpack.c.b16 %v1821, %v1819
  %v2528 = vpack.c.b16 %v1822, %v1820
  %v2529 = vpack.c.b16 %v1825, %v1823
  %v2530 = vpack.c.b16 %v1826, %v1824
  %v2531 = vpack.c.b16 %v1829, %v1827
  %v2532 = vpack.c.b16 %v1830, %v1828
  %v2533 = vpack.c.b16 %v1833, %v1831
  %v2534 = vpack.c.b16 %v1834, %v1832
  %v2535 = vpack.c.b16 %v1837, %v1835
  %v2536 = vpack.c.b16 %v1838, %v1836
  %v2537 = vpack.c.b16 %v1841, %v1839
  %v2538 = vpack.c.b16 %v1842, %v1840
  %v2539 = vpack.c.b16 %v1845, %v1843
  %v2540 = vpack.c.b16 %v1846, %v1844
  %v2541 = vpack.c.b16 %v1849, %v1847
  %v2542 = vpack.c.b16 %v1850, %v1848
  %v2543 = vpack.c.b16 %v1853, %v1851
  %v2544 = vpack.c.b16 %v1854, %v1852
  %v2545 = vpack.c.b16 %v1857, %v1855
  %v2546 = vpack.c.b16 %v1858, %v1856
  %v2547 = vpack.c.b16 %v1861, %v1859
  %v2548 = vpack.c.b16 %v1862, %v1860
  %v2549 = vpack.c.b16 %v1865, %v1863
  %v2550 = vpack.c.b16 %v1866, %v1864
  %v2551 = vpack.c.b16 %v1869, %v1867
  %v2552 = vpack.c.b16 %v1870, %v1868
  %v2553 = vpack.c.b16 %v1873, %v1871
  %v2554 = vpack.c.b16 %v1874, %v1872
  %v2555 = vpack.c.b16 %v1877, %v1875
  %v2556 = vpack.c.b16 %v1878, %v1876
  %v2557 = vpack.c.b16 %v1881, %v1879
  %v2558 = vpack.c.b16 %v1882, %v1880
  %v2559 = vpack.c.b16 %v1885, %v1883
  %v2560 = vpack.c.b16 %v1886, %v1884
  %v2561 = vpack.c.b16 %v1889, %v1887
  %v2562 = vpack.c.b16 %v1890, %v1888
  %v2563 = vpack.c.b16 %v1893, %v1891
  %v2564 = vpack.c.b16 %v1894, %v1892
  %v2565 = vpack.c.b16 %v1897, %v1895
  %v2566 = vpack.c.b16 %v1898, %v1896
  %v2567 = vpack.c.b16 %v1901, %v1899
  %v2568 = vpack.c.b16 %v1902, %v1900
  %v2569 = vpack.c.b16 %v1905, %v1903
  %v2570 = vpack.c.b16 %v1906, %v1904
  %v2571 = vpack.c.b16 %v1909, %v1907
  %v2572 = vpack.c.b16 %v1910, %v1908
  %v2573 = vpack.c.b16 %v1913, %v1911
  %v2574 = vpack.c.b16 %v1914, %v1912
  %v2575 = vpack.c.b16 %v1917, %v1915
  %v2576 = vpack.c.b16 %v1918, %v1916
  %v2577 = vpack.c.b16 %v1921, %v1919
  %v2578 = vpack.c.b16 %v1922, %v1920
  %v2579 = vpack.c.b16 %v1925, %v1923
  %v2580 = vpack.c.b16 %v1926, %v1924
  %v2581 = vpack.c.b16 %v1929, %v1927
  %v2582 = vpack.c.b16 %v1930, %v1928
  %v2583 = vpack.c.b16 %v1933, %v1931
  %v2584 = vpack.c.b16 %v1934, %v1932
  %v2585 = vpack.c.b16 %v1937, %v1935
  %v2586 = vpack.c.b16 %v1938, %v1936
  %v2587 = vpack.c.b16 %v1941, %v1939
  %v2588 = vpack.c.b16 %v1942, %v1940
  %v2589 = vpack.c.b16 %v1945, %v1943
  %v2590 = vpack.c.b16 %v1946, %v1944
  %v2591 = vpack.c.b16 %v1949, %v1947
  %v2592 = vpack.c.b16 %v1950, %v1948
  %v2593 = vpack.c.b16 %v1953, %v1951
  %v2594 = vpack.c.b16 %v1954, %v1952
  %v2595 = vpack.c.b16 %v1957, %v1955
  %v2596 = vpack.c.b16 %v1958, %v1956
  %v2597 = vpack.c.b16 %v1961, %v1959
  %v2598 = vpack.c.b16 %v1962, %v1960
  %v2599 = vpack.c.b16 %v1965, %v1963
  %v2600 = vpack.c.b16 %v1966, %v1964
  %v2601 = vpack.c.b16 %v1969, %v1967
  %v2602 = vpack.c.b16 %v1970, %v1968
  %v2603 = vpack.c.b16 %v1973, %v1971
  %v2604 = vpack.c.b16 %v1974, %v1972
  %v2605 = vpack.c.b16 %v1977, %v1975
  %v2606 = vpack.c.b16 %v1978, %v1976
  %v2607 = vpack.c.b16 %v1981, %v1979
  %v2608 = vpack.c.b16 %v1982, %v1980
  %v2609 = vpack.c.b16 %v1985, %v1983
  %v2610 = vpack.c.b16 %v1986, %v1984
  %v2611 = vpack.c.b16 %v1989, %v1987
  %v2612 = vpack.c.b16 %v1990, %v1988
  %v2613 = vpack.c.b16 %v1993, %v1991
  %v2614 = vpack.c.b16 %v1994, %v1992
  %v2615 = vpack.c.b16 %v1997, %v1995
  %v2616 = vpack.c.b16 %v1998, %v1996
  %v2617 = vpack.c.b16 %v2001, %v1999
  %v2618 = vpack.c.b16 %v2002, %v2000
  %v2619 = vpack.c.b16 %v2005, %v2003
  %v2620 = vpack.c.b16 %v2006, %v2004
  %v2621 = vpack.c.b16 %v2009, %v2007
  %v2622 = vpack.c.b16 %v2010, %v2008
  %v2623 = vpack.c.b16 %v2013, %v2011
  %v2624 = vpack.c.b16 %v2014, %v2012
  %v2625 = vpack.c.b16 %v2017, %v2015
  %v2626 = vpack.c.b16 %v2018, %v2016
  %v2627 = vpack.c.b16 %v2021, %v2019
  %v2628 = vpack.c.b16 %v2022, %v2020
  %v2629 = vpack.c.b16 %v2025, %v2023
  %v2630 = vpack.c.b16 %v2026, %v2024
  %v2631 = vpack.c.b16 %v2029, %v2027
  %v2632 = vpack.c.b16 %v2030, %v2028
  %v2633 = vpack.c.b16 %v2033, %v2031
  %v2634 = vpack.c.b16 %v2034, %v2032
  %v2635 = vpack.c.b16 %v2037, %v2035
  %v2636 = vpack.c.b16 %v2038, %v2036
  %v2637 = vpack.c.b16 %v2041, %v2039
  %v2638 = vpack.c.b16 %v2042, %v2040
  %v2639 = vpack.c.b16 %v2045, %v2043
  %v2640 = vpack.c.b16 %v2046, %v2044
  %v2641 = vpack.c.b16 %v2049, %v2047
  %v2642 = vpack.c.b16 %v2050, %v2048
  %v2643 = vpack.c.b16 %v2053, %v2051
  %v2644 = vpack.c.b16 %v2054, %v2052
  %v2645 = vpack.c.b16 %v2057, %v2055
  %v2646 = vpack.c.b16 %v2058, %v2056
  %v2647 = vpack.c.b16 %v2061, %v2059
  %v2648 = vpack.c.b16 %v2062, %v2060
  %v2649 = vpack.c.b16 %v2065, %v2063
  %v2650 = vpack.c.b16 %v2066, %v2064
  %v2651 = vpack.c.b16 %v2069, %v2067
  %v2652 = vpack.c.b16 %v2070, %v2068
  %v2653 = vpack.c.b16 %v2073, %v2071
  %v2654 = vpack.c.b16 %v2074, %v2072
  %v2655 = vpack.c.b16 %v2077, %v2075
  %v2656 = vpack.c.b16 %v2078, %v2076
  %v2657 = vpack.c.b16 %v2081, %v2079
  %v2658 = vpack.c.b16 %v2082, %v2080
  %v2659 = vpack.c.b16 %v2085, %v2083
  %v2660 = vpack.c.b16 %v2086, %v2084
  %v2661 = vpack.c.b16 %v2089, %v2087
  %v2662 = vpack.c.b16 %v2090, %v2088
  %v2663 = vpack.c.b16 %v2093, %v2091
  %v2664 = vpack.c.b16 %v2094, %v2092
  %v2665 = vpack.c.b16 %v2097, %v2095
  %v2666 = vpack.c.b16 %v2098, %v2096
  %v2667 = vpack.c.b16 %v2101, %v2099
  %v2668 = vpack.c.b16 %v2102, %v2100
  %v2669 = vpack.c.b16 %v2105, %v2103
  %v2670 = vpack.c.b16 %v2106, %v2104
  %v2671 = vpack.c.b16 %v2109, %v2107
  %v2672 = vpack.c.b16 %v2110, %v2108
  %v2673 = vpack.c.b16 %v2113, %v2111
  %v2674 = vpack.c.b16 %v2114, %v2112
  %v2675 = vpack.c.b16 %v2117, %v2115
  %v2676 = vpack.c.b16 %v2118, %v2116
  %v2677 = vpack.c.b16 %v2121, %v2119
  %v2678 = vpack.c.b16 %v2122, %v2120
  %v2679 = vpack.c.b16 %v2125, %v2123
  %v2680 = vpack.c.b16 %v2126, %v2124
  %v2681 = vpack.c.b16 %v2129, %v2127
  %v2682 = vpack.c.b16 %v2130, %v2128
  %v2683 = vpack.c.b16 %v2133, %v2131
  %v2684 = vpack.c.b16 %v2134, %v2132
  %v2685 = vpack.c.b16 %v2137, %v2135
  %v2686 = vpack.c.b16 %v2138, %v2136
  %v2687 = vpack.c.b16 %v2141, %v2139
  %v2688 = vpack.c.b16 %v2142, %v2140
  %v2689 = vpack.c.b16 %v2145, %v2143
  %v2690 = vpack.c.b16 %v2146, %v2144
  %v2691 = vpack.c.b16 %v2149, %v2147
  %v2692 = vpack.c.b16 %v2150, %v2148
  %v2693 = vpack.c.b16 %v2153, %v2151
  %v2694 = vpack.c.b16 %v2154, %v2152
  %v2695 = vpack.c.b16 %v2157, %v2155
  %v2696 = vpack.c.b16 %v2158, %v2156
  %v2697 = vpack.c.b16 %v2161, %v2159
  %v2698 = vpack.c.b16 %v2162, %v2160
  %v2699 = vpack.c.b16 %v2165, %v2163
  %v2700 = vpack.c.b16 %v2166, %v2164
  %v2701 = vpack.c.b16 %v2169, %v2167
  %v2702 = vpack.c.b16 %v2170, %v2168
  %v2703 = vpack.c.b16 %v2173, %v2171
  %v2704 = vpack.c.b16 %v2174, %v2172
  %v2705 = vpack.c.b16 %v2177, %v2175
  %v2706 = vpack.c.b16 %v2178, %v2176
  %v2707 = vpack.c.b16 %v2181, %v2179
  %v2708 = vpack.c.b16 %v2182, %v2180
  %v2709 = vpack.c.b16 %v2185, %v2183
  %v2710 = vpack.c.b16 %v2186, %v2184
  %v2711 = vpack.c.b16 %v2189, %v2187
  %v2712 = vpack.c.b16 %v2190, %v2188
  %v2713 = vpack.c.b16 %v2193, %v2191
  %v2714 = vpack.c.b16 %v2194, %v2192
  %v2715 = vpack.c.b16 %v2197, %v2195
  %v2716 = vpack.c.b16 %v2198, %v2196
  %v2717 = vpack.c.b16 %v2201, %v2199
  %v2718 = vpack.c.b16 %v2202, %v2200
  %v2719 = vpack.c.b16 %v2205, %v2203
  %v2720 = vpack.c.b16 %v2206, %v2204
  %v2721 = vpack.c.b16 %v2209, %v2207
  %v2722 = vpack.c.b16 %v2210, %v2208
  %3235 = vmatprep.subr.bf16.mxu0 %v2226
  %3236 = vmatpush1.bf16.msra.mxu0 %v2225
  %3237 = vmatprep.subr.bf16.mxu0 %v2224
  %3238 = vmatpush1.bf16.msra.mxu0 %v2223
  %3239 = vmatprep.subr.bf16.mxu0 %v2222
  %3240 = vmatpush1.bf16.msra.mxu0 %v2221
  %3241 = vmatprep.subr.bf16.mxu0 %v2220
  %3242 = vmatpush1.bf16.msra.mxu0 %v2219
  %3243 = vmatprep.subr.bf16.mxu0 %v2218
  %3244 = vmatpush1.bf16.msra.mxu0 %v2217
  %3245 = vmatprep.subr.bf16.mxu0 %v2216
  %3246 = vmatpush1.bf16.msra.mxu0 %v2215
  %3247 = vmatprep.subr.bf16.mxu0 %v2214
  %3248 = vmatpush1.bf16.msra.mxu0 %v2213
  %3249 = vmatprep.subr.bf16.mxu0 %v2212
  %3250 = vmatpush1.bf16.msra.mxu0 %v2211
  %3251 = vmatprep.subr.bf16.mxu0 %v2242
  %3252 = vmatpush2.bf16.msra.mxu0 %v2241
  %3253 = vmatprep.subr.bf16.mxu0 %v2240
  %3254 = vmatpush2.bf16.msra.mxu0 %v2239
  %3255 = vmatprep.subr.bf16.mxu0 %v2238
  %3256 = vmatpush2.bf16.msra.mxu0 %v2237
  %3257 = vmatprep.subr.bf16.mxu0 %v2236
  %3258 = vmatpush2.bf16.msra.mxu0 %v2235
  %3259 = vmatprep.subr.bf16.mxu0 %v2234
  %3260 = vmatpush2.bf16.msra.mxu0 %v2233
  %3261 = vmatprep.subr.bf16.mxu0 %v2232
  %3262 = vmatpush2.bf16.msra.mxu0 %v2231
  %3263 = vmatprep.subr.bf16.mxu0 %v2230
  %3264 = vmatpush2.bf16.msra.mxu0 %v2229
  %3265 = vmatprep.subr.bf16.mxu0 %v2228
  %3266 = vmatpush2.bf16.msra.mxu0 %v2227
  %3267 = vmatprep.mubr.bf16.mxu0 %v612
  %3268 = vmatmul.mubr.bf16.gmra.mxu0 %v611
  %v3269 = vpop.f32.mrf.mxu0
  %v3270 = vadd.f32 0.0, %v3269
  %v3271 = vpop.f32.mrf.mxu0
  %v3272 = vadd.f32 0.0, %v3271
  %v3273 = vpop.f32.mrf.mxu0
  %v3274 = vpop.f32.mrf.mxu0
  %3275 = vdwg.mxu0
  %3276 = vmatprep.subr.bf16.mxu0 %v2258
  %3277 = vmatpush1.bf16.msra.mxu0 %v2257
  %3278 = vmatprep.subr.bf16.mxu0 %v2256
  %3279 = vmatpush1.bf16.msra.mxu0 %v2255
  %3280 = vmatprep.subr.bf16.mxu0 %v2254
  %3281 = vmatpush1.bf16.msra.mxu0 %v2253
  %3282 = vmatprep.subr.bf16.mxu0 %v2252
  %3283 = vmatpush1.bf16.msra.mxu0 %v2251
  %3284 = vmatprep.subr.bf16.mxu0 %v2250
  %3285 = vmatpush1.bf16.msra.mxu0 %v2249
  %3286 = vmatprep.subr.bf16.mxu0 %v2248
  %3287 = vmatpush1.bf16.msra.mxu0 %v2247
  %3288 = vmatprep.subr.bf16.mxu0 %v2246
  %3289 = vmatpush1.bf16.msra.mxu0 %v2245
  %3290 = vmatprep.subr.bf16.mxu0 %v2244
  %3291 = vmatpush1.bf16.msra.mxu0 %v2243
  %3292 = vmatprep.subr.bf16.mxu0 %v2274
  %3293 = vmatpush2.bf16.msra.mxu0 %v2273
  %3294 = vmatprep.subr.bf16.mxu0 %v2272
  %3295 = vmatpush2.bf16.msra.mxu0 %v2271
  %3296 = vmatprep.subr.bf16.mxu0 %v2270
  %3297 = vmatpush2.bf16.msra.mxu0 %v2269
  %3298 = vmatprep.subr.bf16.mxu0 %v2268
  %3299 = vmatpush2.bf16.msra.mxu0 %v2267
  %3300 = vmatprep.subr.bf16.mxu0 %v2266
  %3301 = vmatpush2.bf16.msra.mxu0 %v2265
  %3302 = vmatprep.subr.bf16.mxu0 %v2264
  %3303 = vmatpush2.bf16.msra.mxu0 %v2263
  %3304 = vmatprep.subr.bf16.mxu0 %v2262
  %3305 = vmatpush2.bf16.msra.mxu0 %v2261
  %3306 = vmatprep.subr.bf16.mxu0 %v2260
  %3307 = vmatpush2.bf16.msra.mxu0 %v2259
  %3308 = vmatprep.mubr.bf16.mxu0 %v614
  %3309 = vmatmul.mubr.bf16.gmra.mxu0 %v613
  %v3310 = vpop.f32.mrf.mxu0
  %v3311 = vadd.f32 %v3270, %v3310
  %v3312 = vpop.f32.mrf.mxu0
  %v3313 = vadd.f32 %v3272, %v3312
  %v3314 = vpop.f32.mrf.mxu0
  %v3315 = vpop.f32.mrf.mxu0
  %3316 = vdwg.mxu0
  %3317 = vmatprep.subr.bf16.mxu0 %v2290
  %3318 = vmatpush1.bf16.msra.mxu0 %v2289
  %3319 = vmatprep.subr.bf16.mxu0 %v2288
  %3320 = vmatpush1.bf16.msra.mxu0 %v2287
  %3321 = vmatprep.subr.bf16.mxu0 %v2286
  %3322 = vmatpush1.bf16.msra.mxu0 %v2285
  %3323 = vmatprep.subr.bf16.mxu0 %v2284
  %3324 = vmatpush1.bf16.msra.mxu0 %v2283
  %3325 = vmatprep.subr.bf16.mxu0 %v2282
  %3326 = vmatpush1.bf16.msra.mxu0 %v2281
  %3327 = vmatprep.subr.bf16.mxu0 %v2280
  %3328 = vmatpush1.bf16.msra.mxu0 %v2279
  %3329 = vmatprep.subr.bf16.mxu0 %v2278
  %3330 = vmatpush1.bf16.msra.mxu0 %v2277
  %3331 = vmatprep.subr.bf16.mxu0 %v2276
  %3332 = vmatpush1.bf16.msra.mxu0 %v2275
  %3333 = vmatprep.subr.bf16.mxu0 %v2306
  %3334 = vmatpush2.bf16.msra.mxu0 %v2305
  %3335 = vmatprep.subr.bf16.mxu0 %v2304
  %3336 = vmatpush2.bf16.msra.mxu0 %v2303
  %3337 = vmatprep.subr.bf16.mxu0 %v2302
  %3338 = vmatpush2.bf16.msra.mxu0 %v2301
  %3339 = vmatprep.subr.bf16.mxu0 %v2300
  %3340 = vmatpush2.bf16.msra.mxu0 %v2299
  %3341 = vmatprep.subr.bf16.mxu0 %v2298
  %3342 = vmatpush2.bf16.msra.mxu0 %v2297
  %3343 = vmatprep.subr.bf16.mxu0 %v2296
  %3344 = vmatpush2.bf16.msra.mxu0 %v2295
  %3345 = vmatprep.subr.bf16.mxu0 %v2294
  %3346 = vmatpush2.bf16.msra.mxu0 %v2293
  %3347 = vmatprep.subr.bf16.mxu0 %v2292
  %3348 = vmatpush2.bf16.msra.mxu0 %v2291
  %3349 = vmatprep.mubr.bf16.mxu0 %v616
  %3350 = vmatmul.mubr.bf16.gmra.mxu0 %v615
  %v3351 = vpop.f32.mrf.mxu0
  %v3352 = vadd.f32 %v3311, %v3351
  %v3353 = vpop.f32.mrf.mxu0
  %v3354 = vadd.f32 %v3313, %v3353
  %v3355 = vpop.f32.mrf.mxu0
  %v3356 = vpop.f32.mrf.mxu0
  %3357 = vdwg.mxu0
  %3358 = vmatprep.subr.bf16.mxu0 %v2322
  %3359 = vmatpush1.bf16.msra.mxu0 %v2321
  %3360 = vmatprep.subr.bf16.mxu0 %v2320
  %3361 = vmatpush1.bf16.msra.mxu0 %v2319
  %3362 = vmatprep.subr.bf16.mxu0 %v2318
  %3363 = vmatpush1.bf16.msra.mxu0 %v2317
  %3364 = vmatprep.subr.bf16.mxu0 %v2316
  %3365 = vmatpush1.bf16.msra.mxu0 %v2315
  %3366 = vmatprep.subr.bf16.mxu0 %v2314
  %3367 = vmatpush1.bf16.msra.mxu0 %v2313
  %3368 = vmatprep.subr.bf16.mxu0 %v2312
  %3369 = vmatpush1.bf16.msra.mxu0 %v2311
  %3370 = vmatprep.subr.bf16.mxu0 %v2310
  %3371 = vmatpush1.bf16.msra.mxu0 %v2309
  %3372 = vmatprep.subr.bf16.mxu0 %v2308
  %3373 = vmatpush1.bf16.msra.mxu0 %v2307
  %3374 = vmatprep.subr.bf16.mxu0 %v2338
  %3375 = vmatpush2.bf16.msra.mxu0 %v2337
  %3376 = vmatprep.subr.bf16.mxu0 %v2336
  %3377 = vmatpush2.bf16.msra.mxu0 %v2335
  %3378 = vmatprep.subr.bf16.mxu0 %v2334
  %3379 = vmatpush2.bf16.msra.mxu0 %v2333
  %3380 = vmatprep.subr.bf16.mxu0 %v2332
  %3381 = vmatpush2.bf16.msra.mxu0 %v2331
  %3382 = vmatprep.subr.bf16.mxu0 %v2330
  %3383 = vmatpush2.bf16.msra.mxu0 %v2329
  %3384 = vmatprep.subr.bf16.mxu0 %v2328
  %3385 = vmatpush2.bf16.msra.mxu0 %v2327
  %3386 = vmatprep.subr.bf16.mxu0 %v2326
  %3387 = vmatpush2.bf16.msra.mxu0 %v2325
  %3388 = vmatprep.subr.bf16.mxu0 %v2324
  %3389 = vmatpush2.bf16.msra.mxu0 %v2323
  %3390 = vmatprep.mubr.bf16.mxu0 %v618
  %3391 = vmatmul.mubr.bf16.gmra.mxu0 %v617
  %v3392 = vpop.f32.mrf.mxu0
  %v3393 = vadd.f32 %v3352, %v3392
  %v3394 = vpop.f32.mrf.mxu0
  %v3395 = vadd.f32 %v3354, %v3394
  %v3396 = vpop.f32.mrf.mxu0
  %v3397 = vpop.f32.mrf.mxu0
  %3398 = vdwg.mxu0
  %3399 = vmatprep.subr.bf16.mxu0 %v2354
  %3400 = vmatpush1.bf16.msra.mxu0 %v2353
  %3401 = vmatprep.subr.bf16.mxu0 %v2352
  %3402 = vmatpush1.bf16.msra.mxu0 %v2351
  %3403 = vmatprep.subr.bf16.mxu0 %v2350
  %3404 = vmatpush1.bf16.msra.mxu0 %v2349
  %3405 = vmatprep.subr.bf16.mxu0 %v2348
  %3406 = vmatpush1.bf16.msra.mxu0 %v2347
  %3407 = vmatprep.subr.bf16.mxu0 %v2346
  %3408 = vmatpush1.bf16.msra.mxu0 %v2345
  %3409 = vmatprep.subr.bf16.mxu0 %v2344
  %3410 = vmatpush1.bf16.msra.mxu0 %v2343
  %3411 = vmatprep.subr.bf16.mxu0 %v2342
  %3412 = vmatpush1.bf16.msra.mxu0 %v2341
  %3413 = vmatprep.subr.bf16.mxu0 %v2340
  %3414 = vmatpush1.bf16.msra.mxu0 %v2339
  %3415 = vmatprep.subr.bf16.mxu0 %v2370
  %3416 = vmatpush2.bf16.msra.mxu0 %v2369
  %3417 = vmatprep.subr.bf16.mxu0 %v2368
  %3418 = vmatpush2.bf16.msra.mxu0 %v2367
  %3419 = vmatprep.subr.bf16.mxu0 %v2366
  %3420 = vmatpush2.bf16.msra.mxu0 %v2365
  %3421 = vmatprep.subr.bf16.mxu0 %v2364
  %3422 = vmatpush2.bf16.msra.mxu0 %v2363
  %3423 = vmatprep.subr.bf16.mxu0 %v2362
  %3424 = vmatpush2.bf16.msra.mxu0 %v2361
  %3425 = vmatprep.subr.bf16.mxu0 %v2360
  %3426 = vmatpush2.bf16.msra.mxu0 %v2359
  %3427 = vmatprep.subr.bf16.mxu0 %v2358
  %3428 = vmatpush2.bf16.msra.mxu0 %v2357
  %3429 = vmatprep.subr.bf16.mxu0 %v2356
  %3430 = vmatpush2.bf16.msra.mxu0 %v2355
  %3431 = vmatprep.mubr.bf16.mxu0 %v620
  %3432 = vmatmul.mubr.bf16.gmra.mxu0 %v619
  %v3433 = vpop.f32.mrf.mxu0
  %v3434 = vadd.f32 %v3393, %v3433
  %v3435 = vpop.f32.mrf.mxu0
  %v3436 = vadd.f32 %v3395, %v3435
  %v3437 = vpop.f32.mrf.mxu0
  %v3438 = vpop.f32.mrf.mxu0
  %3439 = vdwg.mxu0
  %3440 = vmatprep.subr.bf16.mxu0 %v2386
  %3441 = vmatpush1.bf16.msra.mxu0 %v2385
  %3442 = vmatprep.subr.bf16.mxu0 %v2384
  %3443 = vmatpush1.bf16.msra.mxu0 %v2383
  %3444 = vmatprep.subr.bf16.mxu0 %v2382
  %3445 = vmatpush1.bf16.msra.mxu0 %v2381
  %3446 = vmatprep.subr.bf16.mxu0 %v2380
  %3447 = vmatpush1.bf16.msra.mxu0 %v2379
  %3448 = vmatprep.subr.bf16.mxu0 %v2378
  %3449 = vmatpush1.bf16.msra.mxu0 %v2377
  %3450 = vmatprep.subr.bf16.mxu0 %v2376
  %3451 = vmatpush1.bf16.msra.mxu0 %v2375
  %3452 = vmatprep.subr.bf16.mxu0 %v2374
  %3453 = vmatpush1.bf16.msra.mxu0 %v2373
  %3454 = vmatprep.subr.bf16.mxu0 %v2372
  %3455 = vmatpush1.bf16.msra.mxu0 %v2371
  %3456 = vmatprep.subr.bf16.mxu0 %v2402
  %3457 = vmatpush2.bf16.msra.mxu0 %v2401
  %3458 = vmatprep.subr.bf16.mxu0 %v2400
  %3459 = vmatpush2.bf16.msra.mxu0 %v2399
  %3460 = vmatprep.subr.bf16.mxu0 %v2398
  %3461 = vmatpush2.bf16.msra.mxu0 %v2397
  %3462 = vmatprep.subr.bf16.mxu0 %v2396
  %3463 = vmatpush2.bf16.msra.mxu0 %v2395
  %3464 = vmatprep.subr.bf16.mxu0 %v2394
  %3465 = vmatpush2.bf16.msra.mxu0 %v2393
  %3466 = vmatprep.subr.bf16.mxu0 %v2392
  %3467 = vmatpush2.bf16.msra.mxu0 %v2391
  %3468 = vmatprep.subr.bf16.mxu0 %v2390
  %3469 = vmatpush2.bf16.msra.mxu0 %v2389
  %3470 = vmatprep.subr.bf16.mxu0 %v2388
  %3471 = vmatpush2.bf16.msra.mxu0 %v2387
  %3472 = vmatprep.mubr.bf16.mxu0 %v622
  %3473 = vmatmul.mubr.bf16.gmra.mxu0 %v621
  %v3474 = vpop.f32.mrf.mxu0
  %v3475 = vadd.f32 %v3434, %v3474
  %v3476 = vpop.f32.mrf.mxu0
  %v3477 = vadd.f32 %v3436, %v3476
  %v3478 = vpop.f32.mrf.mxu0
  %v3479 = vpop.f32.mrf.mxu0
  %3480 = vdwg.mxu0
  %3481 = vmatprep.subr.bf16.mxu0 %v2418
  %3482 = vmatpush1.bf16.msra.mxu0 %v2417
  %3483 = vmatprep.subr.bf16.mxu0 %v2416
  %3484 = vmatpush1.bf16.msra.mxu0 %v2415
  %3485 = vmatprep.subr.bf16.mxu0 %v2414
  %3486 = vmatpush1.bf16.msra.mxu0 %v2413
  %3487 = vmatprep.subr.bf16.mxu0 %v2412
  %3488 = vmatpush1.bf16.msra.mxu0 %v2411
  %3489 = vmatprep.subr.bf16.mxu0 %v2410
  %3490 = vmatpush1.bf16.msra.mxu0 %v2409
  %3491 = vmatprep.subr.bf16.mxu0 %v2408
  %3492 = vmatpush1.bf16.msra.mxu0 %v2407
  %3493 = vmatprep.subr.bf16.mxu0 %v2406
  %3494 = vmatpush1.bf16.msra.mxu0 %v2405
  %3495 = vmatprep.subr.bf16.mxu0 %v2404
  %3496 = vmatpush1.bf16.msra.mxu0 %v2403
  %3497 = vmatprep.subr.bf16.mxu0 %v2434
  %3498 = vmatpush2.bf16.msra.mxu0 %v2433
  %3499 = vmatprep.subr.bf16.mxu0 %v2432
  %3500 = vmatpush2.bf16.msra.mxu0 %v2431
  %3501 = vmatprep.subr.bf16.mxu0 %v2430
  %3502 = vmatpush2.bf16.msra.mxu0 %v2429
  %3503 = vmatprep.subr.bf16.mxu0 %v2428
  %3504 = vmatpush2.bf16.msra.mxu0 %v2427
  %3505 = vmatprep.subr.bf16.mxu0 %v2426
  %3506 = vmatpush2.bf16.msra.mxu0 %v2425
  %3507 = vmatprep.subr.bf16.mxu0 %v2424
  %3508 = vmatpush2.bf16.msra.mxu0 %v2423
  %3509 = vmatprep.subr.bf16.mxu0 %v2422
  %3510 = vmatpush2.bf16.msra.mxu0 %v2421
  %3511 = vmatprep.subr.bf16.mxu0 %v2420
  %3512 = vmatpush2.bf16.msra.mxu0 %v2419
  %3513 = vmatprep.mubr.bf16.mxu0 %v624
  %3514 = vmatmul.mubr.bf16.gmra.mxu0 %v623
  %v3515 = vpop.f32.mrf.mxu0
  %v3516 = vadd.f32 %v3475, %v3515
  %v3517 = vpop.f32.mrf.mxu0
  %v3518 = vadd.f32 %v3477, %v3517
  %v3519 = vpop.f32.mrf.mxu0
  %v3520 = vpop.f32.mrf.mxu0
  %3521 = vdwg.mxu0
  %3522 = vmatprep.subr.bf16.mxu0 %v2450
  %3523 = vmatpush1.bf16.msra.mxu0 %v2449
  %3524 = vmatprep.subr.bf16.mxu0 %v2448
  %3525 = vmatpush1.bf16.msra.mxu0 %v2447
  %3526 = vmatprep.subr.bf16.mxu0 %v2446
  %3527 = vmatpush1.bf16.msra.mxu0 %v2445
  %3528 = vmatprep.subr.bf16.mxu0 %v2444
  %3529 = vmatpush1.bf16.msra.mxu0 %v2443
  %3530 = vmatprep.subr.bf16.mxu0 %v2442
  %3531 = vmatpush1.bf16.msra.mxu0 %v2441
  %3532 = vmatprep.subr.bf16.mxu0 %v2440
  %3533 = vmatpush1.bf16.msra.mxu0 %v2439
  %3534 = vmatprep.subr.bf16.mxu0 %v2438
  %3535 = vmatpush1.bf16.msra.mxu0 %v2437
  %3536 = vmatprep.subr.bf16.mxu0 %v2436
  %3537 = vmatpush1.bf16.msra.mxu0 %v2435
  %3538 = vmatprep.subr.bf16.mxu0 %v2466
  %3539 = vmatpush2.bf16.msra.mxu0 %v2465
  %3540 = vmatprep.subr.bf16.mxu0 %v2464
  %3541 = vmatpush2.bf16.msra.mxu0 %v2463
  %3542 = vmatprep.subr.bf16.mxu0 %v2462
  %3543 = vmatpush2.bf16.msra.mxu0 %v2461
  %3544 = vmatprep.subr.bf16.mxu0 %v2460
  %3545 = vmatpush2.bf16.msra.mxu0 %v2459
  %3546 = vmatprep.subr.bf16.mxu0 %v2458
  %3547 = vmatpush2.bf16.msra.mxu0 %v2457
  %3548 = vmatprep.subr.bf16.mxu0 %v2456
  %3549 = vmatpush2.bf16.msra.mxu0 %v2455
  %3550 = vmatprep.subr.bf16.mxu0 %v2454
  %3551 = vmatpush2.bf16.msra.mxu0 %v2453
  %3552 = vmatprep.subr.bf16.mxu0 %v2452
  %3553 = vmatpush2.bf16.msra.mxu0 %v2451
  %3554 = vmatprep.mubr.bf16.mxu0 %v626
  %3555 = vmatmul.mubr.bf16.gmra.mxu0 %v625
  %v3556 = vpop.f32.mrf.mxu0
  %v3557 = vadd.f32 %v3516, %v3556
  %v3558 = vpop.f32.mrf.mxu0
  %v3559 = vadd.f32 %v3518, %v3558
  %v3560 = vpop.f32.mrf.mxu0
  %v3561 = vpop.f32.mrf.mxu0
  %3562 = vdwg.mxu0
  %3563 = vmatprep.subr.bf16.mxu0 %v2482
  %3564 = vmatpush1.bf16.msra.mxu0 %v2481
  %3565 = vmatprep.subr.bf16.mxu0 %v2480
  %3566 = vmatpush1.bf16.msra.mxu0 %v2479
  %3567 = vmatprep.subr.bf16.mxu0 %v2478
  %3568 = vmatpush1.bf16.msra.mxu0 %v2477
  %3569 = vmatprep.subr.bf16.mxu0 %v2476
  %3570 = vmatpush1.bf16.msra.mxu0 %v2475
  %3571 = vmatprep.subr.bf16.mxu0 %v2474
  %3572 = vmatpush1.bf16.msra.mxu0 %v2473
  %3573 = vmatprep.subr.bf16.mxu0 %v2472
  %3574 = vmatpush1.bf16.msra.mxu0 %v2471
  %3575 = vmatprep.subr.bf16.mxu0 %v2470
  %3576 = vmatpush1.bf16.msra.mxu0 %v2469
  %3577 = vmatprep.subr.bf16.mxu0 %v2468
  %3578 = vmatpush1.bf16.msra.mxu0 %v2467
  %3579 = vmatprep.subr.bf16.mxu0 %v2498
  %3580 = vmatpush2.bf16.msra.mxu0 %v2497
  %3581 = vmatprep.subr.bf16.mxu0 %v2496
  %3582 = vmatpush2.bf16.msra.mxu0 %v2495
  %3583 = vmatprep.subr.bf16.mxu0 %v2494
  %3584 = vmatpush2.bf16.msra.mxu0 %v2493
  %3585 = vmatprep.subr.bf16.mxu0 %v2492
  %3586 = vmatpush2.bf16.msra.mxu0 %v2491
  %3587 = vmatprep.subr.bf16.mxu0 %v2490
  %3588 = vmatpush2.bf16.msra.mxu0 %v2489
  %3589 = vmatprep.subr.bf16.mxu0 %v2488
  %3590 = vmatpush2.bf16.msra.mxu0 %v2487
  %3591 = vmatprep.subr.bf16.mxu0 %v2486
  %3592 = vmatpush2.bf16.msra.mxu0 %v2485
  %3593 = vmatprep.subr.bf16.mxu0 %v2484
  %3594 = vmatpush2.bf16.msra.mxu0 %v2483
  %3595 = vmatprep.mubr.bf16.mxu0 %v628
  %3596 = vmatmul.mubr.bf16.gmra.mxu0 %v627
  %v3597 = vpop.f32.mrf.mxu0
  %v3598 = vadd.f32 %v3557, %v3597
  %v3599 = vpop.f32.mrf.mxu0
  %v3600 = vadd.f32 %v3559, %v3599
  %v3601 = vpop.f32.mrf.mxu0
  %v3602 = vpop.f32.mrf.mxu0
  %3603 = vdwg.mxu0
  %3604 = vmatprep.subr.bf16.mxu0 %v2514
  %3605 = vmatpush1.bf16.msra.mxu0 %v2513
  %3606 = vmatprep.subr.bf16.mxu0 %v2512
  %3607 = vmatpush1.bf16.msra.mxu0 %v2511
  %3608 = vmatprep.subr.bf16.mxu0 %v2510
  %3609 = vmatpush1.bf16.msra.mxu0 %v2509
  %3610 = vmatprep.subr.bf16.mxu0 %v2508
  %3611 = vmatpush1.bf16.msra.mxu0 %v2507
  %3612 = vmatprep.subr.bf16.mxu0 %v2506
  %3613 = vmatpush1.bf16.msra.mxu0 %v2505
  %3614 = vmatprep.subr.bf16.mxu0 %v2504
  %3615 = vmatpush1.bf16.msra.mxu0 %v2503
  %3616 = vmatprep.subr.bf16.mxu0 %v2502
  %3617 = vmatpush1.bf16.msra.mxu0 %v2501
  %3618 = vmatprep.subr.bf16.mxu0 %v2500
  %3619 = vmatpush1.bf16.msra.mxu0 %v2499
  %3620 = vmatprep.subr.bf16.mxu0 %v2530
  %3621 = vmatpush2.bf16.msra.mxu0 %v2529
  %3622 = vmatprep.subr.bf16.mxu0 %v2528
  %3623 = vmatpush2.bf16.msra.mxu0 %v2527
  %3624 = vmatprep.subr.bf16.mxu0 %v2526
  %3625 = vmatpush2.bf16.msra.mxu0 %v2525
  %3626 = vmatprep.subr.bf16.mxu0 %v2524
  %3627 = vmatpush2.bf16.msra.mxu0 %v2523
  %3628 = vmatprep.subr.bf16.mxu0 %v2522
  %3629 = vmatpush2.bf16.msra.mxu0 %v2521
  %3630 = vmatprep.subr.bf16.mxu0 %v2520
  %3631 = vmatpush2.bf16.msra.mxu0 %v2519
  %3632 = vmatprep.subr.bf16.mxu0 %v2518
  %3633 = vmatpush2.bf16.msra.mxu0 %v2517
  %3634 = vmatprep.subr.bf16.mxu0 %v2516
  %3635 = vmatpush2.bf16.msra.mxu0 %v2515
  %3636 = vmatprep.mubr.bf16.mxu0 %v630
  %3637 = vmatmul.mubr.bf16.gmra.mxu0 %v629
  %v3638 = vpop.f32.mrf.mxu0
  %v3639 = vadd.f32 %v3598, %v3638
  %v3640 = vpop.f32.mrf.mxu0
  %v3641 = vadd.f32 %v3600, %v3640
  %v3642 = vpop.f32.mrf.mxu0
  %v3643 = vpop.f32.mrf.mxu0
  %3644 = vdwg.mxu0
  %3645 = vmatprep.subr.bf16.mxu0 %v2546
  %3646 = vmatpush1.bf16.msra.mxu0 %v2545
  %3647 = vmatprep.subr.bf16.mxu0 %v2544
  %3648 = vmatpush1.bf16.msra.mxu0 %v2543
  %3649 = vmatprep.subr.bf16.mxu0 %v2542
  %3650 = vmatpush1.bf16.msra.mxu0 %v2541
  %3651 = vmatprep.subr.bf16.mxu0 %v2540
  %3652 = vmatpush1.bf16.msra.mxu0 %v2539
  %3653 = vmatprep.subr.bf16.mxu0 %v2538
  %3654 = vmatpush1.bf16.msra.mxu0 %v2537
  %3655 = vmatprep.subr.bf16.mxu0 %v2536
  %3656 = vmatpush1.bf16.msra.mxu0 %v2535
  %3657 = vmatprep.subr.bf16.mxu0 %v2534
  %3658 = vmatpush1.bf16.msra.mxu0 %v2533
  %3659 = vmatprep.subr.bf16.mxu0 %v2532
  %3660 = vmatpush1.bf16.msra.mxu0 %v2531
  %3661 = vmatprep.subr.bf16.mxu0 %v2562
  %3662 = vmatpush2.bf16.msra.mxu0 %v2561
  %3663 = vmatprep.subr.bf16.mxu0 %v2560
  %3664 = vmatpush2.bf16.msra.mxu0 %v2559
  %3665 = vmatprep.subr.bf16.mxu0 %v2558
  %3666 = vmatpush2.bf16.msra.mxu0 %v2557
  %3667 = vmatprep.subr.bf16.mxu0 %v2556
  %3668 = vmatpush2.bf16.msra.mxu0 %v2555
  %3669 = vmatprep.subr.bf16.mxu0 %v2554
  %3670 = vmatpush2.bf16.msra.mxu0 %v2553
  %3671 = vmatprep.subr.bf16.mxu0 %v2552
  %3672 = vmatpush2.bf16.msra.mxu0 %v2551
  %3673 = vmatprep.subr.bf16.mxu0 %v2550
  %3674 = vmatpush2.bf16.msra.mxu0 %v2549
  %3675 = vmatprep.subr.bf16.mxu0 %v2548
  %3676 = vmatpush2.bf16.msra.mxu0 %v2547
  %3677 = vmatprep.mubr.bf16.mxu0 %v632
  %3678 = vmatmul.mubr.bf16.gmra.mxu0 %v631
  %v3679 = vpop.f32.mrf.mxu0
  %v3680 = vadd.f32 %v3639, %v3679
  %v3681 = vpop.f32.mrf.mxu0
  %v3682 = vadd.f32 %v3641, %v3681
  %v3683 = vpop.f32.mrf.mxu0
  %v3684 = vpop.f32.mrf.mxu0
  %3685 = vdwg.mxu0
  %3686 = vmatprep.subr.bf16.mxu0 %v2578
  %3687 = vmatpush1.bf16.msra.mxu0 %v2577
  %3688 = vmatprep.subr.bf16.mxu0 %v2576
  %3689 = vmatpush1.bf16.msra.mxu0 %v2575
  %3690 = vmatprep.subr.bf16.mxu0 %v2574
  %3691 = vmatpush1.bf16.msra.mxu0 %v2573
  %3692 = vmatprep.subr.bf16.mxu0 %v2572
  %3693 = vmatpush1.bf16.msra.mxu0 %v2571
  %3694 = vmatprep.subr.bf16.mxu0 %v2570
  %3695 = vmatpush1.bf16.msra.mxu0 %v2569
  %3696 = vmatprep.subr.bf16.mxu0 %v2568
  %3697 = vmatpush1.bf16.msra.mxu0 %v2567
  %3698 = vmatprep.subr.bf16.mxu0 %v2566
  %3699 = vmatpush1.bf16.msra.mxu0 %v2565
  %3700 = vmatprep.subr.bf16.mxu0 %v2564
  %3701 = vmatpush1.bf16.msra.mxu0 %v2563
  %3702 = vmatprep.subr.bf16.mxu0 %v2594
  %3703 = vmatpush2.bf16.msra.mxu0 %v2593
  %3704 = vmatprep.subr.bf16.mxu0 %v2592
  %3705 = vmatpush2.bf16.msra.mxu0 %v2591
  %3706 = vmatprep.subr.bf16.mxu0 %v2590
  %3707 = vmatpush2.bf16.msra.mxu0 %v2589
  %3708 = vmatprep.subr.bf16.mxu0 %v2588
  %3709 = vmatpush2.bf16.msra.mxu0 %v2587
  %3710 = vmatprep.subr.bf16.mxu0 %v2586
  %3711 = vmatpush2.bf16.msra.mxu0 %v2585
  %3712 = vmatprep.subr.bf16.mxu0 %v2584
  %3713 = vmatpush2.bf16.msra.mxu0 %v2583
  %3714 = vmatprep.subr.bf16.mxu0 %v2582
  %3715 = vmatpush2.bf16.msra.mxu0 %v2581
  %3716 = vmatprep.subr.bf16.mxu0 %v2580
  %3717 = vmatpush2.bf16.msra.mxu0 %v2579
  %3718 = vmatprep.mubr.bf16.mxu0 %v634
  %3719 = vmatmul.mubr.bf16.gmra.mxu0 %v633
  %v3720 = vpop.f32.mrf.mxu0
  %v3721 = vadd.f32 %v3680, %v3720
  %v3722 = vpop.f32.mrf.mxu0
  %v3723 = vadd.f32 %v3682, %v3722
  %v3724 = vpop.f32.mrf.mxu0
  %v3725 = vpop.f32.mrf.mxu0
  %3726 = vdwg.mxu0
  %3727 = vmatprep.subr.bf16.mxu0 %v2610
  %3728 = vmatpush1.bf16.msra.mxu0 %v2609
  %3729 = vmatprep.subr.bf16.mxu0 %v2608
  %3730 = vmatpush1.bf16.msra.mxu0 %v2607
  %3731 = vmatprep.subr.bf16.mxu0 %v2606
  %3732 = vmatpush1.bf16.msra.mxu0 %v2605
  %3733 = vmatprep.subr.bf16.mxu0 %v2604
  %3734 = vmatpush1.bf16.msra.mxu0 %v2603
  %3735 = vmatprep.subr.bf16.mxu0 %v2602
  %3736 = vmatpush1.bf16.msra.mxu0 %v2601
  %3737 = vmatprep.subr.bf16.mxu0 %v2600
  %3738 = vmatpush1.bf16.msra.mxu0 %v2599
  %3739 = vmatprep.subr.bf16.mxu0 %v2598
  %3740 = vmatpush1.bf16.msra.mxu0 %v2597
  %3741 = vmatprep.subr.bf16.mxu0 %v2596
  %3742 = vmatpush1.bf16.msra.mxu0 %v2595
  %3743 = vmatprep.subr.bf16.mxu0 %v2626
  %3744 = vmatpush2.bf16.msra.mxu0 %v2625
  %3745 = vmatprep.subr.bf16.mxu0 %v2624
  %3746 = vmatpush2.bf16.msra.mxu0 %v2623
  %3747 = vmatprep.subr.bf16.mxu0 %v2622
  %3748 = vmatpush2.bf16.msra.mxu0 %v2621
  %3749 = vmatprep.subr.bf16.mxu0 %v2620
  %3750 = vmatpush2.bf16.msra.mxu0 %v2619
  %3751 = vmatprep.subr.bf16.mxu0 %v2618
  %3752 = vmatpush2.bf16.msra.mxu0 %v2617
  %3753 = vmatprep.subr.bf16.mxu0 %v2616
  %3754 = vmatpush2.bf16.msra.mxu0 %v2615
  %3755 = vmatprep.subr.bf16.mxu0 %v2614
  %3756 = vmatpush2.bf16.msra.mxu0 %v2613
  %3757 = vmatprep.subr.bf16.mxu0 %v2612
  %3758 = vmatpush2.bf16.msra.mxu0 %v2611
  %3759 = vmatprep.mubr.bf16.mxu0 %v636
  %3760 = vmatmul.mubr.bf16.gmra.mxu0 %v635
  %v3761 = vpop.f32.mrf.mxu0
  %v3762 = vadd.f32 %v3721, %v3761
  %v3763 = vpop.f32.mrf.mxu0
  %v3764 = vadd.f32 %v3723, %v3763
  %v3765 = vpop.f32.mrf.mxu0
  %v3766 = vpop.f32.mrf.mxu0
  %3767 = vdwg.mxu0
  %3768 = vmatprep.subr.bf16.mxu0 %v2642
  %3769 = vmatpush1.bf16.msra.mxu0 %v2641
  %3770 = vmatprep.subr.bf16.mxu0 %v2640
  %3771 = vmatpush1.bf16.msra.mxu0 %v2639
  %3772 = vmatprep.subr.bf16.mxu0 %v2638
  %3773 = vmatpush1.bf16.msra.mxu0 %v2637
  %3774 = vmatprep.subr.bf16.mxu0 %v2636
  %3775 = vmatpush1.bf16.msra.mxu0 %v2635
  %3776 = vmatprep.subr.bf16.mxu0 %v2634
  %3777 = vmatpush1.bf16.msra.mxu0 %v2633
  %3778 = vmatprep.subr.bf16.mxu0 %v2632
  %3779 = vmatpush1.bf16.msra.mxu0 %v2631
  %3780 = vmatprep.subr.bf16.mxu0 %v2630
  %3781 = vmatpush1.bf16.msra.mxu0 %v2629
  %3782 = vmatprep.subr.bf16.mxu0 %v2628
  %3783 = vmatpush1.bf16.msra.mxu0 %v2627
  %3784 = vmatprep.subr.bf16.mxu0 %v2658
  %3785 = vmatpush2.bf16.msra.mxu0 %v2657
  %3786 = vmatprep.subr.bf16.mxu0 %v2656
  %3787 = vmatpush2.bf16.msra.mxu0 %v2655
  %3788 = vmatprep.subr.bf16.mxu0 %v2654
  %3789 = vmatpush2.bf16.msra.mxu0 %v2653
  %3790 = vmatprep.subr.bf16.mxu0 %v2652
  %3791 = vmatpush2.bf16.msra.mxu0 %v2651
  %3792 = vmatprep.subr.bf16.mxu0 %v2650
  %3793 = vmatpush2.bf16.msra.mxu0 %v2649
  %3794 = vmatprep.subr.bf16.mxu0 %v2648
  %3795 = vmatpush2.bf16.msra.mxu0 %v2647
  %3796 = vmatprep.subr.bf16.mxu0 %v2646
  %3797 = vmatpush2.bf16.msra.mxu0 %v2645
  %3798 = vmatprep.subr.bf16.mxu0 %v2644
  %3799 = vmatpush2.bf16.msra.mxu0 %v2643
  %3800 = vmatprep.mubr.bf16.mxu0 %v638
  %3801 = vmatmul.mubr.bf16.gmra.mxu0 %v637
  %v3802 = vpop.f32.mrf.mxu0
  %v3803 = vadd.f32 %v3762, %v3802
  %v3804 = vpop.f32.mrf.mxu0
  %v3805 = vadd.f32 %v3764, %v3804
  %v3806 = vpop.f32.mrf.mxu0
  %v3807 = vpop.f32.mrf.mxu0
  %3808 = vdwg.mxu0
  %3809 = vmatprep.subr.bf16.mxu0 %v2674
  %3810 = vmatpush1.bf16.msra.mxu0 %v2673
  %3811 = vmatprep.subr.bf16.mxu0 %v2672
  %3812 = vmatpush1.bf16.msra.mxu0 %v2671
  %3813 = vmatprep.subr.bf16.mxu0 %v2670
  %3814 = vmatpush1.bf16.msra.mxu0 %v2669
  %3815 = vmatprep.subr.bf16.mxu0 %v2668
  %3816 = vmatpush1.bf16.msra.mxu0 %v2667
  %3817 = vmatprep.subr.bf16.mxu0 %v2666
  %3818 = vmatpush1.bf16.msra.mxu0 %v2665
  %3819 = vmatprep.subr.bf16.mxu0 %v2664
  %3820 = vmatpush1.bf16.msra.mxu0 %v2663
  %3821 = vmatprep.subr.bf16.mxu0 %v2662
  %3822 = vmatpush1.bf16.msra.mxu0 %v2661
  %3823 = vmatprep.subr.bf16.mxu0 %v2660
  %3824 = vmatpush1.bf16.msra.mxu0 %v2659
  %3825 = vmatprep.subr.bf16.mxu0 %v2690
  %3826 = vmatpush2.bf16.msra.mxu0 %v2689
  %3827 = vmatprep.subr.bf16.mxu0 %v2688
  %3828 = vmatpush2.bf16.msra.mxu0 %v2687
  %3829 = vmatprep.subr.bf16.mxu0 %v2686
  %3830 = vmatpush2.bf16.msra.mxu0 %v2685
  %3831 = vmatprep.subr.bf16.mxu0 %v2684
  %3832 = vmatpush2.bf16.msra.mxu0 %v2683
  %3833 = vmatprep.subr.bf16.mxu0 %v2682
  %3834 = vmatpush2.bf16.msra.mxu0 %v2681
  %3835 = vmatprep.subr.bf16.mxu0 %v2680
  %3836 = vmatpush2.bf16.msra.mxu0 %v2679
  %3837 = vmatprep.subr.bf16.mxu0 %v2678
  %3838 = vmatpush2.bf16.msra.mxu0 %v2677
  %3839 = vmatprep.subr.bf16.mxu0 %v2676
  %3840 = vmatpush2.bf16.msra.mxu0 %v2675
  %3841 = vmatprep.mubr.bf16.mxu0 %v640
  %3842 = vmatmul.mubr.bf16.gmra.mxu0 %v639
  %v3843 = vpop.f32.mrf.mxu0
  %v3844 = vadd.f32 %v3803, %v3843
  %v3845 = vpop.f32.mrf.mxu0
  %v3846 = vadd.f32 %v3805, %v3845
  %v3847 = vpop.f32.mrf.mxu0
  %v3848 = vpop.f32.mrf.mxu0
  %3849 = vdwg.mxu0
  %3850 = vmatprep.subr.bf16.mxu0 %v2706
  %3851 = vmatpush1.bf16.msra.mxu0 %v2705
  %3852 = vmatprep.subr.bf16.mxu0 %v2704
  %3853 = vmatpush1.bf16.msra.mxu0 %v2703
  %3854 = vmatprep.subr.bf16.mxu0 %v2702
  %3855 = vmatpush1.bf16.msra.mxu0 %v2701
  %3856 = vmatprep.subr.bf16.mxu0 %v2700
  %3857 = vmatpush1.bf16.msra.mxu0 %v2699
  %3858 = vmatprep.subr.bf16.mxu0 %v2698
  %3859 = vmatpush1.bf16.msra.mxu0 %v2697
  %3860 = vmatprep.subr.bf16.mxu0 %v2696
  %3861 = vmatpush1.bf16.msra.mxu0 %v2695
  %3862 = vmatprep.subr.bf16.mxu0 %v2694
  %3863 = vmatpush1.bf16.msra.mxu0 %v2693
  %3864 = vmatprep.subr.bf16.mxu0 %v2692
  %3865 = vmatpush1.bf16.msra.mxu0 %v2691
  %3866 = vmatprep.subr.bf16.mxu0 %v2722
  %3867 = vmatpush2.bf16.msra.mxu0 %v2721
  %3868 = vmatprep.subr.bf16.mxu0 %v2720
  %3869 = vmatpush2.bf16.msra.mxu0 %v2719
  %3870 = vmatprep.subr.bf16.mxu0 %v2718
  %3871 = vmatpush2.bf16.msra.mxu0 %v2717
  %3872 = vmatprep.subr.bf16.mxu0 %v2716
  %3873 = vmatpush2.bf16.msra.mxu0 %v2715
  %3874 = vmatprep.subr.bf16.mxu0 %v2714
  %3875 = vmatpush2.bf16.msra.mxu0 %v2713
  %3876 = vmatprep.subr.bf16.mxu0 %v2712
  %3877 = vmatpush2.bf16.msra.mxu0 %v2711
  %3878 = vmatprep.subr.bf16.mxu0 %v2710
  %3879 = vmatpush2.bf16.msra.mxu0 %v2709
  %3880 = vmatprep.subr.bf16.mxu0 %v2708
  %3881 = vmatpush2.bf16.msra.mxu0 %v2707
  %3882 = vmatprep.mubr.bf16.mxu0 %v642
  %3883 = vmatmul.mubr.bf16.gmra.mxu0 %v641
  %v3884 = vpop.f32.mrf.mxu0
  %v3885 = vadd.f32 %v3844, %v3884
  %v3886 = vpop.f32.mrf.mxu0
  %v3887 = vadd.f32 %v3846, %v3886
  %v3888 = vpop.f32.mrf.mxu0
  %v3889 = vpop.f32.mrf.mxu0
  %3890 = vdwg.mxu0
  %v3891 = vadd.f32 %v33, %v3885
  %v3892 = vadd.f32 %v34, %v3887
  %3893 = vst [vmem:[#allocation2] sm:$0xff] %v3891
  %vm3894 = vcmask 588800
  %3895 = vst.msk [vmem:[#allocation2 + $0x8] sm:$0xff] %vm3894, %v3892
  // Predicated region
  $region34: #{network_coarse_simple_forward.3} parent=0 // pred_check
    %p3896 = pneg %p26
  $region35: #{network_coarse_simple_forward.3} parent=0 // pred_check_branch
    %3898 = sbr.rel (%p3896) target = $region37
  $region36: #{network_coarse_simple_forward.3} parent=0 // pred_region
    %v3899 = vld [vmem:[#allocation2] sm:$0xff]
    %v3900 = vld [vmem:[#allocation2 + $0x8] sm:$0xff]
    %v3901 = vld [vmem:[%s2] sm:$0x3]
    %v3903 = vlaneseq
    %v3904 = vshrl.u32 %v3903, 7
    %v3905 = vsub.s32 0, %v3904
    %v3906 = vrot.slane %v3901, %v3905
    %v3907 = vlaneseq
    %v3908 = vshrl.u32 %v3907, 7
    %v3909 = vsub.s32 1, %v3908
    %v3910 = vrot.slane %v3901, %v3909
    %v3913 = vadd.f32 %v3899, %v3906
    %v3914 = vadd.f32 %v3900, %v3910
    %v3915 = vmax.f32 %v3913, 0.0
    %v3916 = vmax.f32 %v3914, 0.0
    %v3917 = vld [vmem:[%s3] sm:$0xff]
    %v3918 = vld [vmem:[%s3 + $0x8] sm:$0xff]
    %v3919 = vld [vmem:[%s3 + $0x10] sm:$0xff]
    %v3920 = vld [vmem:[%s3 + $0x18] sm:$0xff]
    %v3921 = vld [vmem:[%s3 + $0x20] sm:$0xff]
    %v3922 = vld [vmem:[%s3 + $0x28] sm:$0xff]
    %v3923 = vld [vmem:[%s3 + $0x30] sm:$0xff]
    %v3924 = vld [vmem:[%s3 + $0x38] sm:$0xff]
    %v3925 = vld [vmem:[%s3 + $0x40] sm:$0xff]
    %v3926 = vld [vmem:[%s3 + $0x48] sm:$0xff]
    %v3927 = vld [vmem:[%s3 + $0x50] sm:$0xff]
    %v3928 = vld [vmem:[%s3 + $0x58] sm:$0xff]
    %v3929 = vld [vmem:[%s3 + $0x60] sm:$0xff]
    %v3930 = vld [vmem:[%s3 + $0x68] sm:$0xff]
    %v3931 = vld [vmem:[%s3 + $0x70] sm:$0xff]
    %v3932 = vld [vmem:[%s3 + $0x78] sm:$0xff]
    %v3933 = vld [vmem:[%s3 + $0x80] sm:$0xff]
    %v3934 = vld [vmem:[%s3 + $0x88] sm:$0xff]
    %v3935 = vld [vmem:[%s3 + $0x90] sm:$0xff]
    %v3936 = vld [vmem:[%s3 + $0x98] sm:$0xff]
    %v3937 = vld [vmem:[%s3 + $0xa0] sm:$0xff]
    %v3938 = vld [vmem:[%s3 + $0xa8] sm:$0xff]
    %v3939 = vld [vmem:[%s3 + $0xb0] sm:$0xff]
    %v3940 = vld [vmem:[%s3 + $0xb8] sm:$0xff]
    %v3941 = vld [vmem:[%s3 + $0xc0] sm:$0xff]
    %v3942 = vld [vmem:[%s4] sm:$0x1]
    %v3944 = vlaneseq
    %v3945 = vshrl.u32 %v3944, 7
    %v3946 = vsub.s32 0, %v3945
    %v3947 = vrot.slane %v3942, %v3946
    %v3950 = vsel %vm3894, %v3916, 0
    %3952 = vmatprep.subr.mxu0 0.0
    %3953 = vmatpush1.msra.mxu0 %v3932
    %3954 = vmatprep.subr.mxu0 0.0
    %3955 = vmatpush1.msra.mxu0 %v3931
    %3956 = vmatprep.subr.mxu0 0.0
    %3957 = vmatpush1.msra.mxu0 %v3930
    %3958 = vmatprep.subr.mxu0 0.0
    %3959 = vmatpush1.msra.mxu0 %v3929
    %3960 = vmatprep.subr.mxu0 0.0
    %3961 = vmatpush1.msra.mxu0 %v3928
    %3962 = vmatprep.subr.mxu0 0.0
    %3963 = vmatpush1.msra.mxu0 %v3927
    %3964 = vmatprep.subr.mxu0 0.0
    %3965 = vmatpush1.msra.mxu0 %v3926
    %3966 = vmatprep.subr.mxu0 0.0
    %3967 = vmatpush1.msra.mxu0 %v3925
    %3968 = vmatprep.subr.mxu0 0.0
    %3969 = vmatpush1.msra.mxu0 %v3924
    %3970 = vmatprep.subr.mxu0 0.0
    %3971 = vmatpush1.msra.mxu0 %v3923
    %3972 = vmatprep.subr.mxu0 0.0
    %3973 = vmatpush1.msra.mxu0 %v3922
    %3974 = vmatprep.subr.mxu0 0.0
    %3975 = vmatpush1.msra.mxu0 %v3921
    %3976 = vmatprep.subr.mxu0 0.0
    %3977 = vmatpush1.msra.mxu0 %v3920
    %3978 = vmatprep.subr.mxu0 0.0
    %3979 = vmatpush1.msra.mxu0 %v3919
    %3980 = vmatprep.subr.mxu0 0.0
    %3981 = vmatpush1.msra.mxu0 %v3918
    %3982 = vmatprep.subr.mxu0 0.0
    %3983 = vmatpush1.msra.mxu0 %v3917
    %3984 = vmatprep.subr.mxu0 0.0
    %3985 = vmatpush2.msra.mxu0 0.0
    %3986 = vmatprep.subr.mxu0 0.0
    %3987 = vmatpush2.msra.mxu0 0.0
    %3988 = vmatprep.subr.mxu0 0.0
    %3989 = vmatpush2.msra.mxu0 0.0
    %3990 = vmatprep.subr.mxu0 0.0
    %3991 = vmatpush2.msra.mxu0 0.0
    %3992 = vmatprep.subr.mxu0 0.0
    %3993 = vmatpush2.msra.mxu0 0.0
    %3994 = vmatprep.subr.mxu0 0.0
    %3995 = vmatpush2.msra.mxu0 0.0
    %3996 = vmatprep.subr.mxu0 0.0
    %3997 = vmatpush2.msra.mxu0 0.0
    %3998 = vmatprep.subr.mxu0 0.0
    %3999 = vmatpush2.msra.mxu0 %v3941
    %4000 = vmatprep.subr.mxu0 0.0
    %4001 = vmatpush2.msra.mxu0 %v3940
    %4002 = vmatprep.subr.mxu0 0.0
    %4003 = vmatpush2.msra.mxu0 %v3939
    %4004 = vmatprep.subr.mxu0 0.0
    %4005 = vmatpush2.msra.mxu0 %v3938
    %4006 = vmatprep.subr.mxu0 0.0
    %4007 = vmatpush2.msra.mxu0 %v3937
    %4008 = vmatprep.subr.mxu0 0.0
    %4009 = vmatpush2.msra.mxu0 %v3936
    %4010 = vmatprep.subr.mxu0 0.0
    %4011 = vmatpush2.msra.mxu0 %v3935
    %4012 = vmatprep.subr.mxu0 0.0
    %4013 = vmatpush2.msra.mxu0 %v3934
    %4014 = vmatprep.subr.mxu0 0.0
    %4015 = vmatpush2.msra.mxu0 %v3933
    %4016 = vmatprep.mubr.f32.mxu0 %v3950
    %4017 = vmatmul.mubr.f32.gmra.mxu0 %v3915
    %v4018 = vpop.f32.mrf.mxu0
    %v4019 = vadd.f32 %v3947, %v4018
    %v4020 = vpop.f32.mrf.mxu0
    %4021 = vdwg.mxu0
    %v4022 = vmax.f32 %v4019, 0.0
    %v4023 = vld [vmem:[%s5] sm:$0xff]
    %v4024 = vld [vmem:[%s5 + $0x8] sm:$0xff]
    %v4025 = vld [vmem:[%s5 + $0x10] sm:$0xff]
    %v4026 = vld [vmem:[%s5 + $0x18] sm:$0xff]
    %v4027 = vld [vmem:[%s5 + $0x20] sm:$0xff]
    %v4028 = vld [vmem:[%s5 + $0x28] sm:$0xff]
    %v4029 = vld [vmem:[%s5 + $0x30] sm:$0x3]
    %v4030 = vld [vmem:[%s6] sm:$0x1]
    %v4032 = vlaneseq
    %v4033 = vshrl.u32 %v4032, 7
    %v4034 = vsub.s32 0, %v4033
    %v4035 = vrot.slane %v4030, %v4034
    %vm4037 = vcmask 408576
    %v4039 = vsel %vm4037, %v4022, 0
    %vm4041 = vcmask 1041408
    %v4043 = vsel %vm4041, %v4029, 0
    %4045 = vmatprep.subr.mxu0 0.0
    %4046 = vmatpush1.msra.mxu0 0.0
    %4047 = vmatprep.subr.mxu0 0.0
    %4048 = vmatpush1.msra.mxu0 0.0
    %4049 = vmatprep.subr.mxu0 0.0
    %4050 = vmatpush1.msra.mxu0 0.0
    %4051 = vmatprep.subr.mxu0 0.0
    %4052 = vmatpush1.msra.mxu0 0.0
    %4053 = vmatprep.subr.mxu0 0.0
    %4054 = vmatpush1.msra.mxu0 0.0
    %4055 = vmatprep.subr.mxu0 0.0
    %4056 = vmatpush1.msra.mxu0 0.0
    %4057 = vmatprep.subr.mxu0 0.0
    %4058 = vmatpush1.msra.mxu0 0.0
    %4059 = vmatprep.subr.mxu0 0.0
    %4060 = vmatpush1.msra.mxu0 0.0
    %4061 = vmatprep.subr.mxu0 0.0
    %4062 = vmatpush1.msra.mxu0 0.0
    %4063 = vmatprep.subr.mxu0 0.0
    %4064 = vmatpush1.msra.mxu0 %v4043
    %4065 = vmatprep.subr.mxu0 0.0
    %4066 = vmatpush1.msra.mxu0 %v4028
    %4067 = vmatprep.subr.mxu0 0.0
    %4068 = vmatpush1.msra.mxu0 %v4027
    %4069 = vmatprep.subr.mxu0 0.0
    %4070 = vmatpush1.msra.mxu0 %v4026
    %4071 = vmatprep.subr.mxu0 0.0
    %4072 = vmatpush1.msra.mxu0 %v4025
    %4073 = vmatprep.subr.mxu0 0.0
    %4074 = vmatpush1.msra.mxu0 %v4024
    %4075 = vmatprep.subr.mxu0 0.0
    %4076 = vmatpush1.msra.mxu0 %v4023
    %4077 = vmatprep.subr.mxu0 0.0
    %4078 = vmatpush2.msra.mxu0 0.0
    %4079 = vmatprep.subr.mxu0 0.0
    %4080 = vmatpush2.msra.mxu0 0.0
    %4081 = vmatprep.subr.mxu0 0.0
    %4082 = vmatpush2.msra.mxu0 0.0
    %4083 = vmatprep.subr.mxu0 0.0
    %4084 = vmatpush2.msra.mxu0 0.0
    %4085 = vmatprep.subr.mxu0 0.0
    %4086 = vmatpush2.msra.mxu0 0.0
    %4087 = vmatprep.subr.mxu0 0.0
    %4088 = vmatpush2.msra.mxu0 0.0
    %4089 = vmatprep.subr.mxu0 0.0
    %4090 = vmatpush2.msra.mxu0 0.0
    %4091 = vmatprep.subr.mxu0 0.0
    %4092 = vmatpush2.msra.mxu0 0.0
    %4093 = vmatprep.subr.mxu0 0.0
    %4094 = vmatpush2.msra.mxu0 0.0
    %4095 = vmatprep.subr.mxu0 0.0
    %4096 = vmatpush2.msra.mxu0 0.0
    %4097 = vmatprep.subr.mxu0 0.0
    %4098 = vmatpush2.msra.mxu0 0.0
    %4099 = vmatprep.subr.mxu0 0.0
    %4100 = vmatpush2.msra.mxu0 0.0
    %4101 = vmatprep.subr.mxu0 0.0
    %4102 = vmatpush2.msra.mxu0 0.0
    %4103 = vmatprep.subr.mxu0 0.0
    %4104 = vmatpush2.msra.mxu0 0.0
    %4105 = vmatprep.subr.mxu0 0.0
    %4106 = vmatpush2.msra.mxu0 0.0
    %4107 = vmatprep.subr.mxu0 0.0
    %4108 = vmatpush2.msra.mxu0 0.0
    %4109 = vmatprep.mubr.f32.mxu0 0.0
    %4110 = vmatmul.mubr.f32.gmra.mxu0 %v4039
    %v4111 = vpop.f32.mrf.mxu0
    %v4112 = vadd.f32 %v4035, %v4111
    %v4113 = vpop.f32.mrf.mxu0
    %4114 = vdwg.mxu0
    %vm4115 = vcmask 56320
    %4116 = vst.msk [vmem:[%s7] sm:$0xff] %vm4115, %v4112
  $region37: #{network_coarse_simple_forward.3} parent=0 // pred_fallthru
    _
  // Predicated region
  $region38: #{network_coarse_simple_forward.3} parent=0 // pred_check
    _
  $region39: #{network_coarse_simple_forward.3} parent=0 // pred_check_branch
    %4118 = sbr.rel (0) target = $region41
  $region40: #{network_coarse_simple_forward.3} parent=0 // pred_region
    _
  $region41: #{network_coarse_simple_forward.3} parent=0 // pred_fallthru
    _
  // Predicated region
  $region42: #{network_coarse_simple_forward.3} parent=0 // pred_check
    _
  $region43: #{network_coarse_simple_forward.3} parent=0 // pred_check_branch
    %4120 = sbr.rel (0) target = $region45
  $region44: #{network_coarse_simple_forward.3} parent=0 // pred_region
    _
  $region45: #{network_coarse_simple_forward.3} parent=0 // pred_fallthru
    _

</llo_original>
